<compile_context>
chip_gen: v5e
topology: v5e:2x2
jax: 0.10.0
libtpu: 0.0.40
codegen_flags: <defaults>
</compile_context>

<pallas_src>
import functools
import math

import jax
import jax.numpy as jnp
from jax.experimental import pallas as pl
from jax.experimental.pallas import tpu as pltpu

LANE = 128


def _round_up(x, m):
    return (x + m - 1) // m * m


def _pad2(a, rows, cols):
    r, c = a.shape
    return jnp.pad(a, ((0, rows - r), (0, cols - c)))


# --------------------------------------------------------------------------
# Kernel 1: QKV projection + edge attention + scatter-add (edge-tiled grid).
# --------------------------------------------------------------------------
def _rgat_attn_kernel(src_ref, dst_ref, e_ref, x_ref,
                      wq_ref, bq_ref, wk_ref, wv_ref, hs_ref, hb_ref,
                      o_ref,
                      q_sc, k_sc, v_sc, wv_acc, z_acc,
                      *, inv_sqrt_dk):
    f32, bf16 = jnp.float32, jnp.bfloat16
    n_nodes = x_ref.shape[0]
    t = pl.program_id(0)

    # ---- first edge tile: compute q/k/v once, zero the accumulators -------
    @pl.when(t == 0)
    def _init():
        xb = x_ref[...].astype(bf16)
        q = jnp.dot(xb, wq_ref[...].astype(bf16),
                    preferred_element_type=f32) + bq_ref[...]
        k = jnp.dot(xb, wk_ref[...].astype(bf16), preferred_element_type=f32)
        v = jnp.dot(xb, wv_ref[...].astype(bf16), preferred_element_type=f32)
        q_sc[...] = q.astype(bf16)
        k_sc[...] = k.astype(bf16)
        v_sc[...] = v.astype(bf16)
        wv_acc[...] = jnp.zeros_like(wv_acc)
        z_acc[...] = jnp.zeros_like(z_acc)

    # ---- per edge-tile: build small one-hots from the int32 indices -------
    # padded edges carry index -1 -> all-zero one-hot rows -> no contribution
    node_ids = jax.lax.broadcasted_iota(jnp.int32, (1, n_nodes), 1)
    oh_src = jnp.where(src_ref[...] == node_ids, 1.0, 0.0).astype(bf16)  # (tE,N)
    oh_dst = jnp.where(dst_ref[...] == node_ids, 1.0, 0.0).astype(bf16)  # (tE,N)

    # gathers (MXU)
    q_dst = jnp.dot(oh_dst, q_sc[...], preferred_element_type=f32)   # (tE, dim_p)
    k_src = jnp.dot(oh_src, k_sc[...], preferred_element_type=f32)
    v_src = jnp.dot(oh_src, v_sc[...], preferred_element_type=f32)

    # head-fused, lane-dense score math (no per-head loop, no (E,1) tensors)
    e = e_ref[...]
    prod = (k_src + e) * q_dst * inv_sqrt_dk                         # (tE, dim_p)
    logits = jnp.dot(prod, hs_ref[...], preferred_element_type=f32)  # col h = head h
    scores = jnp.exp(jnp.clip(logits, -10.0, 10.0))
    s_b = jnp.dot(scores, hb_ref[...], preferred_element_type=f32)   # (tE, dim_p)
    msg = (v_src + e) * s_b

    # scatter-add into the VMEM-resident node accumulators (MXU, transposed)
    wv_acc[...] += jax.lax.dot_general(
        oh_dst, msg.astype(bf16), (((0,), (0,)), ((), ())),
        preferred_element_type=f32)
    z_acc[...] += jax.lax.dot_general(
        oh_dst, s_b.astype(bf16), (((0,), (0,)), ((), ())),
        preferred_element_type=f32)

    # ---- last edge tile: normalize and emit o = wv / z ---------------------
    @pl.when(t == pl.num_programs(0) - 1)
    def _fin():
        # floor guards zero-in-degree nodes and the zero-padded lanes
        z_inv = pl.reciprocal(jnp.maximum(z_acc[...], 1e-20), approx=True)
        o_ref[...] = wv_acc[...] * z_inv


# --------------------------------------------------------------------------
# Kernel 2: affine_o + residual + LN + FFN + residual + LN (node-tiled grid).
# --------------------------------------------------------------------------
def _rgat_node_kernel(x_ref, o_ref, wo_ref, bo_ref, ln1g_ref, ln1b_ref,
                      w1_ref, b1_ref, w2_ref, b2_ref, ln2g_ref, ln2b_ref,
                      out_ref, *, ndim):
    f32, bf16 = jnp.float32, jnp.bfloat16
    lanes = out_ref.shape[-1]
    lane_ids = jax.lax.broadcasted_iota(jnp.int32, (1, lanes), 1)
    mask = jnp.where(lane_ids < ndim, 1.0, 0.0).astype(f32)   # real-feature mask
    inv_n = 1.0 / ndim

    def layer_norm(r, g, b):        # stats over the ndim real lanes only
        mu = jnp.sum(r * mask, axis=-1, keepdims=True) * inv_n
        d = (r - mu) * mask
        var = jnp.sum(d * d, axis=-1, keepdims=True) * inv_n
        return d * jax.lax.rsqrt(var + 1e-5) * g + b

    x = x_ref[...]
    h1 = jnp.dot(o_ref[...].astype(bf16), wo_ref[...].astype(bf16),
                 preferred_element_type=f32) + bo_ref[...]
    y = layer_norm(x + h1, ln1g_ref[...], ln1b_ref[...])

    hid = jnp.maximum(
        jnp.dot(y.astype(bf16), w1_ref[...].astype(bf16),
                preferred_element_type=f32) + b1_ref[...], 0.0)
    ff = jnp.dot(hid.astype(bf16), w2_ref[...].astype(bf16),
                 preferred_element_type=f32) + b2_ref[...]
    out_ref[...] = layer_norm(y + ff, ln2g_ref[...], ln2b_ref[...])


# --------------------------------------------------------------------------
# Wrapper
# --------------------------------------------------------------------------
def rgat_layer(x, lgx, src, dst, params, num_heads, *,
               edge_tile=128, node_tile=64):
    """Returns (out_x, lgx), like RGAT_Layer.forward (dropout = identity)."""
    f32 = jnp.float32
    N, ndim = x.shape
    E, edim = lgx.shape
    dim = max(ndim, edim)
    d_k = dim // num_heads
    assert edim == dim, "uses the lgx.view(-1, H, d_k) branch of the module"
    assert dim % num_heads == 0

    ndim_p = _round_up(ndim, LANE)
    dim_p = _round_up(dim, LANE)
    hid_p = _round_up(4 * ndim, LANE)
    N_p = _round_up(N, node_tile)
    E_p = _round_up(E, edge_tile)

    # ---- layout plumbing: pad to 128-lane-dense blocks ---------------------
    x_p = _pad2(x.astype(f32), N_p, ndim_p)
    e_p = _pad2(lgx.astype(f32), E_p, dim_p)
    src_p = jnp.pad(src.astype(jnp.int32), (0, E_p - E),
                    constant_values=-1).reshape(E_p, 1)
    dst_p = jnp.pad(dst.astype(jnp.int32), (0, E_p - E),
                    constant_values=-1).reshape(E_p, 1)

    wq = _pad2(params['wq_t'], ndim_p, dim_p)
    bq = _pad2(params['bq'], 1, dim_p)
    wk = _pad2(params['wk_t'], ndim_p, dim_p)
    wv = _pad2(params['wv_t'], ndim_p, dim_p)
    wo = _pad2(params['wo_t'], dim_p, ndim_p)
    bo = _pad2(params['bo'], 1, ndim_p)
    ln1g = _pad2(params['ln1_g'], 1, ndim_p)
    ln1b = _pad2(params['ln1_b'], 1, ndim_p)
    w1 = _pad2(params['w1_t'], ndim_p, hid_p)
    ffb1 = _pad2(params['b1'], 1, hid_p)
    w2 = _pad2(params['w2_t'], hid_p, ndim_p)
    ffb2 = _pad2(params['b2'], 1, ndim_p)
    ln2g = _pad2(params['ln2_g'], 1, ndim_p)
    ln2b = _pad2(params['ln2_b'], 1, ndim_p)

    # head-sum (lane -> head) / head-broadcast (head -> lane) matrices
    lane = jnp.arange(dim_p)
    hs = ((lane[:, None] // d_k == lane[None, :])
          & (lane[:, None] < dim)).astype(f32)          # (dim_p, dim_p)
    hb = hs.T

    # ---- kernel 1: edge-tiled attention + scatter --------------------------
    # TODO(synk): for graphs where a resident (N, dim) accumulator exceeds
    # VMEM, additionally tile the node axis (dst-sorted edges with
    # scalar-prefetched per-tile edge offsets).
    n_edge_tiles = E_p // edge_tile
    attn = pl.pallas_call(
        functools.partial(_rgat_attn_kernel, inv_sqrt_dk=1.0 / math.sqrt(d_k)),
        out_shape=jax.ShapeDtypeStruct((N_p, dim_p), f32),
        grid=(n_edge_tiles,),
        in_specs=[
            pl.BlockSpec((edge_tile, 1), lambda t: (t, 0)),       # src ids
            pl.BlockSpec((edge_tile, 1), lambda t: (t, 0)),       # dst ids
            pl.BlockSpec((edge_tile, dim_p), lambda t: (t, 0)),   # edge feats
            pl.BlockSpec((N_p, ndim_p), lambda t: (0, 0)),        # x (resident)
            pl.BlockSpec((ndim_p, dim_p), lambda t: (0, 0)),      # Wq
            pl.BlockSpec((1, dim_p), lambda t: (0, 0)),           # bq
            pl.BlockSpec((ndim_p, dim_p), lambda t: (0, 0)),      # Wk
            pl.BlockSpec((ndim_p, dim_p), lambda t: (0, 0)),      # Wv
            pl.BlockSpec((dim_p, dim_p), lambda t: (0, 0)),       # head-sum
            pl.BlockSpec((dim_p, dim_p), lambda t: (0, 0)),       # head-bcast
        ],
        out_specs=pl.BlockSpec((N_p, dim_p), lambda t: (0, 0)),
        scratch_shapes=[
            pltpu.VMEM((N_p, dim_p), jnp.bfloat16),   # q
            pltpu.VMEM((N_p, dim_p), jnp.bfloat16),   # k
            pltpu.VMEM((N_p, dim_p), jnp.bfloat16),   # v
            pltpu.VMEM((N_p, dim_p), f32),            # wv accumulator
            pltpu.VMEM((N_p, dim_p), f32),            # z accumulator
        ],
        compiler_params=pltpu.CompilerParams(
            dimension_semantics=("arbitrary",)),
    )
    o = attn(src_p, dst_p, e_p, x_p, wq, bq, wk, wv, hs, hb)

    # ---- kernel 2: node-tiled epilogue (parallel over node tiles) ----------
    n_node_tiles = N_p // node_tile
    epilogue = pl.pallas_call(
        functools.partial(_rgat_node_kernel, ndim=ndim),
        out_shape=jax.ShapeDtypeStruct((N_p, ndim_p), f32),
        grid=(n_node_tiles,),
        in_specs=[
            pl.BlockSpec((node_tile, ndim_p), lambda i: (i, 0)),  # x tile
            pl.BlockSpec((node_tile, dim_p), lambda i: (i, 0)),   # o tile
            pl.BlockSpec((dim_p, ndim_p), lambda i: (0, 0)),      # Wo
            pl.BlockSpec((1, ndim_p), lambda i: (0, 0)),          # bo
            pl.BlockSpec((1, ndim_p), lambda i: (0, 0)),          # ln1 gamma
            pl.BlockSpec((1, ndim_p), lambda i: (0, 0)),          # ln1 beta
            pl.BlockSpec((ndim_p, hid_p), lambda i: (0, 0)),      # W1
            pl.BlockSpec((1, hid_p), lambda i: (0, 0)),           # b1
            pl.BlockSpec((hid_p, ndim_p), lambda i: (0, 0)),      # W2
            pl.BlockSpec((1, ndim_p), lambda i: (0, 0)),          # b2
            pl.BlockSpec((1, ndim_p), lambda i: (0, 0)),          # ln2 gamma
            pl.BlockSpec((1, ndim_p), lambda i: (0, 0)),          # ln2 beta
        ],
        out_specs=pl.BlockSpec((node_tile, ndim_p), lambda i: (i, 0)),
        input_output_aliases={0: 0},   # reuse x's padded buffer for the output
        compiler_params=pltpu.CompilerParams(
            dimension_semantics=("parallel",)),
    )
    out_p = epilogue(x_p, o, wo, bo, ln1g, ln1b, w1, ffb1, w2, ffb2, ln2g, ln2b)
    return out_p[:N, :ndim], lgx


# --------------------------------------------------------------------------
# Pure-JAX reference of the same forward pass (for verification).
# --------------------------------------------------------------------------
def rgat_reference(x, lgx, src, dst, params, num_heads):
    N, ndim = x.shape
    E, dim = lgx.shape
    d_k = dim // num_heads

    def ln(r, g, b):
        mu = jnp.mean(r, axis=-1, keepdims=True)
        var = jnp.mean((r - mu) ** 2, axis=-1, keepdims=True)
        return (r - mu) * jax.lax.rsqrt(var + 1e-5) * g + b

    q = x @ params['wq_t'] + params['bq']
    k = x @ params['wk_t']
    v = x @ params['wv_t']
    qh = q.reshape(N, num_heads, d_k)
    kh = k.reshape(N, num_heads, d_k)
    vh = v.reshape(N, num_heads, d_k)
    eh = lgx.reshape(E, num_heads, d_k)

    score = jnp.exp(jnp.clip(((kh[src] + eh) * qh[dst]).sum(-1)
                             / math.sqrt(d_k), -10.0, 10.0))      # (E, H)
    msg = (vh[src] + eh) * score[..., None]                       # (E, H, d_k)
    wv = jax.ops.segment_sum(msg, dst, num_segments=N)
    z = jax.ops.segment_sum(score, dst, num_segments=N)
    o = (wv / z[..., None]).reshape(N, dim)

    y = ln(x + o @ params['wo_t'] + params['bo'],
           params['ln1_g'], params['ln1_b'])
    ff = jnp.maximum(y @ params['w1_t'] + params['b1'], 0.0) @ params['w2_t'] \
        + params['b2']
    return ln(y + ff, params['ln2_g'], params['ln2_b'])


def make_params(ndim, dim, dtype=jnp.float32):
    ks = jax.random.split(jax.random.PRNGKey(42), 10)
    hid = 4 * ndim
    return {
        # nn.Linear weights stored pre-transposed: y = x @ W_t + b
        'wq_t': 0.2 * jax.random.normal(ks[0], (ndim, dim), dtype),
        'bq':   0.1 * jax.random.normal(ks[1], (1, dim), dtype),
        'wk_t': 0.2 * jax.random.normal(ks[2], (ndim, dim), dtype),
        'wv_t': 0.2 * jax.random.normal(ks[3], (ndim, dim), dtype),
        'wo_t': 0.15 * jax.random.normal(ks[4], (dim, ndim), dtype),
        'bo':   0.1 * jax.random.normal(ks[5], (1, ndim), dtype),
        'ln1_g': jnp.ones((1, ndim), dtype),
        'ln1_b': jnp.zeros((1, ndim), dtype),
        'w1_t': 0.15 * jax.random.normal(ks[6], (ndim, hid), dtype),
        'b1':   0.1 * jax.random.normal(ks[7], (1, hid), dtype),
        'w2_t': 0.1 * jax.random.normal(ks[8], (hid, ndim), dtype),
        'b2':   0.1 * jax.random.normal(ks[9], (1, ndim), dtype),
        'ln2_g': jnp.ones((1, ndim), dtype),
        'ln2_b': jnp.zeros((1, ndim), dtype),
    }


if __name__ == "__main__":
    # small-but-tiled shapes: 128 nodes, 256 edges (2 edge tiles, 2 node tiles)
    N, ndim, edim, num_heads = 128, 32, 32, 2
    dim = max(ndim, edim)
    E_extra = 128
    E = N + E_extra

    key = jax.random.PRNGKey(0)
    kx, ke, ksrc, kdst = jax.random.split(key, 4)
    x = 0.5 * jax.random.normal(kx, (N, ndim), jnp.float32)
    lgx = 0.5 * jax.random.normal(ke, (E, edim), jnp.float32)

    # ring edges (every node gets >=1 in-edge) + random extra edges
    src = jnp.concatenate([jnp.arange(N, dtype=jnp.int32),
                           jax.random.randint(ksrc, (E_extra,), 0, N, jnp.int32)])
    dst = jnp.concatenate([(jnp.arange(N, dtype=jnp.int32) + 1) % N,
                           jax.random.randint(kdst, (E_extra,), 0, N, jnp.int32)])

    params = make_params(ndim, dim)

    # TODO(synk): nn.Dropout(p=0.2) has no deterministic forward — modeled as
    # identity (inference mode).
    rgat = jax.jit(functools.partial(rgat_layer, num_heads=num_heads))
    out, lgx_out = rgat(x, lgx, src, dst, params)
    out = jax.block_until_ready(out)

    ref = rgat_reference(x, lgx, src, dst, params, num_heads)
    assert out.shape == (N, ndim) and lgx_out.shape == lgx.shape
    err = jnp.max(jnp.abs(out - ref))
    assert jnp.allclose(out, ref, atol=5e-2, rtol=5e-2), f"max abs diff {err}"

    print("KERNEL_OK")
</pallas_src>

<mosaic_0001>
module attributes {stable_mosaic.version = 11 : i64} {
  func.func @_rgat_attn_kernel(%arg0: i32, %arg1: memref<128x1xi32, #tpu.memory_space<vmem>>, %arg2: memref<128x1xi32, #tpu.memory_space<vmem>>, %arg3: memref<128x128xf32, #tpu.memory_space<vmem>>, %arg4: memref<128x128xf32, #tpu.memory_space<vmem>>, %arg5: memref<128x128xf32, #tpu.memory_space<vmem>>, %arg6: memref<1x128xf32, #tpu.memory_space<vmem>>, %arg7: memref<128x128xf32, #tpu.memory_space<vmem>>, %arg8: memref<128x128xf32, #tpu.memory_space<vmem>>, %arg9: memref<128x128xf32, #tpu.memory_space<vmem>>, %arg10: memref<128x128xf32, #tpu.memory_space<vmem>>, %arg11: memref<128x128xf32, #tpu.memory_space<vmem>>, %arg12: memref<128x128xbf16, #tpu.memory_space<vmem>>, %arg13: memref<128x128xbf16, #tpu.memory_space<vmem>>, %arg14: memref<128x128xbf16, #tpu.memory_space<vmem>>, %arg15: memref<128x128xf32, #tpu.memory_space<vmem>>, %arg16: memref<128x128xf32, #tpu.memory_space<vmem>>) attributes {dimension_semantics = [#tpu.dimension_semantics<arbitrary>], iteration_bounds = array<i64: 2>, scalar_prefetch = 0 : i64, scratch_operands = 5 : i64, tpu.core_type = #tpu.core_type<tc>, window_params = [{transform_indices = @transform_0, window_bounds = array<i64: 128, 1>}, {transform_indices = @transform_1, window_bounds = array<i64: 128, 1>}, {transform_indices = @transform_2, window_bounds = array<i64: 128, 128>}, {pipeline_mode = #tpu.pipeline_mode<synchronous>, transform_indices = @transform_3, window_bounds = array<i64: 128, 128>}, {pipeline_mode = #tpu.pipeline_mode<synchronous>, transform_indices = @transform_4, window_bounds = array<i64: 128, 128>}, {pipeline_mode = #tpu.pipeline_mode<synchronous>, transform_indices = @transform_5, window_bounds = array<i64: 1, 128>}, {pipeline_mode = #tpu.pipeline_mode<synchronous>, transform_indices = @transform_6, window_bounds = array<i64: 128, 128>}, {pipeline_mode = #tpu.pipeline_mode<synchronous>, transform_indices = @transform_7, window_bounds = array<i64: 128, 128>}, {pipeline_mode = #tpu.pipeline_mode<synchronous>, transform_indices = @transform_8, window_bounds = array<i64: 128, 128>}, {pipeline_mode = #tpu.pipeline_mode<synchronous>, transform_indices = @transform_9, window_bounds = array<i64: 128, 128>}, {pipeline_mode = #tpu.pipeline_mode<synchronous>, transform_indices = @transform_10, window_bounds = array<i64: 128, 128>}]} {
    %c0_i32 = arith.constant 0 : i32
    %0 = arith.cmpi eq, %arg0, %c0_i32 : i32
    %1 = arith.extui %0 : i1 to i32
    %c0_i32_0 = arith.constant 0 : i32
    %2 = arith.cmpi ne, %1, %c0_i32_0 : i32
    scf.if %2 {
      %c0_38 = arith.constant 0 : index
      %c0_39 = arith.constant 0 : index
      %55 = vector.load %arg4[%c0_38, %c0_39] : memref<128x128xf32, #tpu.memory_space<vmem>>, vector<128x128xf32>
      %56 = arith.truncf %55 : vector<128x128xf32> to vector<128x128xbf16>
      %c0_40 = arith.constant 0 : index
      %c0_41 = arith.constant 0 : index
      %57 = vector.load %arg5[%c0_40, %c0_41] : memref<128x128xf32, #tpu.memory_space<vmem>>, vector<128x128xf32>
      %58 = arith.truncf %57 : vector<128x128xf32> to vector<128x128xbf16>
      %cst_42 = arith.constant dense<0.000000e+00> : vector<128x128xf32>
      %59 = tpu.matmul %56, %58, %cst_42 {dimension_numbers = #tpu.dot_dimension_numbers<[1], [0], [0], [1], [0, 0, 1, 1], [], []>} : vector<128x128xbf16>, vector<128x128xbf16>, vector<128x128xf32> -> vector<128x128xf32>
      %c0_43 = arith.constant 0 : index
      %c0_44 = arith.constant 0 : index
      %60 = vector.load %arg6[%c0_43, %c0_44] : memref<1x128xf32, #tpu.memory_space<vmem>>, vector<1x128xf32>
      %61 = vector.broadcast %60 : vector<1x128xf32> to vector<128x128xf32>
      %62 = arith.addf %59, %61 : vector<128x128xf32>
      %c0_45 = arith.constant 0 : index
      %c0_46 = arith.constant 0 : index
      %63 = vector.load %arg7[%c0_45, %c0_46] : memref<128x128xf32, #tpu.memory_space<vmem>>, vector<128x128xf32>
      %64 = arith.truncf %63 : vector<128x128xf32> to vector<128x128xbf16>
      %cst_47 = arith.constant dense<0.000000e+00> : vector<128x128xf32>
      %65 = tpu.matmul %56, %64, %cst_47 {dimension_numbers = #tpu.dot_dimension_numbers<[1], [0], [0], [1], [0, 0, 1, 1], [], []>} : vector<128x128xbf16>, vector<128x128xbf16>, vector<128x128xf32> -> vector<128x128xf32>
      %c0_48 = arith.constant 0 : index
      %c0_49 = arith.constant 0 : index
      %66 = vector.load %arg8[%c0_48, %c0_49] : memref<128x128xf32, #tpu.memory_space<vmem>>, vector<128x128xf32>
      %67 = arith.truncf %66 : vector<128x128xf32> to vector<128x128xbf16>
      %cst_50 = arith.constant dense<0.000000e+00> : vector<128x128xf32>
      %68 = tpu.matmul %56, %67, %cst_50 {dimension_numbers = #tpu.dot_dimension_numbers<[1], [0], [0], [1], [0, 0, 1, 1], [], []>} : vector<128x128xbf16>, vector<128x128xbf16>, vector<128x128xf32> -> vector<128x128xf32>
      %69 = arith.truncf %62 : vector<128x128xf32> to vector<128x128xbf16>
      %c0_51 = arith.constant 0 : index
      %c0_52 = arith.constant 0 : index
      %70 = vector.load %arg12[%c0_51, %c0_52] : memref<128x128xbf16, #tpu.memory_space<vmem>>, vector<128x128xbf16>
      tpu.vector_store %arg12[%c0_51, %c0_52], %69 {strides = array<i32>} : memref<128x128xbf16, #tpu.memory_space<vmem>>, vector<128x128xbf16>,
      %71 = arith.truncf %65 : vector<128x128xf32> to vector<128x128xbf16>
      %c0_53 = arith.constant 0 : index
      %c0_54 = arith.constant 0 : index
      %72 = vector.load %arg13[%c0_53, %c0_54] : memref<128x128xbf16, #tpu.memory_space<vmem>>, vector<128x128xbf16>
      tpu.vector_store %arg13[%c0_53, %c0_54], %71 {strides = array<i32>} : memref<128x128xbf16, #tpu.memory_space<vmem>>, vector<128x128xbf16>,
      %73 = arith.truncf %68 : vector<128x128xf32> to vector<128x128xbf16>
      %c0_55 = arith.constant 0 : index
      %c0_56 = arith.constant 0 : index
      %74 = vector.load %arg14[%c0_55, %c0_56] : memref<128x128xbf16, #tpu.memory_space<vmem>>, vector<128x128xbf16>
      tpu.vector_store %arg14[%c0_55, %c0_56], %73 {strides = array<i32>} : memref<128x128xbf16, #tpu.memory_space<vmem>>, vector<128x128xbf16>,
      %cst_57 = arith.constant 0.000000e+00 : f32
      %75 = vector.broadcast %cst_57 : f32 to vector<128x128xf32>
      %c0_58 = arith.constant 0 : index
      %c0_59 = arith.constant 0 : index
      %76 = vector.load %arg15[%c0_58, %c0_59] : memref<128x128xf32, #tpu.memory_space<vmem>>, vector<128x128xf32>
      tpu.vector_store %arg15[%c0_58, %c0_59], %75 {strides = array<i32>} : memref<128x128xf32, #tpu.memory_space<vmem>>, vector<128x128xf32>,
      %cst_60 = arith.constant 0.000000e+00 : f32
      %77 = vector.broadcast %cst_60 : f32 to vector<128x128xf32>
      %c0_61 = arith.constant 0 : index
      %c0_62 = arith.constant 0 : index
      %78 = vector.load %arg16[%c0_61, %c0_62] : memref<128x128xf32, #tpu.memory_space<vmem>>, vector<128x128xf32>
      tpu.vector_store %arg16[%c0_61, %c0_62], %77 {strides = array<i32>} : memref<128x128xf32, #tpu.memory_space<vmem>>, vector<128x128xf32>,
    } else {
    }
    %3 = tpu.iota {dimensions = array<i32: 1>} : vector<1x128xi32>
    %c0 = arith.constant 0 : index
    %c0_1 = arith.constant 0 : index
    %4 = vector.load %arg1[%c0, %c0_1] : memref<128x1xi32, #tpu.memory_space<vmem>>, vector<128x1xi32>
    %5 = vector.broadcast %4 : vector<128x1xi32> to vector<128x128xi32>
    %6 = vector.broadcast %3 : vector<1x128xi32> to vector<128x128xi32>
    %7 = arith.cmpi eq, %5, %6 : vector<128x128xi32>
    %cst = arith.constant 1.000000e+00 : f32
    %cst_2 = arith.constant 0.000000e+00 : f32
    %8 = vector.broadcast %cst : f32 to vector<128x128xf32>
    %9 = vector.broadcast %cst_2 : f32 to vector<128x128xf32>
    %10 = arith.select %7, %8, %9 : vector<128x128xi1>, vector<128x128xf32>
    %11 = arith.truncf %10 : vector<128x128xf32> to vector<128x128xbf16>
    %c0_3 = arith.constant 0 : index
    %c0_4 = arith.constant 0 : index
    %12 = vector.load %arg2[%c0_3, %c0_4] : memref<128x1xi32, #tpu.memory_space<vmem>>, vector<128x1xi32>
    %13 = vector.broadcast %12 : vector<128x1xi32> to vector<128x128xi32>
    %14 = vector.broadcast %3 : vector<1x128xi32> to vector<128x128xi32>
    %15 = arith.cmpi eq, %13, %14 : vector<128x128xi32>
    %cst_5 = arith.constant 1.000000e+00 : f32
    %cst_6 = arith.constant 0.000000e+00 : f32
    %16 = vector.broadcast %cst_5 : f32 to vector<128x128xf32>
    %17 = vector.broadcast %cst_6 : f32 to vector<128x128xf32>
    %18 = arith.select %15, %16, %17 : vector<128x128xi1>, vector<128x128xf32>
    %19 = arith.truncf %18 : vector<128x128xf32> to vector<128x128xbf16>
    %c0_7 = arith.constant 0 : index
    %c0_8 = arith.constant 0 : index
    %20 = vector.load %arg12[%c0_7, %c0_8] : memref<128x128xbf16, #tpu.memory_space<vmem>>, vector<128x128xbf16>
    %cst_9 = arith.constant dense<0.000000e+00> : vector<128x128xf32>
    %21 = tpu.matmul %19, %20, %cst_9 {dimension_numbers = #tpu.dot_dimension_numbers<[1], [0], [0], [1], [0, 0, 1, 1], [], []>} : vector<128x128xbf16>, vector<128x128xbf16>, vector<128x128xf32> -> vector<128x128xf32>
    %c0_10 = arith.constant 0 : index
    %c0_11 = arith.constant 0 : index
    %22 = vector.load %arg13[%c0_10, %c0_11] : memref<128x128xbf16, #tpu.memory_space<vmem>>, vector<128x128xbf16>
    %cst_12 = arith.constant dense<0.000000e+00> : vector<128x128xf32>
    %23 = tpu.matmul %11, %22, %cst_12 {dimension_numbers = #tpu.dot_dimension_numbers<[1], [0], [0], [1], [0, 0, 1, 1], [], []>} : vector<128x128xbf16>, vector<128x128xbf16>, vector<128x128xf32> -> vector<128x128xf32>
    %c0_13 = arith.constant 0 : index
    %c0_14 = arith.constant 0 : index
    %24 = vector.load %arg14[%c0_13, %c0_14] : memref<128x128xbf16, #tpu.memory_space<vmem>>, vector<128x128xbf16>
    %cst_15 = arith.constant dense<0.000000e+00> : vector<128x128xf32>
    %25 = tpu.matmul %11, %24, %cst_15 {dimension_numbers = #tpu.dot_dimension_numbers<[1], [0], [0], [1], [0, 0, 1, 1], [], []>} : vector<128x128xbf16>, vector<128x128xbf16>, vector<128x128xf32> -> vector<128x128xf32>
    %c0_16 = arith.constant 0 : index
    %c0_17 = arith.constant 0 : index
    %26 = vector.load %arg3[%c0_16, %c0_17] : memref<128x128xf32, #tpu.memory_space<vmem>>, vector<128x128xf32>
    %27 = arith.addf %23, %26 : vector<128x128xf32>
    %28 = arith.mulf %27, %21 : vector<128x128xf32>
    %cst_18 = arith.constant 2.500000e-01 : f32
    %29 = vector.broadcast %cst_18 : f32 to vector<128x128xf32>
    %30 = arith.mulf %28, %29 : vector<128x128xf32>
    %c0_19 = arith.constant 0 : index
    %c0_20 = arith.constant 0 : index
    %31 = vector.load %arg9[%c0_19, %c0_20] : memref<128x128xf32, #tpu.memory_space<vmem>>, vector<128x128xf32>
    %cst_21 = arith.constant dense<0.000000e+00> : vector<128x128xf32>
    %32 = tpu.matmul %30, %31, %cst_21 {dimension_numbers = #tpu.dot_dimension_numbers<[1], [0], [0], [1], [0, 0, 1, 1], [], []>} : vector<128x128xf32>, vector<128x128xf32>, vector<128x128xf32> -> vector<128x128xf32>
    %cst_22 = arith.constant -1.000000e+01 : f32
    %cst_23 = arith.constant 1.000000e+01 : f32
    %33 = vector.broadcast %cst_22 : f32 to vector<128x128xf32>
    %34 = arith.maximumf %33, %32 : vector<128x128xf32>
    %35 = vector.broadcast %cst_23 : f32 to vector<128x128xf32>
    %36 = arith.minimumf %35, %34 : vector<128x128xf32>
    %37 = math.exp %36 : vector<128x128xf32>
    %c0_24 = arith.constant 0 : index
    %c0_25 = arith.constant 0 : index
    %38 = vector.load %arg10[%c0_24, %c0_25] : memref<128x128xf32, #tpu.memory_space<vmem>>, vector<128x128xf32>
    %cst_26 = arith.constant dense<0.000000e+00> : vector<128x128xf32>
    %39 = tpu.matmul %37, %38, %cst_26 {dimension_numbers = #tpu.dot_dimension_numbers<[1], [0], [0], [1], [0, 0, 1, 1], [], []>} : vector<128x128xf32>, vector<128x128xf32>, vector<128x128xf32> -> vector<128x128xf32>
    %40 = arith.addf %25, %26 : vector<128x128xf32>
    %41 = arith.mulf %40, %39 : vector<128x128xf32>
    %c0_27 = arith.constant 0 : index
    %c0_28 = arith.constant 0 : index
    %42 = vector.load %arg15[%c0_27, %c0_28] : memref<128x128xf32, #tpu.memory_space<vmem>>, vector<128x128xf32>
    %43 = arith.truncf %41 : vector<128x128xf32> to vector<128x128xbf16>
    %cst_29 = arith.constant dense<0.000000e+00> : vector<128x128xf32>
    %44 = tpu.matmul %19, %43, %cst_29 {dimension_numbers = #tpu.dot_dimension_numbers<[0], [0], [1], [1], [0, 1, 1, 1], [], []>} : vector<128x128xbf16>, vector<128x128xbf16>, vector<128x128xf32> -> vector<128x128xf32>
    %45 = arith.addf %42, %44 : vector<128x128xf32>
    %c0_30 = arith.constant 0 : index
    %c0_31 = arith.constant 0 : index
    %46 = vector.load %arg15[%c0_30, %c0_31] : memref<128x128xf32, #tpu.memory_space<vmem>>, vector<128x128xf32>
    tpu.vector_store %arg15[%c0_30, %c0_31], %45 {strides = array<i32>} : memref<128x128xf32, #tpu.memory_space<vmem>>, vector<128x128xf32>,
    %c0_32 = arith.constant 0 : index
    %c0_33 = arith.constant 0 : index
    %47 = vector.load %arg16[%c0_32, %c0_33] : memref<128x128xf32, #tpu.memory_space<vmem>>, vector<128x128xf32>
    %48 = arith.truncf %39 : vector<128x128xf32> to vector<128x128xbf16>
    %cst_34 = arith.constant dense<0.000000e+00> : vector<128x128xf32>
    %49 = tpu.matmul %19, %48, %cst_34 {dimension_numbers = #tpu.dot_dimension_numbers<[0], [0], [1], [1], [0, 1, 1, 1], [], []>} : vector<128x128xbf16>, vector<128x128xbf16>, vector<128x128xf32> -> vector<128x128xf32>
    %50 = arith.addf %47, %49 : vector<128x128xf32>
    %c0_35 = arith.constant 0 : index
    %c0_36 = arith.constant 0 : index
    %51 = vector.load %arg16[%c0_35, %c0_36] : memref<128x128xf32, #tpu.memory_space<vmem>>, vector<128x128xf32>
    tpu.vector_store %arg16[%c0_35, %c0_36], %50 {strides = array<i32>} : memref<128x128xf32, #tpu.memory_space<vmem>>, vector<128x128xf32>,
    %c1_i32 = arith.constant 1 : i32
    %52 = arith.cmpi eq, %arg0, %c1_i32 : i32
    %53 = arith.extui %52 : i1 to i32
    %c0_i32_37 = arith.constant 0 : i32
    %54 = arith.cmpi ne, %53, %c0_i32_37 : i32
    scf.if %54 {
      %c0_38 = arith.constant 0 : index
      %c0_39 = arith.constant 0 : index
      %55 = vector.load %arg16[%c0_38, %c0_39] : memref<128x128xf32, #tpu.memory_space<vmem>>, vector<128x128xf32>
      %cst_40 = arith.constant 9.99999968E-21 : f32
      %56 = vector.broadcast %cst_40 : f32 to vector<128x128xf32>
      %57 = arith.maximumf %55, %56 : vector<128x128xf32>
      %58 = tpu.reciprocal %57 {approx = true} : vector<128x128xf32> -> vector<128x128xf32>
      %c0_41 = arith.constant 0 : index
      %c0_42 = arith.constant 0 : index
      %59 = vector.load %arg15[%c0_41, %c0_42] : memref<128x128xf32, #tpu.memory_space<vmem>>, vector<128x128xf32>
      %60 = arith.mulf %59, %58 : vector<128x128xf32>
      %c0_43 = arith.constant 0 : index
      %c0_44 = arith.constant 0 : index
      %61 = vector.load %arg11[%c0_43, %c0_44] : memref<128x128xf32, #tpu.memory_space<vmem>>, vector<128x128xf32>
      tpu.vector_store %arg11[%c0_43, %c0_44], %60 {strides = array<i32>} : memref<128x128xf32, #tpu.memory_space<vmem>>, vector<128x128xf32>,
    } else {
    }
    return
  }
  func.func @transform_0(%arg0: i32) -> (i32, i32) {
    %c0_i32 = arith.constant 0 : i32
    %c0_i32_0 = arith.constant 0 : i32
    return %arg0, %c0_i32 : i32, i32
  }
  func.func @transform_1(%arg0: i32) -> (i32, i32) {
    %c0_i32 = arith.constant 0 : i32
    %c0_i32_0 = arith.constant 0 : i32
    return %arg0, %c0_i32 : i32, i32
  }
  func.func @transform_2(%arg0: i32) -> (i32, i32) {
    %c0_i32 = arith.constant 0 : i32
    %c0_i32_0 = arith.constant 0 : i32
    return %arg0, %c0_i32 : i32, i32
  }
  func.func @transform_3(%arg0: i32) -> (i32, i32) {
    %c0_i32 = arith.constant 0 : i32
    %c0_i32_0 = arith.constant 0 : i32
    %c0_i32_1 = arith.constant 0 : i32
    return %c0_i32, %c0_i32_0 : i32, i32
  }
  func.func @transform_4(%arg0: i32) -> (i32, i32) {
    %c0_i32 = arith.constant 0 : i32
    %c0_i32_0 = arith.constant 0 : i32
    %c0_i32_1 = arith.constant 0 : i32
    return %c0_i32, %c0_i32_0 : i32, i32
  }
  func.func @transform_5(%arg0: i32) -> (i32, i32) {
    %c0_i32 = arith.constant 0 : i32
    %c0_i32_0 = arith.constant 0 : i32
    %c0_i32_1 = arith.constant 0 : i32
    return %c0_i32, %c0_i32_0 : i32, i32
  }
  func.func @transform_6(%arg0: i32) -> (i32, i32) {
    %c0_i32 = arith.constant 0 : i32
    %c0_i32_0 = arith.constant 0 : i32
    %c0_i32_1 = arith.constant 0 : i32
    return %c0_i32, %c0_i32_0 : i32, i32
  }
  func.func @transform_7(%arg0: i32) -> (i32, i32) {
    %c0_i32 = arith.constant 0 : i32
    %c0_i32_0 = arith.constant 0 : i32
    %c0_i32_1 = arith.constant 0 : i32
    return %c0_i32, %c0_i32_0 : i32, i32
  }
  func.func @transform_8(%arg0: i32) -> (i32, i32) {
    %c0_i32 = arith.constant 0 : i32
    %c0_i32_0 = arith.constant 0 : i32
    %c0_i32_1 = arith.constant 0 : i32
    return %c0_i32, %c0_i32_0 : i32, i32
  }
  func.func @transform_9(%arg0: i32) -> (i32, i32) {
    %c0_i32 = arith.constant 0 : i32
    %c0_i32_0 = arith.constant 0 : i32
    %c0_i32_1 = arith.constant 0 : i32
    return %c0_i32, %c0_i32_0 : i32, i32
  }
  func.func @transform_10(%arg0: i32) -> (i32, i32) {
    %c0_i32 = arith.constant 0 : i32
    %c0_i32_0 = arith.constant 0 : i32
    %c0_i32_1 = arith.constant 0 : i32
    return %c0_i32, %c0_i32_0 : i32, i32
  }
}

module attributes {stable_mosaic.version = 11 : i64} {
  func.func @_rgat_node_kernel(%arg0: i32, %arg1: memref<64x128xf32, #tpu.memory_space<vmem>>, %arg2: memref<64x128xf32, #tpu.memory_space<vmem>>, %arg3: memref<128x128xf32, #tpu.memory_space<vmem>>, %arg4: memref<1x128xf32, #tpu.memory_space<vmem>>, %arg5: memref<1x128xf32, #tpu.memory_space<vmem>>, %arg6: memref<1x128xf32, #tpu.memory_space<vmem>>, %arg7: memref<128x128xf32, #tpu.memory_space<vmem>>, %arg8: memref<1x128xf32, #tpu.memory_space<vmem>>, %arg9: memref<128x128xf32, #tpu.memory_space<vmem>>, %arg10: memref<1x128xf32, #tpu.memory_space<vmem>>, %arg11: memref<1x128xf32, #tpu.memory_space<vmem>>, %arg12: memref<1x128xf32, #tpu.memory_space<vmem>>, %arg13: memref<64x128xf32, #tpu.memory_space<vmem>>) attributes {dimension_semantics = [#tpu.dimension_semantics<parallel>], iteration_bounds = array<i64: 2>, scalar_prefetch = 0 : i64, scratch_operands = 0 : i64, tpu.core_type = #tpu.core_type<tc>, window_params = [{transform_indices = @transform_0, window_bounds = array<i64: 64, 128>}, {transform_indices = @transform_1, window_bounds = array<i64: 64, 128>}, {pipeline_mode = #tpu.pipeline_mode<synchronous>, transform_indices = @transform_2, window_bounds = array<i64: 128, 128>}, {pipeline_mode = #tpu.pipeline_mode<synchronous>, transform_indices = @transform_3, window_bounds = array<i64: 1, 128>}, {pipeline_mode = #tpu.pipeline_mode<synchronous>, transform_indices = @transform_4, window_bounds = array<i64: 1, 128>}, {pipeline_mode = #tpu.pipeline_mode<synchronous>, transform_indices = @transform_5, window_bounds = array<i64: 1, 128>}, {pipeline_mode = #tpu.pipeline_mode<synchronous>, transform_indices = @transform_6, window_bounds = array<i64: 128, 128>}, {pipeline_mode = #tpu.pipeline_mode<synchronous>, transform_indices = @transform_7, window_bounds = array<i64: 1, 128>}, {pipeline_mode = #tpu.pipeline_mode<synchronous>, transform_indices = @transform_8, window_bounds = array<i64: 128, 128>}, {pipeline_mode = #tpu.pipeline_mode<synchronous>, transform_indices = @transform_9, window_bounds = array<i64: 1, 128>}, {pipeline_mode = #tpu.pipeline_mode<synchronous>, transform_indices = @transform_10, window_bounds = array<i64: 1, 128>}, {pipeline_mode = #tpu.pipeline_mode<synchronous>, transform_indices = @transform_11, window_bounds = array<i64: 1, 128>}, {transform_indices = @transform_12, window_bounds = array<i64: 64, 128>}]} {
    %0 = tpu.iota {dimensions = array<i32: 1>} : vector<1x128xi32>
    %c32_i32 = arith.constant 32 : i32
    %1 = vector.broadcast %c32_i32 : i32 to vector<1x128xi32>
    %2 = arith.cmpi slt, %0, %1 : vector<1x128xi32>
    %cst = arith.constant 1.000000e+00 : f32
    %cst_0 = arith.constant 0.000000e+00 : f32
    %3 = vector.broadcast %cst : f32 to vector<1x128xf32>
    %4 = vector.broadcast %cst_0 : f32 to vector<1x128xf32>
    %5 = arith.select %2, %3, %4 : vector<1x128xi1>, vector<1x128xf32>
    %c0 = arith.constant 0 : index
    %c0_1 = arith.constant 0 : index
    %6 = vector.load %arg1[%c0, %c0_1] : memref<64x128xf32, #tpu.memory_space<vmem>>, vector<64x128xf32>
    %c0_2 = arith.constant 0 : index
    %c0_3 = arith.constant 0 : index
    %7 = vector.load %arg2[%c0_2, %c0_3] : memref<64x128xf32, #tpu.memory_space<vmem>>, vector<64x128xf32>
    %8 = arith.truncf %7 : vector<64x128xf32> to vector<64x128xbf16>
    %c0_4 = arith.constant 0 : index
    %c0_5 = arith.constant 0 : index
    %9 = vector.load %arg3[%c0_4, %c0_5] : memref<128x128xf32, #tpu.memory_space<vmem>>, vector<128x128xf32>
    %10 = arith.truncf %9 : vector<128x128xf32> to vector<128x128xbf16>
    %cst_6 = arith.constant dense<0.000000e+00> : vector<64x128xf32>
    %11 = tpu.matmul %8, %10, %cst_6 {dimension_numbers = #tpu.dot_dimension_numbers<[1], [0], [0], [1], [0, 0, 1, 1], [], []>} : vector<64x128xbf16>, vector<128x128xbf16>, vector<64x128xf32> -> vector<64x128xf32>
    %c0_7 = arith.constant 0 : index
    %c0_8 = arith.constant 0 : index
    %12 = vector.load %arg4[%c0_7, %c0_8] : memref<1x128xf32, #tpu.memory_space<vmem>>, vector<1x128xf32>
    %13 = vector.broadcast %12 : vector<1x128xf32> to vector<64x128xf32>
    %14 = arith.addf %11, %13 : vector<64x128xf32>
    %15 = arith.addf %6, %14 : vector<64x128xf32>
    %c0_9 = arith.constant 0 : index
    %c0_10 = arith.constant 0 : index
    %16 = vector.load %arg5[%c0_9, %c0_10] : memref<1x128xf32, #tpu.memory_space<vmem>>, vector<1x128xf32>
    %c0_11 = arith.constant 0 : index
    %c0_12 = arith.constant 0 : index
    %17 = vector.load %arg6[%c0_11, %c0_12] : memref<1x128xf32, #tpu.memory_space<vmem>>, vector<1x128xf32>
    %18 = vector.broadcast %5 : vector<1x128xf32> to vector<64x128xf32>
    %19 = arith.mulf %15, %18 : vector<64x128xf32>
    %cst_13 = arith.constant dense<0.000000e+00> : vector<64xf32>
    %20 = vector.multi_reduction <add>, %19, %cst_13 [1] : vector<64x128xf32> to vector<64xf32>
    %21 = vector.shape_cast %20 : vector<64xf32> to vector<64x1xf32>
    %cst_14 = arith.constant 3.125000e-02 : f32
    %22 = vector.broadcast %cst_14 : f32 to vector<64x1xf32>
    %23 = arith.mulf %21, %22 : vector<64x1xf32>
    %24 = vector.broadcast %23 : vector<64x1xf32> to vector<64x128xf32>
    %25 = arith.subf %15, %24 : vector<64x128xf32>
    %26 = vector.broadcast %5 : vector<1x128xf32> to vector<64x128xf32>
    %27 = arith.mulf %25, %26 : vector<64x128xf32>
    %28 = arith.mulf %27, %27 : vector<64x128xf32>
    %cst_15 = arith.constant dense<0.000000e+00> : vector<64xf32>
    %29 = vector.multi_reduction <add>, %28, %cst_15 [1] : vector<64x128xf32> to vector<64xf32>
    %30 = vector.shape_cast %29 : vector<64xf32> to vector<64x1xf32>
    %cst_16 = arith.constant 3.125000e-02 : f32
    %31 = vector.broadcast %cst_16 : f32 to vector<64x1xf32>
    %32 = arith.mulf %30, %31 : vector<64x1xf32>
    %cst_17 = arith.constant 9.99999974E-6 : f32
    %33 = vector.broadcast %cst_17 : f32 to vector<64x1xf32>
    %34 = arith.addf %32, %33 : vector<64x1xf32>
    %35 = math.rsqrt %34 : vector<64x1xf32>
    %36 = vector.broadcast %35 : vector<64x1xf32> to vector<64x128xf32>
    %37 = arith.mulf %27, %36 : vector<64x128xf32>
    %38 = vector.broadcast %16 : vector<1x128xf32> to vector<64x128xf32>
    %39 = arith.mulf %37, %38 : vector<64x128xf32>
    %40 = vector.broadcast %17 : vector<1x128xf32> to vector<64x128xf32>
    %41 = arith.addf %39, %40 : vector<64x128xf32>
    %42 = arith.truncf %41 : vector<64x128xf32> to vector<64x128xbf16>
    %c0_18 = arith.constant 0 : index
    %c0_19 = arith.constant 0 : index
    %43 = vector.load %arg7[%c0_18, %c0_19] : memref<128x128xf32, #tpu.memory_space<vmem>>, vector<128x128xf32>
    %44 = arith.truncf %43 : vector<128x128xf32> to vector<128x128xbf16>
    %cst_20 = arith.constant dense<0.000000e+00> : vector<64x128xf32>
    %45 = tpu.matmul %42, %44, %cst_20 {dimension_numbers = #tpu.dot_dimension_numbers<[1], [0], [0], [1], [0, 0, 1, 1], [], []>} : vector<64x128xbf16>, vector<128x128xbf16>, vector<64x128xf32> -> vector<64x128xf32>
    %c0_21 = arith.constant 0 : index
    %c0_22 = arith.constant 0 : index
    %46 = vector.load %arg8[%c0_21, %c0_22] : memref<1x128xf32, #tpu.memory_space<vmem>>, vector<1x128xf32>
    %47 = vector.broadcast %46 : vector<1x128xf32> to vector<64x128xf32>
    %48 = arith.addf %45, %47 : vector<64x128xf32>
    %cst_23 = arith.constant 0.000000e+00 : f32
    %49 = vector.broadcast %cst_23 : f32 to vector<64x128xf32>
    %50 = arith.maximumf %48, %49 : vector<64x128xf32>
    %51 = arith.truncf %50 : vector<64x128xf32> to vector<64x128xbf16>
    %c0_24 = arith.constant 0 : index
    %c0_25 = arith.constant 0 : index
    %52 = vector.load %arg9[%c0_24, %c0_25] : memref<128x128xf32, #tpu.memory_space<vmem>>, vector<128x128xf32>
    %53 = arith.truncf %52 : vector<128x128xf32> to vector<128x128xbf16>
    %cst_26 = arith.constant dense<0.000000e+00> : vector<64x128xf32>
    %54 = tpu.matmul %51, %53, %cst_26 {dimension_numbers = #tpu.dot_dimension_numbers<[1], [0], [0], [1], [0, 0, 1, 1], [], []>} : vector<64x128xbf16>, vector<128x128xbf16>, vector<64x128xf32> -> vector<64x128xf32>
    %c0_27 = arith.constant 0 : index
    %c0_28 = arith.constant 0 : index
    %55 = vector.load %arg10[%c0_27, %c0_28] : memref<1x128xf32, #tpu.memory_space<vmem>>, vector<1x128xf32>
    %56 = vector.broadcast %55 : vector<1x128xf32> to vector<64x128xf32>
    %57 = arith.addf %54, %56 : vector<64x128xf32>
    %58 = arith.addf %41, %57 : vector<64x128xf32>
    %c0_29 = arith.constant 0 : index
    %c0_30 = arith.constant 0 : index
    %59 = vector.load %arg11[%c0_29, %c0_30] : memref<1x128xf32, #tpu.memory_space<vmem>>, vector<1x128xf32>
    %c0_31 = arith.constant 0 : index
    %c0_32 = arith.constant 0 : index
    %60 = vector.load %arg12[%c0_31, %c0_32] : memref<1x128xf32, #tpu.memory_space<vmem>>, vector<1x128xf32>
    %61 = vector.broadcast %5 : vector<1x128xf32> to vector<64x128xf32>
    %62 = arith.mulf %58, %61 : vector<64x128xf32>
    %cst_33 = arith.constant dense<0.000000e+00> : vector<64xf32>
    %63 = vector.multi_reduction <add>, %62, %cst_33 [1] : vector<64x128xf32> to vector<64xf32>
    %64 = vector.shape_cast %63 : vector<64xf32> to vector<64x1xf32>
    %cst_34 = arith.constant 3.125000e-02 : f32
    %65 = vector.broadcast %cst_34 : f32 to vector<64x1xf32>
    %66 = arith.mulf %64, %65 : vector<64x1xf32>
    %67 = vector.broadcast %66 : vector<64x1xf32> to vector<64x128xf32>
    %68 = arith.subf %58, %67 : vector<64x128xf32>
    %69 = vector.broadcast %5 : vector<1x128xf32> to vector<64x128xf32>
    %70 = arith.mulf %68, %69 : vector<64x128xf32>
    %71 = arith.mulf %70, %70 : vector<64x128xf32>
    %cst_35 = arith.constant dense<0.000000e+00> : vector<64xf32>
    %72 = vector.multi_reduction <add>, %71, %cst_35 [1] : vector<64x128xf32> to vector<64xf32>
    %73 = vector.shape_cast %72 : vector<64xf32> to vector<64x1xf32>
    %cst_36 = arith.constant 3.125000e-02 : f32
    %74 = vector.broadcast %cst_36 : f32 to vector<64x1xf32>
    %75 = arith.mulf %73, %74 : vector<64x1xf32>
    %cst_37 = arith.constant 9.99999974E-6 : f32
    %76 = vector.broadcast %cst_37 : f32 to vector<64x1xf32>
    %77 = arith.addf %75, %76 : vector<64x1xf32>
    %78 = math.rsqrt %77 : vector<64x1xf32>
    %79 = vector.broadcast %78 : vector<64x1xf32> to vector<64x128xf32>
    %80 = arith.mulf %70, %79 : vector<64x128xf32>
    %81 = vector.broadcast %59 : vector<1x128xf32> to vector<64x128xf32>
    %82 = arith.mulf %80, %81 : vector<64x128xf32>
    %83 = vector.broadcast %60 : vector<1x128xf32> to vector<64x128xf32>
    %84 = arith.addf %82, %83 : vector<64x128xf32>
    %c0_38 = arith.constant 0 : index
    %c0_39 = arith.constant 0 : index
    %85 = vector.load %arg13[%c0_38, %c0_39] : memref<64x128xf32, #tpu.memory_space<vmem>>, vector<64x128xf32>
    tpu.vector_store %arg13[%c0_38, %c0_39], %84 {strides = array<i32>} : memref<64x128xf32, #tpu.memory_space<vmem>>, vector<64x128xf32>,
    return
  }
  func.func @transform_0(%arg0: i32) -> (i32, i32) {
    %c0_i32 = arith.constant 0 : i32
    %c0_i32_0 = arith.constant 0 : i32
    return %arg0, %c0_i32 : i32, i32
  }
  func.func @transform_1(%arg0: i32) -> (i32, i32) {
    %c0_i32 = arith.constant 0 : i32
    %c0_i32_0 = arith.constant 0 : i32
    return %arg0, %c0_i32 : i32, i32
  }
  func.func @transform_2(%arg0: i32) -> (i32, i32) {
    %c0_i32 = arith.constant 0 : i32
    %c0_i32_0 = arith.constant 0 : i32
    %c0_i32_1 = arith.constant 0 : i32
    return %c0_i32, %c0_i32_0 : i32, i32
  }
  func.func @transform_3(%arg0: i32) -> (i32, i32) {
    %c0_i32 = arith.constant 0 : i32
    %c0_i32_0 = arith.constant 0 : i32
    %c0_i32_1 = arith.constant 0 : i32
    return %c0_i32, %c0_i32_0 : i32, i32
  }
  func.func @transform_4(%arg0: i32) -> (i32, i32) {
    %c0_i32 = arith.constant 0 : i32
    %c0_i32_0 = arith.constant 0 : i32
    %c0_i32_1 = arith.constant 0 : i32
    return %c0_i32, %c0_i32_0 : i32, i32
  }
  func.func @transform_5(%arg0: i32) -> (i32, i32) {
    %c0_i32 = arith.constant 0 : i32
    %c0_i32_0 = arith.constant 0 : i32
    %c0_i32_1 = arith.constant 0 : i32
    return %c0_i32, %c0_i32_0 : i32, i32
  }
  func.func @transform_6(%arg0: i32) -> (i32, i32) {
    %c0_i32 = arith.constant 0 : i32
    %c0_i32_0 = arith.constant 0 : i32
    %c0_i32_1 = arith.constant 0 : i32
    return %c0_i32, %c0_i32_0 : i32, i32
  }
  func.func @transform_7(%arg0: i32) -> (i32, i32) {
    %c0_i32 = arith.constant 0 : i32
    %c0_i32_0 = arith.constant 0 : i32
    %c0_i32_1 = arith.constant 0 : i32
    return %c0_i32, %c0_i32_0 : i32, i32
  }
  func.func @transform_8(%arg0: i32) -> (i32, i32) {
    %c0_i32 = arith.constant 0 : i32
    %c0_i32_0 = arith.constant 0 : i32
    %c0_i32_1 = arith.constant 0 : i32
    return %c0_i32, %c0_i32_0 : i32, i32
  }
  func.func @transform_9(%arg0: i32) -> (i32, i32) {
    %c0_i32 = arith.constant 0 : i32
    %c0_i32_0 = arith.constant 0 : i32
    %c0_i32_1 = arith.constant 0 : i32
    return %c0_i32, %c0_i32_0 : i32, i32
  }
  func.func @transform_10(%arg0: i32) -> (i32, i32) {
    %c0_i32 = arith.constant 0 : i32
    %c0_i32_0 = arith.constant 0 : i32
    %c0_i32_1 = arith.constant 0 : i32
    return %c0_i32, %c0_i32_0 : i32, i32
  }
  func.func @transform_11(%arg0: i32) -> (i32, i32) {
    %c0_i32 = arith.constant 0 : i32
    %c0_i32_0 = arith.constant 0 : i32
    %c0_i32_1 = arith.constant 0 : i32
    return %c0_i32, %c0_i32_0 : i32, i32
  }
  func.func @transform_12(%arg0: i32) -> (i32, i32) {
    %c0_i32 = arith.constant 0 : i32
    %c0_i32_0 = arith.constant 0 : i32
    return %arg0, %c0_i32 : i32, i32
  }
}

</mosaic_0001>

<llo_original>
// kernel: rgat_layer.3
$region0: #{rgat_layer.3}
  #allocation0 [shape = 'u32[]', space=smem, size = 0x4, offset = 0x4, fixed_abs, tag = 'smem constant byte address 0x4 - core index']
  #allocation1 [shape = 'u32[72,128]{1,0:T(1,128)}', space=vmem, size = 0x9000, scoped, tag = 'internal scratch']
  %s0 = inlined_call_operand.vmem [shape: f32[128,128], index: 0, kind: input, shape index: {}, may-alias: {0,12}]
  %s1 = inlined_call_operand.vmem [shape: f32[128,128], index: 1, kind: input, shape index: {}]
  %s2 = inlined_call_operand.vmem [shape: f32[128,128], index: 2, kind: input, shape index: {}]
  %s3 = inlined_call_operand.vmem [shape: f32[1,128], index: 3, kind: input, shape index: {}]
  %s4 = inlined_call_operand.vmem [shape: f32[1,128], index: 4, kind: input, shape index: {}]
  %s5 = inlined_call_operand.vmem [shape: f32[1,128], index: 5, kind: input, shape index: {}]
  %s6 = inlined_call_operand.vmem [shape: f32[128,128], index: 6, kind: input, shape index: {}]
  %s7 = inlined_call_operand.vmem [shape: f32[1,128], index: 7, kind: input, shape index: {}]
  %s8 = inlined_call_operand.vmem [shape: f32[128,128], index: 8, kind: input, shape index: {}]
  %s9 = inlined_call_operand.vmem [shape: f32[1,128], index: 9, kind: input, shape index: {}]
  %s10 = inlined_call_operand.vmem [shape: f32[1,128], index: 10, kind: input, shape index: {}]
  %s11 = inlined_call_operand.vmem [shape: f32[1,128], index: 11, kind: input, shape index: {}]
  %s12 = inlined_call_operand.vmem [shape: f32[128,128], index: 12, kind: output, shape index: {}, may-alias: {0,12}]
  %s13 = sld [smem:[#allocation0]]
  $region81: #{rgat_layer.3} parent=0
    _
  %s15 = ssub.s32 1, %s13
  %s16 = scalar_select 0, %s15, %s13
  loop: start=0, step=1, limit=4
  $region2: #{rgat_layer.3} parent=0 // loop_pre_header
    _
  $region3: #{rgat_layer.3} parent=0 // loop_header
    %s18 = sphi 0, %s22
    %p19 = scmp.ge.s32.totalorder %s18, 4
    %s28 = sphi 0, %s30
    %s31 = sphi 0, %s28
    %s32 = sphi 0, %s31
    %s48 = sphi 0, %s32
    %s54 = sphi 0, %s56
    %s57 = sphi 0, %s54
    %s58 = sphi 0, %s57
    %s74 = sphi 0, %s58
    %s78 = sphi 0, %s78
    %s80 = sphi 0, %s78
    %s81 = sphi 0, %s80
    %s95 = sphi 0, %s81
    %s99 = sphi 0, %s99
    %s101 = sphi 0, %s99
    %s102 = sphi 0, %s101
    %s116 = sphi 0, %s102
    %s120 = sphi 0, %s120
    %s122 = sphi 0, %s120
    %s123 = sphi 0, %s122
    %s137 = sphi 0, %s123
    %s141 = sphi 0, %s141
    %s143 = sphi 0, %s141
    %s144 = sphi 0, %s143
    %s158 = sphi 0, %s144
    %s162 = sphi 0, %s162
    %s164 = sphi 0, %s162
    %s165 = sphi 0, %s164
    %s179 = sphi 0, %s165
    %s183 = sphi 0, %s183
    %s185 = sphi 0, %s183
    %s186 = sphi 0, %s185
    %s200 = sphi 0, %s186
    %s204 = sphi 0, %s204
    %s206 = sphi 0, %s204
    %s207 = sphi 0, %s206
    %s221 = sphi 0, %s207
    %s225 = sphi 0, %s225
    %s227 = sphi 0, %s225
    %s228 = sphi 0, %s227
    %s242 = sphi 0, %s228
    %s246 = sphi 0, %s246
    %s248 = sphi 0, %s246
    %s249 = sphi 0, %s248
    %s263 = sphi 0, %s249
    %s267 = sphi 0, %s267
    %s269 = sphi 0, %s267
    %s270 = sphi 0, %s269
    %s284 = sphi 0, %s270
    %s290 = sphi 0, %s292
    %s293 = sphi 0, %s290
    %s294 = sphi 0, %s293
    %s310 = sphi 0, %s294
  $region4: #{rgat_layer.3} parent=0 // loop_header_branch
    %21 = sbr.rel (%p19) target = $region8
  $region5: #{rgat_layer.3} parent=0 // loop_body
    %s23 = ssub.s32 %s18, 1
    %s24 = ssub.s32 %s18, 2
    %s25 = sadd.s32 %s18, 1
    %s26 = ssub.s32 %s18, %s25
    %p27 = scmp.eq.s32.totalorder %s26, 0
    %s29 = sadd.s32 %s28, 1
    %s30 = scalar_select %p27, %s28, %s29
    %p33 = pneg %p27
    %p34 = scmp.eq.s32.totalorder %s18, 1
    %p35 = por %p33, %p34
    %p36 = scmp.ne.s32.totalorder %s28, %s31
    %p37 = scmp.eq.s32.totalorder %s18, 0
    %p38 = por %p36, %p37
    %p39 = scmp.ne.s32.totalorder %s28, %s31
    %p40 = scmp.eq.s32.totalorder %s23, 1
    %p41 = por %p39, %p40
    %p42 = scmp.ne.s32.totalorder %s31, %s32
    %p43 = scmp.eq.s32.totalorder %s23, 0
    %p44 = por %p42, %p43
    %p45 = scmp.ne.s32.totalorder %s31, %s32
    %p46 = scmp.eq.s32.totalorder %s24, 1
    %p47 = por %p45, %p46
    %p49 = scmp.ne.s32.totalorder %s32, %s48
    %p50 = scmp.eq.s32.totalorder %s24, 0
    %p51 = por %p49, %p50
    %s52 = ssub.s32 %s18, %s25
    %p53 = scmp.eq.s32.totalorder %s52, 0
    %s55 = sadd.s32 %s54, 1
    %s56 = scalar_select %p53, %s54, %s55
    %p59 = pneg %p53
    %p60 = scmp.eq.s32.totalorder %s18, 1
    %p61 = por %p59, %p60
    %p62 = scmp.ne.s32.totalorder %s54, %s57
    %p63 = scmp.eq.s32.totalorder %s18, 0
    %p64 = por %p62, %p63
    %p65 = scmp.ne.s32.totalorder %s54, %s57
    %p66 = scmp.eq.s32.totalorder %s23, 1
    %p67 = por %p65, %p66
    %p68 = scmp.ne.s32.totalorder %s57, %s58
    %p69 = scmp.eq.s32.totalorder %s23, 0
    %p70 = por %p68, %p69
    %p71 = scmp.ne.s32.totalorder %s57, %s58
    %p72 = scmp.eq.s32.totalorder %s24, 1
    %p73 = por %p71, %p72
    %p75 = scmp.ne.s32.totalorder %s58, %s74
    %p76 = scmp.eq.s32.totalorder %s24, 0
    %p77 = por %p75, %p76
    %s79 = sadd.s32 %s78, 1
    %p82 = scmp.eq.s32.totalorder %s18, 1
    %p83 = scmp.ne.s32.totalorder %s78, %s80
    %p84 = scmp.eq.s32.totalorder %s18, 0
    %p85 = por %p83, %p84
    %p86 = scmp.ne.s32.totalorder %s78, %s80
    %p87 = scmp.eq.s32.totalorder %s23, 1
    %p88 = por %p86, %p87
    %p89 = scmp.ne.s32.totalorder %s80, %s81
    %p90 = scmp.eq.s32.totalorder %s23, 0
    %p91 = por %p89, %p90
    %p92 = scmp.ne.s32.totalorder %s80, %s81
    %p93 = scmp.eq.s32.totalorder %s24, 1
    %p94 = por %p92, %p93
    %p96 = scmp.ne.s32.totalorder %s81, %s95
    %p97 = scmp.eq.s32.totalorder %s24, 0
    %p98 = por %p96, %p97
    %s100 = sadd.s32 %s99, 1
    %p103 = scmp.eq.s32.totalorder %s18, 1
    %p104 = scmp.ne.s32.totalorder %s99, %s101
    %p105 = scmp.eq.s32.totalorder %s18, 0
    %p106 = por %p104, %p105
    %p107 = scmp.ne.s32.totalorder %s99, %s101
    %p108 = scmp.eq.s32.totalorder %s23, 1
    %p109 = por %p107, %p108
    %p110 = scmp.ne.s32.totalorder %s101, %s102
    %p111 = scmp.eq.s32.totalorder %s23, 0
    %p112 = por %p110, %p111
    %p113 = scmp.ne.s32.totalorder %s101, %s102
    %p114 = scmp.eq.s32.totalorder %s24, 1
    %p115 = por %p113, %p114
    %p117 = scmp.ne.s32.totalorder %s102, %s116
    %p118 = scmp.eq.s32.totalorder %s24, 0
    %p119 = por %p117, %p118
    %s121 = sadd.s32 %s120, 1
    %p124 = scmp.eq.s32.totalorder %s18, 1
    %p125 = scmp.ne.s32.totalorder %s120, %s122
    %p126 = scmp.eq.s32.totalorder %s18, 0
    %p127 = por %p125, %p126
    %p128 = scmp.ne.s32.totalorder %s120, %s122
    %p129 = scmp.eq.s32.totalorder %s23, 1
    %p130 = por %p128, %p129
    %p131 = scmp.ne.s32.totalorder %s122, %s123
    %p132 = scmp.eq.s32.totalorder %s23, 0
    %p133 = por %p131, %p132
    %p134 = scmp.ne.s32.totalorder %s122, %s123
    %p135 = scmp.eq.s32.totalorder %s24, 1
    %p136 = por %p134, %p135
    %p138 = scmp.ne.s32.totalorder %s123, %s137
    %p139 = scmp.eq.s32.totalorder %s24, 0
    %p140 = por %p138, %p139
    %s142 = sadd.s32 %s141, 1
    %p145 = scmp.eq.s32.totalorder %s18, 1
    %p146 = scmp.ne.s32.totalorder %s141, %s143
    %p147 = scmp.eq.s32.totalorder %s18, 0
    %p148 = por %p146, %p147
    %p149 = scmp.ne.s32.totalorder %s141, %s143
    %p150 = scmp.eq.s32.totalorder %s23, 1
    %p151 = por %p149, %p150
    %p152 = scmp.ne.s32.totalorder %s143, %s144
    %p153 = scmp.eq.s32.totalorder %s23, 0
    %p154 = por %p152, %p153
    %p155 = scmp.ne.s32.totalorder %s143, %s144
    %p156 = scmp.eq.s32.totalorder %s24, 1
    %p157 = por %p155, %p156
    %p159 = scmp.ne.s32.totalorder %s144, %s158
    %p160 = scmp.eq.s32.totalorder %s24, 0
    %p161 = por %p159, %p160
    %s163 = sadd.s32 %s162, 1
    %p166 = scmp.eq.s32.totalorder %s18, 1
    %p167 = scmp.ne.s32.totalorder %s162, %s164
    %p168 = scmp.eq.s32.totalorder %s18, 0
    %p169 = por %p167, %p168
    %p170 = scmp.ne.s32.totalorder %s162, %s164
    %p171 = scmp.eq.s32.totalorder %s23, 1
    %p172 = por %p170, %p171
    %p173 = scmp.ne.s32.totalorder %s164, %s165
    %p174 = scmp.eq.s32.totalorder %s23, 0
    %p175 = por %p173, %p174
    %p176 = scmp.ne.s32.totalorder %s164, %s165
    %p177 = scmp.eq.s32.totalorder %s24, 1
    %p178 = por %p176, %p177
    %p180 = scmp.ne.s32.totalorder %s165, %s179
    %p181 = scmp.eq.s32.totalorder %s24, 0
    %p182 = por %p180, %p181
    %s184 = sadd.s32 %s183, 1
    %p187 = scmp.eq.s32.totalorder %s18, 1
    %p188 = scmp.ne.s32.totalorder %s183, %s185
    %p189 = scmp.eq.s32.totalorder %s18, 0
    %p190 = por %p188, %p189
    %p191 = scmp.ne.s32.totalorder %s183, %s185
    %p192 = scmp.eq.s32.totalorder %s23, 1
    %p193 = por %p191, %p192
    %p194 = scmp.ne.s32.totalorder %s185, %s186
    %p195 = scmp.eq.s32.totalorder %s23, 0
    %p196 = por %p194, %p195
    %p197 = scmp.ne.s32.totalorder %s185, %s186
    %p198 = scmp.eq.s32.totalorder %s24, 1
    %p199 = por %p197, %p198
    %p201 = scmp.ne.s32.totalorder %s186, %s200
    %p202 = scmp.eq.s32.totalorder %s24, 0
    %p203 = por %p201, %p202
    %s205 = sadd.s32 %s204, 1
    %p208 = scmp.eq.s32.totalorder %s18, 1
    %p209 = scmp.ne.s32.totalorder %s204, %s206
    %p210 = scmp.eq.s32.totalorder %s18, 0
    %p211 = por %p209, %p210
    %p212 = scmp.ne.s32.totalorder %s204, %s206
    %p213 = scmp.eq.s32.totalorder %s23, 1
    %p214 = por %p212, %p213
    %p215 = scmp.ne.s32.totalorder %s206, %s207
    %p216 = scmp.eq.s32.totalorder %s23, 0
    %p217 = por %p215, %p216
    %p218 = scmp.ne.s32.totalorder %s206, %s207
    %p219 = scmp.eq.s32.totalorder %s24, 1
    %p220 = por %p218, %p219
    %p222 = scmp.ne.s32.totalorder %s207, %s221
    %p223 = scmp.eq.s32.totalorder %s24, 0
    %p224 = por %p222, %p223
    %s226 = sadd.s32 %s225, 1
    %p229 = scmp.eq.s32.totalorder %s18, 1
    %p230 = scmp.ne.s32.totalorder %s225, %s227
    %p231 = scmp.eq.s32.totalorder %s18, 0
    %p232 = por %p230, %p231
    %p233 = scmp.ne.s32.totalorder %s225, %s227
    %p234 = scmp.eq.s32.totalorder %s23, 1
    %p235 = por %p233, %p234
    %p236 = scmp.ne.s32.totalorder %s227, %s228
    %p237 = scmp.eq.s32.totalorder %s23, 0
    %p238 = por %p236, %p237
    %p239 = scmp.ne.s32.totalorder %s227, %s228
    %p240 = scmp.eq.s32.totalorder %s24, 1
    %p241 = por %p239, %p240
    %p243 = scmp.ne.s32.totalorder %s228, %s242
    %p244 = scmp.eq.s32.totalorder %s24, 0
    %p245 = por %p243, %p244
    %s247 = sadd.s32 %s246, 1
    %p250 = scmp.eq.s32.totalorder %s18, 1
    %p251 = scmp.ne.s32.totalorder %s246, %s248
    %p252 = scmp.eq.s32.totalorder %s18, 0
    %p253 = por %p251, %p252
    %p254 = scmp.ne.s32.totalorder %s246, %s248
    %p255 = scmp.eq.s32.totalorder %s23, 1
    %p256 = por %p254, %p255
    %p257 = scmp.ne.s32.totalorder %s248, %s249
    %p258 = scmp.eq.s32.totalorder %s23, 0
    %p259 = por %p257, %p258
    %p260 = scmp.ne.s32.totalorder %s248, %s249
    %p261 = scmp.eq.s32.totalorder %s24, 1
    %p262 = por %p260, %p261
    %p264 = scmp.ne.s32.totalorder %s249, %s263
    %p265 = scmp.eq.s32.totalorder %s24, 0
    %p266 = por %p264, %p265
    %s268 = sadd.s32 %s267, 1
    %p271 = scmp.eq.s32.totalorder %s18, 1
    %p272 = scmp.ne.s32.totalorder %s267, %s269
    %p273 = scmp.eq.s32.totalorder %s18, 0
    %p274 = por %p272, %p273
    %p275 = scmp.ne.s32.totalorder %s267, %s269
    %p276 = scmp.eq.s32.totalorder %s23, 1
    %p277 = por %p275, %p276
    %p278 = scmp.ne.s32.totalorder %s269, %s270
    %p279 = scmp.eq.s32.totalorder %s23, 0
    %p280 = por %p278, %p279
    %p281 = scmp.ne.s32.totalorder %s269, %s270
    %p282 = scmp.eq.s32.totalorder %s24, 1
    %p283 = por %p281, %p282
    %p285 = scmp.ne.s32.totalorder %s270, %s284
    %p286 = scmp.eq.s32.totalorder %s24, 0
    %p287 = por %p285, %p286
    %s288 = ssub.s32 %s18, %s25
    %p289 = scmp.eq.s32.totalorder %s288, 0
    %s291 = sadd.s32 %s290, 1
    %s292 = scalar_select %p289, %s290, %s291
    %p295 = pneg %p289
    %p296 = scmp.eq.s32.totalorder %s18, 1
    %p297 = por %p295, %p296
    %p298 = scmp.ne.s32.totalorder %s290, %s293
    %p299 = scmp.eq.s32.totalorder %s18, 0
    %p300 = por %p298, %p299
    %p301 = scmp.ne.s32.totalorder %s290, %s293
    %p302 = scmp.eq.s32.totalorder %s23, 1
    %p303 = por %p301, %p302
    %p304 = scmp.ne.s32.totalorder %s293, %s294
    %p305 = scmp.eq.s32.totalorder %s23, 0
    %p306 = por %p304, %p305
    %p307 = scmp.ne.s32.totalorder %s293, %s294
    %p308 = scmp.eq.s32.totalorder %s24, 1
    %p309 = por %p307, %p308
    %p311 = scmp.ne.s32.totalorder %s294, %s310
    %p312 = scmp.eq.s32.totalorder %s24, 0
    %p313 = por %p311, %p312
    %p314 = scmp.le.s32.totalorder 1, %s18
    %p315 = scmp.lt.s32.totalorder %s18, 3
    %p316 = pnand %p314, %p315
    %p317 = pneg %p316
    // Predicated region
    $region9: #{rgat_layer.3} parent=5 // pred_check
      _
    $region10: #{rgat_layer.3} parent=5 // pred_check_branch
      %319 = sbr.rel (%p316) target = $region12
    $region11: #{rgat_layer.3} parent=5 // pred_region
      %s320 = ssub.s32 %s18, 1
      // Predicated region
      $region13: #{rgat_layer.3} parent=11 // pred_check
        %p321 = pneg %p91
      $region14: #{rgat_layer.3} parent=11 // pred_check_branch
        %323 = sbr.rel (%p321) target = $region16
      $region15: #{rgat_layer.3} parent=11 // pred_region
        _
      $region16: #{rgat_layer.3} parent=11 // pred_fallthru
        _
      // Predicated region
      $region17: #{rgat_layer.3} parent=11 // pred_check
        %p324 = pneg %p112
      $region18: #{rgat_layer.3} parent=11 // pred_check_branch
        %326 = sbr.rel (%p324) target = $region20
      $region19: #{rgat_layer.3} parent=11 // pred_region
        _
      $region20: #{rgat_layer.3} parent=11 // pred_fallthru
        _
      // Predicated region
      $region21: #{rgat_layer.3} parent=11 // pred_check
        %p327 = pneg %p133
      $region22: #{rgat_layer.3} parent=11 // pred_check_branch
        %329 = sbr.rel (%p327) target = $region24
      $region23: #{rgat_layer.3} parent=11 // pred_region
        _
      $region24: #{rgat_layer.3} parent=11 // pred_fallthru
        _
      // Predicated region
      $region25: #{rgat_layer.3} parent=11 // pred_check
        %p330 = pneg %p154
      $region26: #{rgat_layer.3} parent=11 // pred_check_branch
        %332 = sbr.rel (%p330) target = $region28
      $region27: #{rgat_layer.3} parent=11 // pred_region
        _
      $region28: #{rgat_layer.3} parent=11 // pred_fallthru
        _
      // Predicated region
      $region29: #{rgat_layer.3} parent=11 // pred_check
        %p333 = pneg %p175
      $region30: #{rgat_layer.3} parent=11 // pred_check_branch
        %335 = sbr.rel (%p333) target = $region32
      $region31: #{rgat_layer.3} parent=11 // pred_region
        _
      $region32: #{rgat_layer.3} parent=11 // pred_fallthru
        _
      // Predicated region
      $region33: #{rgat_layer.3} parent=11 // pred_check
        %p336 = pneg %p196
      $region34: #{rgat_layer.3} parent=11 // pred_check_branch
        %338 = sbr.rel (%p336) target = $region36
      $region35: #{rgat_layer.3} parent=11 // pred_region
        _
      $region36: #{rgat_layer.3} parent=11 // pred_fallthru
        _
      // Predicated region
      $region37: #{rgat_layer.3} parent=11 // pred_check
        %p339 = pneg %p217
      $region38: #{rgat_layer.3} parent=11 // pred_check_branch
        %341 = sbr.rel (%p339) target = $region40
      $region39: #{rgat_layer.3} parent=11 // pred_region
        _
      $region40: #{rgat_layer.3} parent=11 // pred_fallthru
        _
      // Predicated region
      $region41: #{rgat_layer.3} parent=11 // pred_check
        %p342 = pneg %p238
      $region42: #{rgat_layer.3} parent=11 // pred_check_branch
        %344 = sbr.rel (%p342) target = $region44
      $region43: #{rgat_layer.3} parent=11 // pred_region
        _
      $region44: #{rgat_layer.3} parent=11 // pred_fallthru
        _
      // Predicated region
      $region45: #{rgat_layer.3} parent=11 // pred_check
        %p345 = pneg %p259
      $region46: #{rgat_layer.3} parent=11 // pred_check_branch
        %347 = sbr.rel (%p345) target = $region48
      $region47: #{rgat_layer.3} parent=11 // pred_region
        _
      $region48: #{rgat_layer.3} parent=11 // pred_fallthru
        _
      // Predicated region
      $region49: #{rgat_layer.3} parent=11 // pred_check
        %p348 = pneg %p280
      $region50: #{rgat_layer.3} parent=11 // pred_check_branch
        %350 = sbr.rel (%p348) target = $region52
      $region51: #{rgat_layer.3} parent=11 // pred_region
        _
      $region52: #{rgat_layer.3} parent=11 // pred_fallthru
        _
    $region12: #{rgat_layer.3} parent=5 // pred_fallthru
      _
    %p351 = scmp.lt.s32.totalorder %s18, 2
    // Predicated region
    $region53: #{rgat_layer.3} parent=5 // pred_check
      %p352 = pneg %p351
    $region54: #{rgat_layer.3} parent=5 // pred_check_branch
      %354 = sbr.rel (%p352) target = $region56
    $region55: #{rgat_layer.3} parent=5 // pred_region
      // Predicated region
      $region57: #{rgat_layer.3} parent=55 // pred_check
        %p355 = pneg %p38
      $region58: #{rgat_layer.3} parent=55 // pred_check_branch
        %357 = sbr.rel (%p355) target = $region60
      $region59: #{rgat_layer.3} parent=55 // pred_region
        %s358 = smul.u32 8, %s18
        %p359 = scmp.lt.s32.totalorder %s358, 15
        %s360 = scalar_select %p359, %s358, 15
        %s361 = smul.addr %s360, 8
        %s362 = scalar_lea.vmem %s0, %s361
        %s363 = smul.u32 8, %s18
      $region60: #{rgat_layer.3} parent=55 // pred_fallthru
        _
      // Predicated region
      $region61: #{rgat_layer.3} parent=55 // pred_check
        %p364 = pneg %p64
      $region62: #{rgat_layer.3} parent=55 // pred_check_branch
        %366 = sbr.rel (%p364) target = $region64
      $region63: #{rgat_layer.3} parent=55 // pred_region
        %s367 = smul.u32 8, %s18
        %p368 = scmp.lt.s32.totalorder %s367, 15
        %s369 = scalar_select %p368, %s367, 15
        %s370 = smul.addr %s369, 8
        %s371 = scalar_lea.vmem %s1, %s370
        %s372 = smul.u32 8, %s18
      $region64: #{rgat_layer.3} parent=55 // pred_fallthru
        _
    $region56: #{rgat_layer.3} parent=5 // pred_fallthru
      _
    %p373 = scmp.le.s32.totalorder 1, %s18
    %p374 = scmp.lt.s32.totalorder %s18, 3
    %p375 = pnand %p373, %p374
    %p376 = pneg %p375
    // Predicated region
    $region65: #{rgat_layer.3} parent=5 // pred_check
      _
    $region66: #{rgat_layer.3} parent=5 // pred_check_branch
      %378 = sbr.rel (%p375) target = $region68
    $region67: #{rgat_layer.3} parent=5 // pred_region
      %s379 = ssub.s32 %s18, 1
      %s380 = smul.u32 8, %s23
      %p381 = scmp.lt.s32.totalorder %s380, 15
      %s382 = scalar_select %p381, %s380, 15
      %s383 = smul.addr %s382, 8
      %s384 = scalar_lea.vmem %s0, %s383
      %p385 = pneg %p44
      %p386 = pneg %p41
      %s387 = smul.u32 8, %s23
      %p388 = scmp.lt.s32.totalorder %s387, 15
      %s389 = scalar_select %p388, %s387, 15
      %s390 = smul.addr %s389, 8
      %s391 = scalar_lea.vmem %s1, %s390
      %p392 = pneg %p70
      %p393 = pneg %p67
      %p394 = pneg %p91
      %p395 = pneg %p88
      %p396 = pneg %p112
      %p397 = pneg %p109
      %p398 = pneg %p133
      %p399 = pneg %p130
      %p400 = pneg %p154
      %p401 = pneg %p151
      %p402 = pneg %p175
      %p403 = pneg %p172
      %p404 = pneg %p196
      %p405 = pneg %p193
      %p406 = pneg %p217
      %p407 = pneg %p214
      %p408 = pneg %p238
      %p409 = pneg %p235
      %p410 = pneg %p259
      %p411 = pneg %p256
      %p412 = pneg %p280
      %p413 = pneg %p277
      %p414 = pneg %p306
      %p415 = pneg %p303
      %s416 = smul.u32 8, %s23
      %p417 = scmp.lt.s32.totalorder %s416, 15
      %s418 = scalar_select %p417, %s416, 15
      %s419 = smul.addr %s418, 8
      %s420 = scalar_lea.vmem %s12, %s419
      %s421 = smul.u32 8, %s23
      %p422 = scmp.lt.s32.totalorder %s421, 15
      %s423 = scalar_select %p422, %s421, 15
      %s424 = smul.addr %s423, 8
      %s425 = scalar_lea.vmem %s0, %s424
      %s426 = smul.u32 8, %s23
      %s427 = smul.u32 8, %s23
      %p428 = scmp.lt.s32.totalorder %s427, 15
      %s429 = scalar_select %p428, %s427, 15
      %s430 = smul.addr %s429, 8
      %s431 = scalar_lea.vmem %s1, %s430
      %s432 = smul.u32 8, %s23
      %s433 = smul.u32 8, %s23
      %p434 = scmp.lt.s32.totalorder %s433, 15
      %s435 = scalar_select %p434, %s433, 15
      %s436 = smul.addr %s435, 8
      %s437 = scalar_lea.vmem %s12, %s436
      %s438 = smul.u32 8, %s23
      %v439 = vlaneseq
      %v440 = vand.u32 %v439, 127
      %vm441 = vcmp.lt.s32.totalorder %v440, 32
      %v442 = vsel %vm441, 1.0, 0.0
      %v443 = vld [vmem:[%s425] sm:$0xff]
      %v444 = vld [vmem:[%s425 + $0x8] sm:$0xff]
      %v445 = vld [vmem:[%s425 + $0x10] sm:$0xff]
      %v446 = vld [vmem:[%s425 + $0x18] sm:$0xff]
      %v447 = vld [vmem:[%s425 + $0x20] sm:$0xff]
      %v448 = vld [vmem:[%s425 + $0x28] sm:$0xff]
      %v449 = vld [vmem:[%s425 + $0x30] sm:$0xff]
      %v450 = vld [vmem:[%s425 + $0x38] sm:$0xff]
      %v451 = vld [vmem:[%s431] sm:$0xff]
      %v452 = vld [vmem:[%s431 + $0x8] sm:$0xff]
      %v453 = vld [vmem:[%s431 + $0x10] sm:$0xff]
      %v454 = vld [vmem:[%s431 + $0x18] sm:$0xff]
      %v455 = vld [vmem:[%s431 + $0x20] sm:$0xff]
      %v456 = vld [vmem:[%s431 + $0x28] sm:$0xff]
      %v457 = vld [vmem:[%s431 + $0x30] sm:$0xff]
      %v458 = vld [vmem:[%s431 + $0x38] sm:$0xff]
      %v459 = vpack.c.bf16 %v452, %v451
      %v460 = vpack.c.bf16 %v454, %v453
      %v461 = vpack.c.bf16 %v456, %v455
      %v462 = vpack.c.bf16 %v458, %v457
      %v463 = vld [vmem:[%s2] sm:$0xff]
      %v464 = vld [vmem:[%s2 + $0x8] sm:$0xff]
      %v465 = vld [vmem:[%s2 + $0x10] sm:$0xff]
      %v466 = vld [vmem:[%s2 + $0x18] sm:$0xff]
      %v467 = vld [vmem:[%s2 + $0x20] sm:$0xff]
      %v468 = vld [vmem:[%s2 + $0x28] sm:$0xff]
      %v469 = vld [vmem:[%s2 + $0x30] sm:$0xff]
      %v470 = vld [vmem:[%s2 + $0x38] sm:$0xff]
      %v471 = vld [vmem:[%s2 + $0x40] sm:$0xff]
      %v472 = vld [vmem:[%s2 + $0x48] sm:$0xff]
      %v473 = vld [vmem:[%s2 + $0x50] sm:$0xff]
      %v474 = vld [vmem:[%s2 + $0x58] sm:$0xff]
      %v475 = vld [vmem:[%s2 + $0x60] sm:$0xff]
      %v476 = vld [vmem:[%s2 + $0x68] sm:$0xff]
      %v477 = vld [vmem:[%s2 + $0x70] sm:$0xff]
      %v478 = vld [vmem:[%s2 + $0x78] sm:$0xff]
      %v479 = vpack.c.bf16 %v464, %v463
      %v480 = vpack.c.bf16 %v466, %v465
      %v481 = vpack.c.bf16 %v468, %v467
      %v482 = vpack.c.bf16 %v470, %v469
      %v483 = vpack.c.bf16 %v472, %v471
      %v484 = vpack.c.bf16 %v474, %v473
      %v485 = vpack.c.bf16 %v476, %v475
      %v486 = vpack.c.bf16 %v478, %v477
      %v487 = vld [vmem:[%s3] sm:$0x1]
      %v489 = vperm.slane %v487, 0
      %491 = vmatpush.bf16.msra.mxu0 %v486
      %492 = vmatpush.bf16.msra.mxu0 %v485
      %493 = vmatpush.bf16.msra.mxu0 %v484
      %494 = vmatpush.bf16.msra.mxu0 %v483
      %495 = vmatpush.bf16.msra.mxu0 %v482
      %496 = vmatpush.bf16.msra.mxu0 %v481
      %497 = vmatpush.bf16.msra.mxu0 %v480
      %498 = vmatpush.bf16.msra.mxu0 %v479
      %499 = vmatmul.bf16.gmra.mxu0 %v459
      %v500 = vpop.f32.mrf.mxu0
      %v501 = vadd.f32 %v489, %v500
      %v502 = vpop.f32.mrf.mxu0
      %v503 = vadd.f32 %v489, %v502
      %504 = vmatmul.bf16.gmra.mxu0 %v460
      %v505 = vpop.f32.mrf.mxu0
      %v506 = vadd.f32 %v489, %v505
      %v507 = vpop.f32.mrf.mxu0
      %v508 = vadd.f32 %v489, %v507
      %509 = vmatmul.bf16.gmra.mxu0 %v461
      %v510 = vpop.f32.mrf.mxu0
      %v511 = vadd.f32 %v489, %v510
      %v512 = vpop.f32.mrf.mxu0
      %v513 = vadd.f32 %v489, %v512
      %514 = vmatmul.bf16.gmra.mxu0 %v462
      %v515 = vpop.f32.mrf.mxu0
      %v516 = vadd.f32 %v489, %v515
      %v517 = vpop.f32.mrf.mxu0
      %v518 = vadd.f32 %v489, %v517
      %519 = vdwg.mxu0
      %v520 = vadd.f32 %v443, %v501
      %v521 = vadd.f32 %v444, %v503
      %v522 = vadd.f32 %v445, %v506
      %v523 = vadd.f32 %v446, %v508
      %v524 = vadd.f32 %v447, %v511
      %v525 = vadd.f32 %v448, %v513
      %v526 = vadd.f32 %v449, %v516
      %v527 = vadd.f32 %v450, %v518
      %v528 = vld [vmem:[%s4] sm:$0x1]
      %v529 = vld [vmem:[%s5] sm:$0x1]
      %v530 = vmul.f32 %v520, %v442
      %v531 = vmul.f32 %v521, %v442
      %v532 = vmul.f32 %v522, %v442
      %v533 = vmul.f32 %v523, %v442
      %v534 = vmul.f32 %v524, %v442
      %v535 = vmul.f32 %v525, %v442
      %v536 = vmul.f32 %v526, %v442
      %v537 = vmul.f32 %v527, %v442
      %538 = vadd.xlane.f32.xlu0 %v530
      %v539 = vpop.xlane.xlu0 %538
      %540 = vadd.xlane.f32.xlu0 %v531
      %v541 = vpop.xlane.xlu0 %540
      %542 = vadd.xlane.f32.xlu0 %v532
      %v543 = vpop.xlane.xlu0 %542
      %544 = vadd.xlane.f32.xlu0 %v533
      %v545 = vpop.xlane.xlu0 %544
      %546 = vadd.xlane.f32.xlu0 %v534
      %v547 = vpop.xlane.xlu0 %546
      %548 = vadd.xlane.f32.xlu0 %v535
      %v549 = vpop.xlane.xlu0 %548
      %550 = vadd.xlane.f32.xlu0 %v536
      %v551 = vpop.xlane.xlu0 %550
      %552 = vadd.xlane.f32.xlu0 %v537
      %v553 = vpop.xlane.xlu0 %552
      %v554 = vmul.f32 %v539, 0.03125
      %v555 = vmul.f32 %v541, 0.03125
      %v556 = vmul.f32 %v543, 0.03125
      %v557 = vmul.f32 %v545, 0.03125
      %v558 = vmul.f32 %v547, 0.03125
      %v559 = vmul.f32 %v549, 0.03125
      %v560 = vmul.f32 %v551, 0.03125
      %v561 = vmul.f32 %v553, 0.03125
      %v562 = vsub.f32 %v520, %v554
      %v563 = vsub.f32 %v521, %v555
      %v564 = vsub.f32 %v522, %v556
      %v565 = vsub.f32 %v523, %v557
      %v566 = vsub.f32 %v524, %v558
      %v567 = vsub.f32 %v525, %v559
      %v568 = vsub.f32 %v526, %v560
      %v569 = vsub.f32 %v527, %v561
      %v570 = vmul.f32 %v562, %v442
      %v571 = vmul.f32 %v563, %v442
      %v572 = vmul.f32 %v564, %v442
      %v573 = vmul.f32 %v565, %v442
      %v574 = vmul.f32 %v566, %v442
      %v575 = vmul.f32 %v567, %v442
      %v576 = vmul.f32 %v568, %v442
      %v577 = vmul.f32 %v569, %v442
      %v578 = vmul.f32 %v570, %v570
      %v579 = vmul.f32 %v571, %v571
      %v580 = vmul.f32 %v572, %v572
      %v581 = vmul.f32 %v573, %v573
      %v582 = vmul.f32 %v574, %v574
      %v583 = vmul.f32 %v575, %v575
      %v584 = vmul.f32 %v576, %v576
      %v585 = vmul.f32 %v577, %v577
      %586 = vadd.xlane.f32.xlu0 %v578
      %v587 = vpop.xlane.xlu0 %586
      %588 = vadd.xlane.f32.xlu0 %v579
      %v589 = vpop.xlane.xlu0 %588
      %590 = vadd.xlane.f32.xlu0 %v580
      %v591 = vpop.xlane.xlu0 %590
      %592 = vadd.xlane.f32.xlu0 %v581
      %v593 = vpop.xlane.xlu0 %592
      %594 = vadd.xlane.f32.xlu0 %v582
      %v595 = vpop.xlane.xlu0 %594
      %596 = vadd.xlane.f32.xlu0 %v583
      %v597 = vpop.xlane.xlu0 %596
      %598 = vadd.xlane.f32.xlu0 %v584
      %v599 = vpop.xlane.xlu0 %598
      %600 = vadd.xlane.f32.xlu0 %v585
      %v601 = vpop.xlane.xlu0 %600
      %v602 = vmul.f32 %v587, 0.03125
      %v603 = vmul.f32 %v589, 0.03125
      %v604 = vmul.f32 %v591, 0.03125
      %v605 = vmul.f32 %v593, 0.03125
      %v606 = vmul.f32 %v595, 0.03125
      %v607 = vmul.f32 %v597, 0.03125
      %v608 = vmul.f32 %v599, 0.03125
      %v609 = vmul.f32 %v601, 0.03125
      %v610 = vadd.f32 %v602, 1e-05
      %v611 = vadd.f32 %v603, 1e-05
      %v612 = vadd.f32 %v604, 1e-05
      %v613 = vadd.f32 %v605, 1e-05
      %v614 = vadd.f32 %v606, 1e-05
      %v615 = vadd.f32 %v607, 1e-05
      %v616 = vadd.f32 %v608, 1e-05
      %v617 = vadd.f32 %v609, 1e-05
      %v618 = vrsqrt.pop %v610
      %v619 = vmul.f32 %v618, %v610
      %v620 = vmul.f32 %v619, %v618
      %v621 = vmul.f32 0.5, %v620
      %v622 = vsub.f32 1.5, %v621
      %v623 = vmul.f32 %v618, %v622
      %vm624 = vweird.f32 %v610
      %vm625 = vweird.f32 %v618
      %vm626 = vmor %vm624, %vm625
      %v627 = vsel %vm626, %v618, %v623
      %v628 = vrsqrt.pop %v611
      %v629 = vmul.f32 %v628, %v611
      %v630 = vmul.f32 %v629, %v628
      %v631 = vmul.f32 0.5, %v630
      %v632 = vsub.f32 1.5, %v631
      %v633 = vmul.f32 %v628, %v632
      %vm634 = vweird.f32 %v611
      %vm635 = vweird.f32 %v628
      %vm636 = vmor %vm634, %vm635
      %v637 = vsel %vm636, %v628, %v633
      %v638 = vrsqrt.pop %v612
      %v639 = vmul.f32 %v638, %v612
      %v640 = vmul.f32 %v639, %v638
      %v641 = vmul.f32 0.5, %v640
      %v642 = vsub.f32 1.5, %v641
      %v643 = vmul.f32 %v638, %v642
      %vm644 = vweird.f32 %v612
      %vm645 = vweird.f32 %v638
      %vm646 = vmor %vm644, %vm645
      %v647 = vsel %vm646, %v638, %v643
      %v648 = vrsqrt.pop %v613
      %v649 = vmul.f32 %v648, %v613
      %v650 = vmul.f32 %v649, %v648
      %v651 = vmul.f32 0.5, %v650
      %v652 = vsub.f32 1.5, %v651
      %v653 = vmul.f32 %v648, %v652
      %vm654 = vweird.f32 %v613
      %vm655 = vweird.f32 %v648
      %vm656 = vmor %vm654, %vm655
      %v657 = vsel %vm656, %v648, %v653
      %v658 = vrsqrt.pop %v614
      %v659 = vmul.f32 %v658, %v614
      %v660 = vmul.f32 %v659, %v658
      %v661 = vmul.f32 0.5, %v660
      %v662 = vsub.f32 1.5, %v661
      %v663 = vmul.f32 %v658, %v662
      %vm664 = vweird.f32 %v614
      %vm665 = vweird.f32 %v658
      %vm666 = vmor %vm664, %vm665
      %v667 = vsel %vm666, %v658, %v663
      %v668 = vrsqrt.pop %v615
      %v669 = vmul.f32 %v668, %v615
      %v670 = vmul.f32 %v669, %v668
      %v671 = vmul.f32 0.5, %v670
      %v672 = vsub.f32 1.5, %v671
      %v673 = vmul.f32 %v668, %v672
      %vm674 = vweird.f32 %v615
      %vm675 = vweird.f32 %v668
      %vm676 = vmor %vm674, %vm675
      %v677 = vsel %vm676, %v668, %v673
      %v678 = vrsqrt.pop %v616
      %v679 = vmul.f32 %v678, %v616
      %v680 = vmul.f32 %v679, %v678
      %v681 = vmul.f32 0.5, %v680
      %v682 = vsub.f32 1.5, %v681
      %v683 = vmul.f32 %v678, %v682
      %vm684 = vweird.f32 %v616
      %vm685 = vweird.f32 %v678
      %vm686 = vmor %vm684, %vm685
      %v687 = vsel %vm686, %v678, %v683
      %v688 = vrsqrt.pop %v617
      %v689 = vmul.f32 %v688, %v617
      %v690 = vmul.f32 %v689, %v688
      %v691 = vmul.f32 0.5, %v690
      %v692 = vsub.f32 1.5, %v691
      %v693 = vmul.f32 %v688, %v692
      %vm694 = vweird.f32 %v617
      %vm695 = vweird.f32 %v688
      %vm696 = vmor %vm694, %vm695
      %v697 = vsel %vm696, %v688, %v693
      %v698 = vmul.f32 %v570, %v627
      %v699 = vmul.f32 %v571, %v637
      %v700 = vmul.f32 %v572, %v647
      %v701 = vmul.f32 %v573, %v657
      %v702 = vmul.f32 %v574, %v667
      %v703 = vmul.f32 %v575, %v677
      %v704 = vmul.f32 %v576, %v687
      %v705 = vmul.f32 %v577, %v697
      %v707 = vperm.slane %v528, 0
      %v709 = vmul.f32 %v698, %v707
      %v710 = vmul.f32 %v699, %v707
      %v711 = vmul.f32 %v700, %v707
      %v712 = vmul.f32 %v701, %v707
      %v713 = vmul.f32 %v702, %v707
      %v714 = vmul.f32 %v703, %v707
      %v715 = vmul.f32 %v704, %v707
      %v716 = vmul.f32 %v705, %v707
      %v718 = vperm.slane %v529, 0
      %v720 = vadd.f32 %v709, %v718
      %v721 = vadd.f32 %v710, %v718
      %v722 = vadd.f32 %v711, %v718
      %v723 = vadd.f32 %v712, %v718
      %v724 = vadd.f32 %v713, %v718
      %v725 = vadd.f32 %v714, %v718
      %v726 = vadd.f32 %v715, %v718
      %v727 = vadd.f32 %v716, %v718
      %v728 = vpack.c.bf16 %v721, %v720
      %v729 = vpack.c.bf16 %v723, %v722
      %v730 = vpack.c.bf16 %v725, %v724
      %v731 = vpack.c.bf16 %v727, %v726
      %v732 = vld [vmem:[%s6] sm:$0xff]
      %v733 = vld [vmem:[%s6 + $0x8] sm:$0xff]
      %v734 = vld [vmem:[%s6 + $0x10] sm:$0xff]
      %v735 = vld [vmem:[%s6 + $0x18] sm:$0xff]
      %v736 = vld [vmem:[%s6 + $0x20] sm:$0xff]
      %v737 = vld [vmem:[%s6 + $0x28] sm:$0xff]
      %v738 = vld [vmem:[%s6 + $0x30] sm:$0xff]
      %v739 = vld [vmem:[%s6 + $0x38] sm:$0xff]
      %v740 = vld [vmem:[%s6 + $0x40] sm:$0xff]
      %v741 = vld [vmem:[%s6 + $0x48] sm:$0xff]
      %v742 = vld [vmem:[%s6 + $0x50] sm:$0xff]
      %v743 = vld [vmem:[%s6 + $0x58] sm:$0xff]
      %v744 = vld [vmem:[%s6 + $0x60] sm:$0xff]
      %v745 = vld [vmem:[%s6 + $0x68] sm:$0xff]
      %v746 = vld [vmem:[%s6 + $0x70] sm:$0xff]
      %v747 = vld [vmem:[%s6 + $0x78] sm:$0xff]
      %v748 = vpack.c.bf16 %v733, %v732
      %v749 = vpack.c.bf16 %v735, %v734
      %v750 = vpack.c.bf16 %v737, %v736
      %v751 = vpack.c.bf16 %v739, %v738
      %v752 = vpack.c.bf16 %v741, %v740
      %v753 = vpack.c.bf16 %v743, %v742
      %v754 = vpack.c.bf16 %v745, %v744
      %v755 = vpack.c.bf16 %v747, %v746
      %v756 = vld [vmem:[%s7] sm:$0x1]
      %v758 = vperm.slane %v756, 0
      %760 = vmatpush.bf16.msra.mxu0 %v755
      %761 = vmatpush.bf16.msra.mxu0 %v754
      %762 = vmatpush.bf16.msra.mxu0 %v753
      %763 = vmatpush.bf16.msra.mxu0 %v752
      %764 = vmatpush.bf16.msra.mxu0 %v751
      %765 = vmatpush.bf16.msra.mxu0 %v750
      %766 = vmatpush.bf16.msra.mxu0 %v749
      %767 = vmatpush.bf16.msra.mxu0 %v748
      %768 = vmatmul.bf16.gmra.mxu0 %v728
      %v769 = vpop.f32.mrf.mxu0
      %v770 = vadd.f32 %v758, %v769
      %v771 = vpop.f32.mrf.mxu0
      %v772 = vadd.f32 %v758, %v771
      %773 = vmatmul.bf16.gmra.mxu0 %v729
      %v774 = vpop.f32.mrf.mxu0
      %v775 = vadd.f32 %v758, %v774
      %v776 = vpop.f32.mrf.mxu0
      %v777 = vadd.f32 %v758, %v776
      %778 = vmatmul.bf16.gmra.mxu0 %v730
      %v779 = vpop.f32.mrf.mxu0
      %v780 = vadd.f32 %v758, %v779
      %v781 = vpop.f32.mrf.mxu0
      %v782 = vadd.f32 %v758, %v781
      %783 = vmatmul.bf16.gmra.mxu0 %v731
      %v784 = vpop.f32.mrf.mxu0
      %v785 = vadd.f32 %v758, %v784
      %v786 = vpop.f32.mrf.mxu0
      %v787 = vadd.f32 %v758, %v786
      %788 = vdwg.mxu0
      %v789 = vmax.f32 %v770, 0.0
      %v790 = vmax.f32 %v772, 0.0
      %v791 = vmax.f32 %v775, 0.0
      %v792 = vmax.f32 %v777, 0.0
      %v793 = vmax.f32 %v780, 0.0
      %v794 = vmax.f32 %v782, 0.0
      %v795 = vmax.f32 %v785, 0.0
      %v796 = vmax.f32 %v787, 0.0
      %v797 = vpack.c.bf16 %v790, %v789
      %v798 = vpack.c.bf16 %v792, %v791
      %v799 = vpack.c.bf16 %v794, %v793
      %v800 = vpack.c.bf16 %v796, %v795
      %v801 = vld [vmem:[%s8] sm:$0xff]
      %v802 = vld [vmem:[%s8 + $0x8] sm:$0xff]
      %v803 = vld [vmem:[%s8 + $0x10] sm:$0xff]
      %v804 = vld [vmem:[%s8 + $0x18] sm:$0xff]
      %v805 = vld [vmem:[%s8 + $0x20] sm:$0xff]
      %v806 = vld [vmem:[%s8 + $0x28] sm:$0xff]
      %v807 = vld [vmem:[%s8 + $0x30] sm:$0xff]
      %v808 = vld [vmem:[%s8 + $0x38] sm:$0xff]
      %v809 = vld [vmem:[%s8 + $0x40] sm:$0xff]
      %v810 = vld [vmem:[%s8 + $0x48] sm:$0xff]
      %v811 = vld [vmem:[%s8 + $0x50] sm:$0xff]
      %v812 = vld [vmem:[%s8 + $0x58] sm:$0xff]
      %v813 = vld [vmem:[%s8 + $0x60] sm:$0xff]
      %v814 = vld [vmem:[%s8 + $0x68] sm:$0xff]
      %v815 = vld [vmem:[%s8 + $0x70] sm:$0xff]
      %v816 = vld [vmem:[%s8 + $0x78] sm:$0xff]
      %v817 = vpack.c.bf16 %v802, %v801
      %v818 = vpack.c.bf16 %v804, %v803
      %v819 = vpack.c.bf16 %v806, %v805
      %v820 = vpack.c.bf16 %v808, %v807
      %v821 = vpack.c.bf16 %v810, %v809
      %v822 = vpack.c.bf16 %v812, %v811
      %v823 = vpack.c.bf16 %v814, %v813
      %v824 = vpack.c.bf16 %v816, %v815
      %v825 = vld [vmem:[%s9] sm:$0x1]
      %v827 = vperm.slane %v825, 0
      %829 = vmatpush.bf16.msra.mxu0 %v824
      %830 = vmatpush.bf16.msra.mxu0 %v823
      %831 = vmatpush.bf16.msra.mxu0 %v822
      %832 = vmatpush.bf16.msra.mxu0 %v821
      %833 = vmatpush.bf16.msra.mxu0 %v820
      %834 = vmatpush.bf16.msra.mxu0 %v819
      %835 = vmatpush.bf16.msra.mxu0 %v818
      %836 = vmatpush.bf16.msra.mxu0 %v817
      %837 = vmatmul.bf16.gmra.mxu0 %v797
      %v838 = vpop.f32.mrf.mxu0
      %v839 = vadd.f32 %v827, %v838
      %v840 = vpop.f32.mrf.mxu0
      %v841 = vadd.f32 %v827, %v840
      %842 = vmatmul.bf16.gmra.mxu0 %v798
      %v843 = vpop.f32.mrf.mxu0
      %v844 = vadd.f32 %v827, %v843
      %v845 = vpop.f32.mrf.mxu0
      %v846 = vadd.f32 %v827, %v845
      %847 = vmatmul.bf16.gmra.mxu0 %v799
      %v848 = vpop.f32.mrf.mxu0
      %v849 = vadd.f32 %v827, %v848
      %v850 = vpop.f32.mrf.mxu0
      %v851 = vadd.f32 %v827, %v850
      %852 = vmatmul.bf16.gmra.mxu0 %v800
      %v853 = vpop.f32.mrf.mxu0
      %v854 = vadd.f32 %v827, %v853
      %v855 = vpop.f32.mrf.mxu0
      %v856 = vadd.f32 %v827, %v855
      %857 = vdwg.mxu0
      %v858 = vadd.f32 %v720, %v839
      %v859 = vadd.f32 %v721, %v841
      %v860 = vadd.f32 %v722, %v844
      %v861 = vadd.f32 %v723, %v846
      %v862 = vadd.f32 %v724, %v849
      %v863 = vadd.f32 %v725, %v851
      %v864 = vadd.f32 %v726, %v854
      %v865 = vadd.f32 %v727, %v856
      %v866 = vld [vmem:[%s10] sm:$0x1]
      %v867 = vld [vmem:[%s11] sm:$0x1]
      %v868 = vmul.f32 %v858, %v442
      %v869 = vmul.f32 %v859, %v442
      %v870 = vmul.f32 %v860, %v442
      %v871 = vmul.f32 %v861, %v442
      %v872 = vmul.f32 %v862, %v442
      %v873 = vmul.f32 %v863, %v442
      %v874 = vmul.f32 %v864, %v442
      %v875 = vmul.f32 %v865, %v442
      %876 = vadd.xlane.f32.xlu0 %v868
      %v877 = vpop.xlane.xlu0 %876
      %878 = vadd.xlane.f32.xlu0 %v869
      %v879 = vpop.xlane.xlu0 %878
      %880 = vadd.xlane.f32.xlu0 %v870
      %v881 = vpop.xlane.xlu0 %880
      %882 = vadd.xlane.f32.xlu0 %v871
      %v883 = vpop.xlane.xlu0 %882
      %884 = vadd.xlane.f32.xlu0 %v872
      %v885 = vpop.xlane.xlu0 %884
      %886 = vadd.xlane.f32.xlu0 %v873
      %v887 = vpop.xlane.xlu0 %886
      %888 = vadd.xlane.f32.xlu0 %v874
      %v889 = vpop.xlane.xlu0 %888
      %890 = vadd.xlane.f32.xlu0 %v875
      %v891 = vpop.xlane.xlu0 %890
      %v892 = vmul.f32 %v877, 0.03125
      %v893 = vmul.f32 %v879, 0.03125
      %v894 = vmul.f32 %v881, 0.03125
      %v895 = vmul.f32 %v883, 0.03125
      %v896 = vmul.f32 %v885, 0.03125
      %v897 = vmul.f32 %v887, 0.03125
      %v898 = vmul.f32 %v889, 0.03125
      %v899 = vmul.f32 %v891, 0.03125
      %v900 = vsub.f32 %v858, %v892
      %v901 = vsub.f32 %v859, %v893
      %v902 = vsub.f32 %v860, %v894
      %v903 = vsub.f32 %v861, %v895
      %v904 = vsub.f32 %v862, %v896
      %v905 = vsub.f32 %v863, %v897
      %v906 = vsub.f32 %v864, %v898
      %v907 = vsub.f32 %v865, %v899
      %v908 = vmul.f32 %v900, %v442
      %v909 = vmul.f32 %v901, %v442
      %v910 = vmul.f32 %v902, %v442
      %v911 = vmul.f32 %v903, %v442
      %v912 = vmul.f32 %v904, %v442
      %v913 = vmul.f32 %v905, %v442
      %v914 = vmul.f32 %v906, %v442
      %v915 = vmul.f32 %v907, %v442
      %v916 = vmul.f32 %v908, %v908
      %v917 = vmul.f32 %v909, %v909
      %v918 = vmul.f32 %v910, %v910
      %v919 = vmul.f32 %v911, %v911
      %v920 = vmul.f32 %v912, %v912
      %v921 = vmul.f32 %v913, %v913
      %v922 = vmul.f32 %v914, %v914
      %v923 = vmul.f32 %v915, %v915
      %924 = vadd.xlane.f32.xlu0 %v916
      %v925 = vpop.xlane.xlu0 %924
      %926 = vadd.xlane.f32.xlu0 %v917
      %v927 = vpop.xlane.xlu0 %926
      %928 = vadd.xlane.f32.xlu0 %v918
      %v929 = vpop.xlane.xlu0 %928
      %930 = vadd.xlane.f32.xlu0 %v919
      %v931 = vpop.xlane.xlu0 %930
      %932 = vadd.xlane.f32.xlu0 %v920
      %v933 = vpop.xlane.xlu0 %932
      %934 = vadd.xlane.f32.xlu0 %v921
      %v935 = vpop.xlane.xlu0 %934
      %936 = vadd.xlane.f32.xlu0 %v922
      %v937 = vpop.xlane.xlu0 %936
      %938 = vadd.xlane.f32.xlu0 %v923
      %v939 = vpop.xlane.xlu0 %938
      %v940 = vmul.f32 %v925, 0.03125
      %v941 = vmul.f32 %v927, 0.03125
      %v942 = vmul.f32 %v929, 0.03125
      %v943 = vmul.f32 %v931, 0.03125
      %v944 = vmul.f32 %v933, 0.03125
      %v945 = vmul.f32 %v935, 0.03125
      %v946 = vmul.f32 %v937, 0.03125
      %v947 = vmul.f32 %v939, 0.03125
      %v948 = vadd.f32 %v940, 1e-05
      %v949 = vadd.f32 %v941, 1e-05
      %v950 = vadd.f32 %v942, 1e-05
      %v951 = vadd.f32 %v943, 1e-05
      %v952 = vadd.f32 %v944, 1e-05
      %v953 = vadd.f32 %v945, 1e-05
      %v954 = vadd.f32 %v946, 1e-05
      %v955 = vadd.f32 %v947, 1e-05
      %v956 = vrsqrt.pop %v948
      %v957 = vmul.f32 %v956, %v948
      %v958 = vmul.f32 %v957, %v956
      %v959 = vmul.f32 0.5, %v958
      %v960 = vsub.f32 1.5, %v959
      %v961 = vmul.f32 %v956, %v960
      %vm962 = vweird.f32 %v948
      %vm963 = vweird.f32 %v956
      %vm964 = vmor %vm962, %vm963
      %v965 = vsel %vm964, %v956, %v961
      %v966 = vrsqrt.pop %v949
      %v967 = vmul.f32 %v966, %v949
      %v968 = vmul.f32 %v967, %v966
      %v969 = vmul.f32 0.5, %v968
      %v970 = vsub.f32 1.5, %v969
      %v971 = vmul.f32 %v966, %v970
      %vm972 = vweird.f32 %v949
      %vm973 = vweird.f32 %v966
      %vm974 = vmor %vm972, %vm973
      %v975 = vsel %vm974, %v966, %v971
      %v976 = vrsqrt.pop %v950
      %v977 = vmul.f32 %v976, %v950
      %v978 = vmul.f32 %v977, %v976
      %v979 = vmul.f32 0.5, %v978
      %v980 = vsub.f32 1.5, %v979
      %v981 = vmul.f32 %v976, %v980
      %vm982 = vweird.f32 %v950
      %vm983 = vweird.f32 %v976
      %vm984 = vmor %vm982, %vm983
      %v985 = vsel %vm984, %v976, %v981
      %v986 = vrsqrt.pop %v951
      %v987 = vmul.f32 %v986, %v951
      %v988 = vmul.f32 %v987, %v986
      %v989 = vmul.f32 0.5, %v988
      %v990 = vsub.f32 1.5, %v989
      %v991 = vmul.f32 %v986, %v990
      %vm992 = vweird.f32 %v951
      %vm993 = vweird.f32 %v986
      %vm994 = vmor %vm992, %vm993
      %v995 = vsel %vm994, %v986, %v991
      %v996 = vrsqrt.pop %v952
      %v997 = vmul.f32 %v996, %v952
      %v998 = vmul.f32 %v997, %v996
      %v999 = vmul.f32 0.5, %v998
      %v1000 = vsub.f32 1.5, %v999
      %v1001 = vmul.f32 %v996, %v1000
      %vm1002 = vweird.f32 %v952
      %vm1003 = vweird.f32 %v996
      %vm1004 = vmor %vm1002, %vm1003
      %v1005 = vsel %vm1004, %v996, %v1001
      %v1006 = vrsqrt.pop %v953
      %v1007 = vmul.f32 %v1006, %v953
      %v1008 = vmul.f32 %v1007, %v1006
      %v1009 = vmul.f32 0.5, %v1008
      %v1010 = vsub.f32 1.5, %v1009
      %v1011 = vmul.f32 %v1006, %v1010
      %vm1012 = vweird.f32 %v953
      %vm1013 = vweird.f32 %v1006
      %vm1014 = vmor %vm1012, %vm1013
      %v1015 = vsel %vm1014, %v1006, %v1011
      %v1016 = vrsqrt.pop %v954
      %v1017 = vmul.f32 %v1016, %v954
      %v1018 = vmul.f32 %v1017, %v1016
      %v1019 = vmul.f32 0.5, %v1018
      %v1020 = vsub.f32 1.5, %v1019
      %v1021 = vmul.f32 %v1016, %v1020
      %vm1022 = vweird.f32 %v954
      %vm1023 = vweird.f32 %v1016
      %vm1024 = vmor %vm1022, %vm1023
      %v1025 = vsel %vm1024, %v1016, %v1021
      %v1026 = vrsqrt.pop %v955
      %v1027 = vmul.f32 %v1026, %v955
      %v1028 = vmul.f32 %v1027, %v1026
      %v1029 = vmul.f32 0.5, %v1028
      %v1030 = vsub.f32 1.5, %v1029
      %v1031 = vmul.f32 %v1026, %v1030
      %vm1032 = vweird.f32 %v955
      %vm1033 = vweird.f32 %v1026
      %vm1034 = vmor %vm1032, %vm1033
      %v1035 = vsel %vm1034, %v1026, %v1031
      %v1036 = vmul.f32 %v908, %v965
      %v1037 = vmul.f32 %v909, %v975
      %v1038 = vmul.f32 %v910, %v985
      %v1039 = vmul.f32 %v911, %v995
      %v1040 = vmul.f32 %v912, %v1005
      %v1041 = vmul.f32 %v913, %v1015
      %v1042 = vmul.f32 %v914, %v1025
      %v1043 = vmul.f32 %v915, %v1035
      %v1045 = vperm.slane %v866, 0
      %v1047 = vmul.f32 %v1036, %v1045
      %v1048 = vmul.f32 %v1037, %v1045
      %v1049 = vmul.f32 %v1038, %v1045
      %v1050 = vmul.f32 %v1039, %v1045
      %v1051 = vmul.f32 %v1040, %v1045
      %v1052 = vmul.f32 %v1041, %v1045
      %v1053 = vmul.f32 %v1042, %v1045
      %v1054 = vmul.f32 %v1043, %v1045
      %v1056 = vperm.slane %v867, 0
      %v1058 = vadd.f32 %v1047, %v1056
      %v1059 = vadd.f32 %v1048, %v1056
      %v1060 = vadd.f32 %v1049, %v1056
      %v1061 = vadd.f32 %v1050, %v1056
      %v1062 = vadd.f32 %v1051, %v1056
      %v1063 = vadd.f32 %v1052, %v1056
      %v1064 = vadd.f32 %v1053, %v1056
      %v1065 = vadd.f32 %v1054, %v1056
      %1066 = vst [vmem:[%s437] sm:$0xff] %v1058
      %1067 = vst [vmem:[%s437 + $0x8] sm:$0xff] %v1059
      %1068 = vst [vmem:[%s437 + $0x10] sm:$0xff] %v1060
      %1069 = vst [vmem:[%s437 + $0x18] sm:$0xff] %v1061
      %1070 = vst [vmem:[%s437 + $0x20] sm:$0xff] %v1062
      %1071 = vst [vmem:[%s437 + $0x28] sm:$0xff] %v1063
      %1072 = vst [vmem:[%s437 + $0x30] sm:$0xff] %v1064
      %1073 = vst [vmem:[%s437 + $0x38] sm:$0xff] %v1065
      %s1074 = smul.u32 8, %s23
      %p1075 = scmp.lt.s32.totalorder %s1074, 15
      %s1076 = scalar_select %p1075, %s1074, 15
      %s1077 = smul.addr %s1076, 8
      %s1078 = scalar_lea.vmem %s12, %s1077
      // Predicated region
      $region69: #{rgat_layer.3} parent=67 // pred_check
        %p1079 = pneg %p303
      $region70: #{rgat_layer.3} parent=67 // pred_check_branch
        %1081 = sbr.rel (%p1079) target = $region72
      $region71: #{rgat_layer.3} parent=67 // pred_region
        %s1082 = smul.u32 8, %s23
      $region72: #{rgat_layer.3} parent=67 // pred_fallthru
        _
    $region68: #{rgat_layer.3} parent=5 // pred_fallthru
      _
    %p1083 = scmp.le.s32.totalorder 2, %s18
    // Predicated region
    $region73: #{rgat_layer.3} parent=5 // pred_check
      %p1084 = pneg %p1083
    $region74: #{rgat_layer.3} parent=5 // pred_check_branch
      %1086 = sbr.rel (%p1084) target = $region76
    $region75: #{rgat_layer.3} parent=5 // pred_region
      %s1087 = ssub.s32 %s18, 2
      // Predicated region
      $region77: #{rgat_layer.3} parent=75 // pred_check
        %p1088 = pneg %p309
      $region78: #{rgat_layer.3} parent=75 // pred_check_branch
        %1090 = sbr.rel (%p1088) target = $region80
      $region79: #{rgat_layer.3} parent=75 // pred_region
        %s1091 = smul.u32 8, %s24
        %p1092 = scmp.lt.s32.totalorder %s1091, 15
        %s1093 = scalar_select %p1092, %s1091, 15
        %s1094 = smul.addr %s1093, 8
        %s1095 = scalar_lea.vmem %s12, %s1094
      $region80: #{rgat_layer.3} parent=75 // pred_fallthru
        _
    $region76: #{rgat_layer.3} parent=5 // pred_fallthru
      _
  $region6: #{rgat_layer.3} parent=0 // loop_footer
    %s22 = sadd.s32 1, %s18
  $region7: #{rgat_layer.3} parent=0 // loop_footer_branch
    %17 = sbr.rel target = $region3
  $region8: #{rgat_layer.3} parent=0 // loop_exit
    _

// kernel: rgat_layer.2
$region0: #{rgat_layer.2}
  #allocation0 [shape = 'u32[]', space=smem, size = 0x4, offset = 0x4, fixed_abs, tag = 'smem constant byte address 0x4 - core index']
  #allocation1 [shape = 'u32[72,128]{1,0:T(1,128)}', space=vmem, size = 0x9000, scoped, tag = 'internal scratch']
  #allocation2 [shape = 'bf16[128,128]{1,0:T(8,128)(2,1)}', space=vmem, size = 0x8000, scoped, tag = 'scratch operand']
  #allocation3 [shape = 'bf16[128,128]{1,0:T(8,128)(2,1)}', space=vmem, size = 0x8000, scoped, tag = 'scratch operand']
  #allocation4 [shape = 'bf16[128,128]{1,0:T(8,128)(2,1)}', space=vmem, size = 0x8000, scoped, tag = 'scratch operand']
  #allocation5 [shape = 'f32[128,128]{1,0:T(8,128)}', space=vmem, size = 0x10000, scoped, tag = 'scratch operand']
  #allocation6 [shape = 'f32[128,128]{1,0:T(8,128)}', space=vmem, size = 0x10000, scoped, tag = 'scratch operand']
  %s0 = inlined_call_operand.vmem [shape: s32[256,1], index: 0, kind: input, shape index: {}]
  %s1 = inlined_call_operand.vmem [shape: s32[256,1], index: 1, kind: input, shape index: {}]
  %s2 = inlined_call_operand.vmem [shape: f32[256,128], index: 2, kind: input, shape index: {}]
  %s3 = inlined_call_operand.vmem [shape: f32[128,128], index: 3, kind: input, shape index: {}]
  %s4 = inlined_call_operand.vmem [shape: f32[128,128], index: 4, kind: input, shape index: {}]
  %s5 = inlined_call_operand.vmem [shape: f32[1,128], index: 5, kind: input, shape index: {}]
  %s6 = inlined_call_operand.vmem [shape: f32[128,128], index: 6, kind: input, shape index: {}]
  %s7 = inlined_call_operand.vmem [shape: f32[128,128], index: 7, kind: input, shape index: {}]
  %s8 = inlined_call_operand.vmem [shape: f32[128,128], index: 8, kind: input, shape index: {}]
  %s9 = inlined_call_operand.vmem [shape: f32[128,128], index: 9, kind: input, shape index: {}]
  %s10 = inlined_call_operand.vmem [shape: f32[128,128], index: 10, kind: output, shape index: {}]
  %s11 = sld [smem:[#allocation0]]
  $region81: #{rgat_layer.2} parent=0
    _
  %s13 = ssub.s32 1, %s11
  %s14 = scalar_select 0, %s13, %s11
  loop: start=0, step=1, limit=4
  $region2: #{rgat_layer.2} parent=0 // loop_pre_header
    _
  $region3: #{rgat_layer.2} parent=0 // loop_header
    %s16 = sphi 0, %s20
    %p17 = scmp.ge.s32.totalorder %s16, 4
    %s26 = sphi 0, %s28
    %s29 = sphi 0, %s26
    %s30 = sphi 0, %s29
    %s46 = sphi 0, %s30
    %s52 = sphi 0, %s54
    %s55 = sphi 0, %s52
    %s56 = sphi 0, %s55
    %s72 = sphi 0, %s56
    %s78 = sphi 0, %s80
    %s81 = sphi 0, %s78
    %s82 = sphi 0, %s81
    %s98 = sphi 0, %s82
    %s102 = sphi 0, %s102
    %s104 = sphi 0, %s102
    %s105 = sphi 0, %s104
    %s119 = sphi 0, %s105
    %s123 = sphi 0, %s123
    %s125 = sphi 0, %s123
    %s126 = sphi 0, %s125
    %s140 = sphi 0, %s126
    %s144 = sphi 0, %s144
    %s146 = sphi 0, %s144
    %s147 = sphi 0, %s146
    %s161 = sphi 0, %s147
    %s165 = sphi 0, %s165
    %s167 = sphi 0, %s165
    %s168 = sphi 0, %s167
    %s182 = sphi 0, %s168
    %s186 = sphi 0, %s186
    %s188 = sphi 0, %s186
    %s189 = sphi 0, %s188
    %s203 = sphi 0, %s189
    %s207 = sphi 0, %s207
    %s209 = sphi 0, %s207
    %s210 = sphi 0, %s209
    %s224 = sphi 0, %s210
    %s228 = sphi 0, %s228
    %s230 = sphi 0, %s228
    %s231 = sphi 0, %s230
    %s245 = sphi 0, %s231
    %s249 = sphi 0, %s249
    %s251 = sphi 0, %s249
    %s252 = sphi 0, %s251
    %s266 = sphi 0, %s252
  $region4: #{rgat_layer.2} parent=0 // loop_header_branch
    %19 = sbr.rel (%p17) target = $region8
  $region5: #{rgat_layer.2} parent=0 // loop_body
    %s21 = ssub.s32 %s16, 1
    %s22 = ssub.s32 %s16, 2
    %s23 = sadd.s32 %s16, 1
    %s24 = ssub.s32 %s16, %s23
    %p25 = scmp.eq.s32.totalorder %s24, 0
    %s27 = sadd.s32 %s26, 1
    %s28 = scalar_select %p25, %s26, %s27
    %p31 = pneg %p25
    %p32 = scmp.eq.s32.totalorder %s16, 1
    %p33 = por %p31, %p32
    %p34 = scmp.ne.s32.totalorder %s26, %s29
    %p35 = scmp.eq.s32.totalorder %s16, 0
    %p36 = por %p34, %p35
    %p37 = scmp.ne.s32.totalorder %s26, %s29
    %p38 = scmp.eq.s32.totalorder %s21, 1
    %p39 = por %p37, %p38
    %p40 = scmp.ne.s32.totalorder %s29, %s30
    %p41 = scmp.eq.s32.totalorder %s21, 0
    %p42 = por %p40, %p41
    %p43 = scmp.ne.s32.totalorder %s29, %s30
    %p44 = scmp.eq.s32.totalorder %s22, 1
    %p45 = por %p43, %p44
    %p47 = scmp.ne.s32.totalorder %s30, %s46
    %p48 = scmp.eq.s32.totalorder %s22, 0
    %p49 = por %p47, %p48
    %s50 = ssub.s32 %s16, %s23
    %p51 = scmp.eq.s32.totalorder %s50, 0
    %s53 = sadd.s32 %s52, 1
    %s54 = scalar_select %p51, %s52, %s53
    %p57 = pneg %p51
    %p58 = scmp.eq.s32.totalorder %s16, 1
    %p59 = por %p57, %p58
    %p60 = scmp.ne.s32.totalorder %s52, %s55
    %p61 = scmp.eq.s32.totalorder %s16, 0
    %p62 = por %p60, %p61
    %p63 = scmp.ne.s32.totalorder %s52, %s55
    %p64 = scmp.eq.s32.totalorder %s21, 1
    %p65 = por %p63, %p64
    %p66 = scmp.ne.s32.totalorder %s55, %s56
    %p67 = scmp.eq.s32.totalorder %s21, 0
    %p68 = por %p66, %p67
    %p69 = scmp.ne.s32.totalorder %s55, %s56
    %p70 = scmp.eq.s32.totalorder %s22, 1
    %p71 = por %p69, %p70
    %p73 = scmp.ne.s32.totalorder %s56, %s72
    %p74 = scmp.eq.s32.totalorder %s22, 0
    %p75 = por %p73, %p74
    %s76 = ssub.s32 %s16, %s23
    %p77 = scmp.eq.s32.totalorder %s76, 0
    %s79 = sadd.s32 %s78, 1
    %s80 = scalar_select %p77, %s78, %s79
    %p83 = pneg %p77
    %p84 = scmp.eq.s32.totalorder %s16, 1
    %p85 = por %p83, %p84
    %p86 = scmp.ne.s32.totalorder %s78, %s81
    %p87 = scmp.eq.s32.totalorder %s16, 0
    %p88 = por %p86, %p87
    %p89 = scmp.ne.s32.totalorder %s78, %s81
    %p90 = scmp.eq.s32.totalorder %s21, 1
    %p91 = por %p89, %p90
    %p92 = scmp.ne.s32.totalorder %s81, %s82
    %p93 = scmp.eq.s32.totalorder %s21, 0
    %p94 = por %p92, %p93
    %p95 = scmp.ne.s32.totalorder %s81, %s82
    %p96 = scmp.eq.s32.totalorder %s22, 1
    %p97 = por %p95, %p96
    %p99 = scmp.ne.s32.totalorder %s82, %s98
    %p100 = scmp.eq.s32.totalorder %s22, 0
    %p101 = por %p99, %p100
    %s103 = sadd.s32 %s102, 1
    %p106 = scmp.eq.s32.totalorder %s16, 1
    %p107 = scmp.ne.s32.totalorder %s102, %s104
    %p108 = scmp.eq.s32.totalorder %s16, 0
    %p109 = por %p107, %p108
    %p110 = scmp.ne.s32.totalorder %s102, %s104
    %p111 = scmp.eq.s32.totalorder %s21, 1
    %p112 = por %p110, %p111
    %p113 = scmp.ne.s32.totalorder %s104, %s105
    %p114 = scmp.eq.s32.totalorder %s21, 0
    %p115 = por %p113, %p114
    %p116 = scmp.ne.s32.totalorder %s104, %s105
    %p117 = scmp.eq.s32.totalorder %s22, 1
    %p118 = por %p116, %p117
    %p120 = scmp.ne.s32.totalorder %s105, %s119
    %p121 = scmp.eq.s32.totalorder %s22, 0
    %p122 = por %p120, %p121
    %s124 = sadd.s32 %s123, 1
    %p127 = scmp.eq.s32.totalorder %s16, 1
    %p128 = scmp.ne.s32.totalorder %s123, %s125
    %p129 = scmp.eq.s32.totalorder %s16, 0
    %p130 = por %p128, %p129
    %p131 = scmp.ne.s32.totalorder %s123, %s125
    %p132 = scmp.eq.s32.totalorder %s21, 1
    %p133 = por %p131, %p132
    %p134 = scmp.ne.s32.totalorder %s125, %s126
    %p135 = scmp.eq.s32.totalorder %s21, 0
    %p136 = por %p134, %p135
    %p137 = scmp.ne.s32.totalorder %s125, %s126
    %p138 = scmp.eq.s32.totalorder %s22, 1
    %p139 = por %p137, %p138
    %p141 = scmp.ne.s32.totalorder %s126, %s140
    %p142 = scmp.eq.s32.totalorder %s22, 0
    %p143 = por %p141, %p142
    %s145 = sadd.s32 %s144, 1
    %p148 = scmp.eq.s32.totalorder %s16, 1
    %p149 = scmp.ne.s32.totalorder %s144, %s146
    %p150 = scmp.eq.s32.totalorder %s16, 0
    %p151 = por %p149, %p150
    %p152 = scmp.ne.s32.totalorder %s144, %s146
    %p153 = scmp.eq.s32.totalorder %s21, 1
    %p154 = por %p152, %p153
    %p155 = scmp.ne.s32.totalorder %s146, %s147
    %p156 = scmp.eq.s32.totalorder %s21, 0
    %p157 = por %p155, %p156
    %p158 = scmp.ne.s32.totalorder %s146, %s147
    %p159 = scmp.eq.s32.totalorder %s22, 1
    %p160 = por %p158, %p159
    %p162 = scmp.ne.s32.totalorder %s147, %s161
    %p163 = scmp.eq.s32.totalorder %s22, 0
    %p164 = por %p162, %p163
    %s166 = sadd.s32 %s165, 1
    %p169 = scmp.eq.s32.totalorder %s16, 1
    %p170 = scmp.ne.s32.totalorder %s165, %s167
    %p171 = scmp.eq.s32.totalorder %s16, 0
    %p172 = por %p170, %p171
    %p173 = scmp.ne.s32.totalorder %s165, %s167
    %p174 = scmp.eq.s32.totalorder %s21, 1
    %p175 = por %p173, %p174
    %p176 = scmp.ne.s32.totalorder %s167, %s168
    %p177 = scmp.eq.s32.totalorder %s21, 0
    %p178 = por %p176, %p177
    %p179 = scmp.ne.s32.totalorder %s167, %s168
    %p180 = scmp.eq.s32.totalorder %s22, 1
    %p181 = por %p179, %p180
    %p183 = scmp.ne.s32.totalorder %s168, %s182
    %p184 = scmp.eq.s32.totalorder %s22, 0
    %p185 = por %p183, %p184
    %s187 = sadd.s32 %s186, 1
    %p190 = scmp.eq.s32.totalorder %s16, 1
    %p191 = scmp.ne.s32.totalorder %s186, %s188
    %p192 = scmp.eq.s32.totalorder %s16, 0
    %p193 = por %p191, %p192
    %p194 = scmp.ne.s32.totalorder %s186, %s188
    %p195 = scmp.eq.s32.totalorder %s21, 1
    %p196 = por %p194, %p195
    %p197 = scmp.ne.s32.totalorder %s188, %s189
    %p198 = scmp.eq.s32.totalorder %s21, 0
    %p199 = por %p197, %p198
    %p200 = scmp.ne.s32.totalorder %s188, %s189
    %p201 = scmp.eq.s32.totalorder %s22, 1
    %p202 = por %p200, %p201
    %p204 = scmp.ne.s32.totalorder %s189, %s203
    %p205 = scmp.eq.s32.totalorder %s22, 0
    %p206 = por %p204, %p205
    %s208 = sadd.s32 %s207, 1
    %p211 = scmp.eq.s32.totalorder %s16, 1
    %p212 = scmp.ne.s32.totalorder %s207, %s209
    %p213 = scmp.eq.s32.totalorder %s16, 0
    %p214 = por %p212, %p213
    %p215 = scmp.ne.s32.totalorder %s207, %s209
    %p216 = scmp.eq.s32.totalorder %s21, 1
    %p217 = por %p215, %p216
    %p218 = scmp.ne.s32.totalorder %s209, %s210
    %p219 = scmp.eq.s32.totalorder %s21, 0
    %p220 = por %p218, %p219
    %p221 = scmp.ne.s32.totalorder %s209, %s210
    %p222 = scmp.eq.s32.totalorder %s22, 1
    %p223 = por %p221, %p222
    %p225 = scmp.ne.s32.totalorder %s210, %s224
    %p226 = scmp.eq.s32.totalorder %s22, 0
    %p227 = por %p225, %p226
    %s229 = sadd.s32 %s228, 1
    %p232 = scmp.eq.s32.totalorder %s16, 1
    %p233 = scmp.ne.s32.totalorder %s228, %s230
    %p234 = scmp.eq.s32.totalorder %s16, 0
    %p235 = por %p233, %p234
    %p236 = scmp.ne.s32.totalorder %s228, %s230
    %p237 = scmp.eq.s32.totalorder %s21, 1
    %p238 = por %p236, %p237
    %p239 = scmp.ne.s32.totalorder %s230, %s231
    %p240 = scmp.eq.s32.totalorder %s21, 0
    %p241 = por %p239, %p240
    %p242 = scmp.ne.s32.totalorder %s230, %s231
    %p243 = scmp.eq.s32.totalorder %s22, 1
    %p244 = por %p242, %p243
    %p246 = scmp.ne.s32.totalorder %s231, %s245
    %p247 = scmp.eq.s32.totalorder %s22, 0
    %p248 = por %p246, %p247
    %s250 = sadd.s32 %s249, 1
    %p253 = scmp.eq.s32.totalorder %s16, 1
    %p254 = scmp.ne.s32.totalorder %s249, %s251
    %p255 = scmp.eq.s32.totalorder %s16, 0
    %p256 = por %p254, %p255
    %p257 = scmp.ne.s32.totalorder %s249, %s251
    %p258 = scmp.eq.s32.totalorder %s21, 1
    %p259 = por %p257, %p258
    %p260 = scmp.ne.s32.totalorder %s251, %s252
    %p261 = scmp.eq.s32.totalorder %s21, 0
    %p262 = por %p260, %p261
    %p263 = scmp.ne.s32.totalorder %s251, %s252
    %p264 = scmp.eq.s32.totalorder %s22, 1
    %p265 = por %p263, %p264
    %p267 = scmp.ne.s32.totalorder %s252, %s266
    %p268 = scmp.eq.s32.totalorder %s22, 0
    %p269 = por %p267, %p268
    %p270 = scmp.le.s32.totalorder 1, %s16
    %p271 = scmp.lt.s32.totalorder %s16, 3
    %p272 = pnand %p270, %p271
    %p273 = pneg %p272
    // Predicated region
    $region9: #{rgat_layer.2} parent=5 // pred_check
      _
    $region10: #{rgat_layer.2} parent=5 // pred_check_branch
      %275 = sbr.rel (%p272) target = $region12
    $region11: #{rgat_layer.2} parent=5 // pred_region
      %s276 = ssub.s32 %s16, 1
      // Predicated region
      $region13: #{rgat_layer.2} parent=11 // pred_check
        %p277 = pneg %p115
      $region14: #{rgat_layer.2} parent=11 // pred_check_branch
        %279 = sbr.rel (%p277) target = $region16
      $region15: #{rgat_layer.2} parent=11 // pred_region
        _
      $region16: #{rgat_layer.2} parent=11 // pred_fallthru
        _
      // Predicated region
      $region17: #{rgat_layer.2} parent=11 // pred_check
        %p280 = pneg %p136
      $region18: #{rgat_layer.2} parent=11 // pred_check_branch
        %282 = sbr.rel (%p280) target = $region20
      $region19: #{rgat_layer.2} parent=11 // pred_region
        _
      $region20: #{rgat_layer.2} parent=11 // pred_fallthru
        _
      // Predicated region
      $region21: #{rgat_layer.2} parent=11 // pred_check
        %p283 = pneg %p157
      $region22: #{rgat_layer.2} parent=11 // pred_check_branch
        %285 = sbr.rel (%p283) target = $region24
      $region23: #{rgat_layer.2} parent=11 // pred_region
        _
      $region24: #{rgat_layer.2} parent=11 // pred_fallthru
        _
      // Predicated region
      $region25: #{rgat_layer.2} parent=11 // pred_check
        %p286 = pneg %p178
      $region26: #{rgat_layer.2} parent=11 // pred_check_branch
        %288 = sbr.rel (%p286) target = $region28
      $region27: #{rgat_layer.2} parent=11 // pred_region
        _
      $region28: #{rgat_layer.2} parent=11 // pred_fallthru
        _
      // Predicated region
      $region29: #{rgat_layer.2} parent=11 // pred_check
        %p289 = pneg %p199
      $region30: #{rgat_layer.2} parent=11 // pred_check_branch
        %291 = sbr.rel (%p289) target = $region32
      $region31: #{rgat_layer.2} parent=11 // pred_region
        _
      $region32: #{rgat_layer.2} parent=11 // pred_fallthru
        _
      // Predicated region
      $region33: #{rgat_layer.2} parent=11 // pred_check
        %p292 = pneg %p220
      $region34: #{rgat_layer.2} parent=11 // pred_check_branch
        %294 = sbr.rel (%p292) target = $region36
      $region35: #{rgat_layer.2} parent=11 // pred_region
        _
      $region36: #{rgat_layer.2} parent=11 // pred_fallthru
        _
      // Predicated region
      $region37: #{rgat_layer.2} parent=11 // pred_check
        %p295 = pneg %p241
      $region38: #{rgat_layer.2} parent=11 // pred_check_branch
        %297 = sbr.rel (%p295) target = $region40
      $region39: #{rgat_layer.2} parent=11 // pred_region
        _
      $region40: #{rgat_layer.2} parent=11 // pred_fallthru
        _
    $region12: #{rgat_layer.2} parent=5 // pred_fallthru
      _
    %p298 = scmp.lt.s32.totalorder %s16, 2
    // Predicated region
    $region41: #{rgat_layer.2} parent=5 // pred_check
      %p299 = pneg %p298
    $region42: #{rgat_layer.2} parent=5 // pred_check_branch
      %301 = sbr.rel (%p299) target = $region44
    $region43: #{rgat_layer.2} parent=5 // pred_region
      // Predicated region
      $region45: #{rgat_layer.2} parent=43 // pred_check
        %p302 = pneg %p36
      $region46: #{rgat_layer.2} parent=43 // pred_check_branch
        %304 = sbr.rel (%p302) target = $region48
      $region47: #{rgat_layer.2} parent=43 // pred_region
        %s305 = smul.u32 16, %s16
        %p306 = scmp.lt.s32.totalorder %s305, 31
        %s307 = scalar_select %p306, %s305, 31
        %s308 = smul.addr %s307, 8
        %s309 = scalar_lea.vmem %s0, %s308
        %s310 = smul.u32 16, %s16
      $region48: #{rgat_layer.2} parent=43 // pred_fallthru
        _
      // Predicated region
      $region49: #{rgat_layer.2} parent=43 // pred_check
        %p311 = pneg %p62
      $region50: #{rgat_layer.2} parent=43 // pred_check_branch
        %313 = sbr.rel (%p311) target = $region52
      $region51: #{rgat_layer.2} parent=43 // pred_region
        %s314 = smul.u32 16, %s16
        %p315 = scmp.lt.s32.totalorder %s314, 31
        %s316 = scalar_select %p315, %s314, 31
        %s317 = smul.addr %s316, 8
        %s318 = scalar_lea.vmem %s1, %s317
        %s319 = smul.u32 16, %s16
      $region52: #{rgat_layer.2} parent=43 // pred_fallthru
        _
      // Predicated region
      $region53: #{rgat_layer.2} parent=43 // pred_check
        %p320 = pneg %p88
      $region54: #{rgat_layer.2} parent=43 // pred_check_branch
        %322 = sbr.rel (%p320) target = $region56
      $region55: #{rgat_layer.2} parent=43 // pred_region
        %s323 = smul.u32 16, %s16
        %p324 = scmp.lt.s32.totalorder %s323, 31
        %s325 = scalar_select %p324, %s323, 31
        %s326 = smul.addr %s325, 8
        %s327 = scalar_lea.vmem %s2, %s326
        %s328 = smul.u32 16, %s16
      $region56: #{rgat_layer.2} parent=43 // pred_fallthru
        _
    $region44: #{rgat_layer.2} parent=5 // pred_fallthru
      _
    %p329 = scmp.le.s32.totalorder 1, %s16
    %p330 = scmp.lt.s32.totalorder %s16, 3
    %p331 = pnand %p329, %p330
    %p332 = pneg %p331
    // Predicated region
    $region57: #{rgat_layer.2} parent=5 // pred_check
      _
    $region58: #{rgat_layer.2} parent=5 // pred_check_branch
      %334 = sbr.rel (%p331) target = $region60
    $region59: #{rgat_layer.2} parent=5 // pred_region
      %s335 = ssub.s32 %s16, 1
      %s336 = smul.u32 16, %s21
      %p337 = scmp.lt.s32.totalorder %s336, 31
      %s338 = scalar_select %p337, %s336, 31
      %s339 = smul.addr %s338, 8
      %s340 = scalar_lea.vmem %s0, %s339
      %p341 = pneg %p42
      %p342 = pneg %p39
      %s343 = smul.u32 16, %s21
      %p344 = scmp.lt.s32.totalorder %s343, 31
      %s345 = scalar_select %p344, %s343, 31
      %s346 = smul.addr %s345, 8
      %s347 = scalar_lea.vmem %s1, %s346
      %p348 = pneg %p68
      %p349 = pneg %p65
      %s350 = smul.u32 16, %s21
      %p351 = scmp.lt.s32.totalorder %s350, 31
      %s352 = scalar_select %p351, %s350, 31
      %s353 = smul.addr %s352, 8
      %s354 = scalar_lea.vmem %s2, %s353
      %p355 = pneg %p94
      %p356 = pneg %p91
      %p357 = pneg %p115
      %p358 = pneg %p112
      %p359 = pneg %p136
      %p360 = pneg %p133
      %p361 = pneg %p157
      %p362 = pneg %p154
      %p363 = pneg %p178
      %p364 = pneg %p175
      %p365 = pneg %p199
      %p366 = pneg %p196
      %p367 = pneg %p220
      %p368 = pneg %p217
      %p369 = pneg %p241
      %p370 = pneg %p238
      %p371 = pneg %p262
      %p372 = pneg %p259
      %s373 = smul.u32 16, %s21
      %p374 = scmp.lt.s32.totalorder %s373, 31
      %s375 = scalar_select %p374, %s373, 31
      %s376 = smul.addr %s375, 8
      %s377 = scalar_lea.vmem %s0, %s376
      %s378 = smul.u32 16, %s21
      %s379 = smul.u32 16, %s21
      %p380 = scmp.lt.s32.totalorder %s379, 31
      %s381 = scalar_select %p380, %s379, 31
      %s382 = smul.addr %s381, 8
      %s383 = scalar_lea.vmem %s1, %s382
      %s384 = smul.u32 16, %s21
      %s385 = smul.u32 16, %s21
      %p386 = scmp.lt.s32.totalorder %s385, 31
      %s387 = scalar_select %p386, %s385, 31
      %s388 = smul.addr %s387, 8
      %s389 = scalar_lea.vmem %s2, %s388
      %s390 = smul.u32 16, %s21
      %p391 = scmp.eq.s32.totalorder %s21, 0
      // Predicated region
      $region61: #{rgat_layer.2} parent=59 // pred_check
        %p392 = pneg %p391
      $region62: #{rgat_layer.2} parent=59 // pred_check_branch
        %394 = sbr.rel (%p392) target = $region64
      $region63: #{rgat_layer.2} parent=59 // pred_region
        %v395 = vld [vmem:[%s3] sm:$0xff]
        %v396 = vld [vmem:[%s3 + $0x8] sm:$0xff]
        %v397 = vld [vmem:[%s3 + $0x10] sm:$0xff]
        %v398 = vld [vmem:[%s3 + $0x18] sm:$0xff]
        %v399 = vld [vmem:[%s3 + $0x20] sm:$0xff]
        %v400 = vld [vmem:[%s3 + $0x28] sm:$0xff]
        %v401 = vld [vmem:[%s3 + $0x30] sm:$0xff]
        %v402 = vld [vmem:[%s3 + $0x38] sm:$0xff]
        %v403 = vld [vmem:[%s3 + $0x40] sm:$0xff]
        %v404 = vld [vmem:[%s3 + $0x48] sm:$0xff]
        %v405 = vld [vmem:[%s3 + $0x50] sm:$0xff]
        %v406 = vld [vmem:[%s3 + $0x58] sm:$0xff]
        %v407 = vld [vmem:[%s3 + $0x60] sm:$0xff]
        %v408 = vld [vmem:[%s3 + $0x68] sm:$0xff]
        %v409 = vld [vmem:[%s3 + $0x70] sm:$0xff]
        %v410 = vld [vmem:[%s3 + $0x78] sm:$0xff]
        %v411 = vpack.c.bf16 %v396, %v395
        %v412 = vpack.c.bf16 %v398, %v397
        %v413 = vpack.c.bf16 %v400, %v399
        %v414 = vpack.c.bf16 %v402, %v401
        %v415 = vpack.c.bf16 %v404, %v403
        %v416 = vpack.c.bf16 %v406, %v405
        %v417 = vpack.c.bf16 %v408, %v407
        %v418 = vpack.c.bf16 %v410, %v409
        %v419 = vld [vmem:[%s4] sm:$0xff]
        %v420 = vld [vmem:[%s4 + $0x8] sm:$0xff]
        %v421 = vld [vmem:[%s4 + $0x10] sm:$0xff]
        %v422 = vld [vmem:[%s4 + $0x18] sm:$0xff]
        %v423 = vld [vmem:[%s4 + $0x20] sm:$0xff]
        %v424 = vld [vmem:[%s4 + $0x28] sm:$0xff]
        %v425 = vld [vmem:[%s4 + $0x30] sm:$0xff]
        %v426 = vld [vmem:[%s4 + $0x38] sm:$0xff]
        %v427 = vld [vmem:[%s4 + $0x40] sm:$0xff]
        %v428 = vld [vmem:[%s4 + $0x48] sm:$0xff]
        %v429 = vld [vmem:[%s4 + $0x50] sm:$0xff]
        %v430 = vld [vmem:[%s4 + $0x58] sm:$0xff]
        %v431 = vld [vmem:[%s4 + $0x60] sm:$0xff]
        %v432 = vld [vmem:[%s4 + $0x68] sm:$0xff]
        %v433 = vld [vmem:[%s4 + $0x70] sm:$0xff]
        %v434 = vld [vmem:[%s4 + $0x78] sm:$0xff]
        %v435 = vpack.c.bf16 %v420, %v419
        %v436 = vpack.c.bf16 %v422, %v421
        %v437 = vpack.c.bf16 %v424, %v423
        %v438 = vpack.c.bf16 %v426, %v425
        %v439 = vpack.c.bf16 %v428, %v427
        %v440 = vpack.c.bf16 %v430, %v429
        %v441 = vpack.c.bf16 %v432, %v431
        %v442 = vpack.c.bf16 %v434, %v433
        %v443 = vld [vmem:[%s5] sm:$0x1]
        %v445 = vperm.slane %v443, 0
        %447 = vmatpush.bf16.msra.mxu0 %v442
        %448 = vmatpush.bf16.msra.mxu0 %v441
        %449 = vmatpush.bf16.msra.mxu0 %v440
        %450 = vmatpush.bf16.msra.mxu0 %v439
        %451 = vmatpush.bf16.msra.mxu0 %v438
        %452 = vmatpush.bf16.msra.mxu0 %v437
        %453 = vmatpush.bf16.msra.mxu0 %v436
        %454 = vmatpush.bf16.msra.mxu0 %v435
        %455 = vmatmul.bf16.gmra.mxu0 %v411
        %v456 = vpop.f32.mrf.mxu0
        %v457 = vadd.f32 %v445, %v456
        %v458 = vpop.f32.mrf.mxu0
        %v459 = vadd.f32 %v445, %v458
        %460 = vmatmul.bf16.gmra.mxu0 %v412
        %v461 = vpop.f32.mrf.mxu0
        %v462 = vadd.f32 %v445, %v461
        %v463 = vpop.f32.mrf.mxu0
        %v464 = vadd.f32 %v445, %v463
        %465 = vmatmul.bf16.gmra.mxu0 %v413
        %v466 = vpop.f32.mrf.mxu0
        %v467 = vadd.f32 %v445, %v466
        %v468 = vpop.f32.mrf.mxu0
        %v469 = vadd.f32 %v445, %v468
        %470 = vmatmul.bf16.gmra.mxu0 %v414
        %v471 = vpop.f32.mrf.mxu0
        %v472 = vadd.f32 %v445, %v471
        %v473 = vpop.f32.mrf.mxu0
        %v474 = vadd.f32 %v445, %v473
        %475 = vmatmul.bf16.gmra.mxu0 %v415
        %v476 = vpop.f32.mrf.mxu0
        %v477 = vadd.f32 %v445, %v476
        %v478 = vpop.f32.mrf.mxu0
        %v479 = vadd.f32 %v445, %v478
        %480 = vmatmul.bf16.gmra.mxu0 %v416
        %v481 = vpop.f32.mrf.mxu0
        %v482 = vadd.f32 %v445, %v481
        %v483 = vpop.f32.mrf.mxu0
        %v484 = vadd.f32 %v445, %v483
        %485 = vmatmul.bf16.gmra.mxu0 %v417
        %v486 = vpop.f32.mrf.mxu0
        %v487 = vadd.f32 %v445, %v486
        %v488 = vpop.f32.mrf.mxu0
        %v489 = vadd.f32 %v445, %v488
        %490 = vmatmul.bf16.gmra.mxu0 %v418
        %v491 = vpop.f32.mrf.mxu0
        %v492 = vadd.f32 %v445, %v491
        %v493 = vpop.f32.mrf.mxu0
        %v494 = vadd.f32 %v445, %v493
        %495 = vdwg.mxu0
        %v496 = vld [vmem:[%s6] sm:$0xff]
        %v497 = vld [vmem:[%s6 + $0x8] sm:$0xff]
        %v498 = vld [vmem:[%s6 + $0x10] sm:$0xff]
        %v499 = vld [vmem:[%s6 + $0x18] sm:$0xff]
        %v500 = vld [vmem:[%s6 + $0x20] sm:$0xff]
        %v501 = vld [vmem:[%s6 + $0x28] sm:$0xff]
        %v502 = vld [vmem:[%s6 + $0x30] sm:$0xff]
        %v503 = vld [vmem:[%s6 + $0x38] sm:$0xff]
        %v504 = vld [vmem:[%s6 + $0x40] sm:$0xff]
        %v505 = vld [vmem:[%s6 + $0x48] sm:$0xff]
        %v506 = vld [vmem:[%s6 + $0x50] sm:$0xff]
        %v507 = vld [vmem:[%s6 + $0x58] sm:$0xff]
        %v508 = vld [vmem:[%s6 + $0x60] sm:$0xff]
        %v509 = vld [vmem:[%s6 + $0x68] sm:$0xff]
        %v510 = vld [vmem:[%s6 + $0x70] sm:$0xff]
        %v511 = vld [vmem:[%s6 + $0x78] sm:$0xff]
        %v512 = vpack.c.bf16 %v497, %v496
        %v513 = vpack.c.bf16 %v499, %v498
        %v514 = vpack.c.bf16 %v501, %v500
        %v515 = vpack.c.bf16 %v503, %v502
        %v516 = vpack.c.bf16 %v505, %v504
        %v517 = vpack.c.bf16 %v507, %v506
        %v518 = vpack.c.bf16 %v509, %v508
        %v519 = vpack.c.bf16 %v511, %v510
        %520 = vmatpush.bf16.msra.mxu0 %v519
        %521 = vmatpush.bf16.msra.mxu0 %v518
        %522 = vmatpush.bf16.msra.mxu0 %v517
        %523 = vmatpush.bf16.msra.mxu0 %v516
        %524 = vmatpush.bf16.msra.mxu0 %v515
        %525 = vmatpush.bf16.msra.mxu0 %v514
        %526 = vmatpush.bf16.msra.mxu0 %v513
        %527 = vmatpush.bf16.msra.mxu0 %v512
        %528 = vmatmul.bf16.gmra.mxu0 %v411
        %v529 = vpop.f32.mrf.mxu0
        %v530 = vadd.f32 0.0, %v529
        %v531 = vpop.f32.mrf.mxu0
        %v532 = vadd.f32 0.0, %v531
        %533 = vmatmul.bf16.gmra.mxu0 %v412
        %v534 = vpop.f32.mrf.mxu0
        %v535 = vadd.f32 0.0, %v534
        %v536 = vpop.f32.mrf.mxu0
        %v537 = vadd.f32 0.0, %v536
        %538 = vmatmul.bf16.gmra.mxu0 %v413
        %v539 = vpop.f32.mrf.mxu0
        %v540 = vadd.f32 0.0, %v539
        %v541 = vpop.f32.mrf.mxu0
        %v542 = vadd.f32 0.0, %v541
        %543 = vmatmul.bf16.gmra.mxu0 %v414
        %v544 = vpop.f32.mrf.mxu0
        %v545 = vadd.f32 0.0, %v544
        %v546 = vpop.f32.mrf.mxu0
        %v547 = vadd.f32 0.0, %v546
        %548 = vmatmul.bf16.gmra.mxu0 %v415
        %v549 = vpop.f32.mrf.mxu0
        %v550 = vadd.f32 0.0, %v549
        %v551 = vpop.f32.mrf.mxu0
        %v552 = vadd.f32 0.0, %v551
        %553 = vmatmul.bf16.gmra.mxu0 %v416
        %v554 = vpop.f32.mrf.mxu0
        %v555 = vadd.f32 0.0, %v554
        %v556 = vpop.f32.mrf.mxu0
        %v557 = vadd.f32 0.0, %v556
        %558 = vmatmul.bf16.gmra.mxu0 %v417
        %v559 = vpop.f32.mrf.mxu0
        %v560 = vadd.f32 0.0, %v559
        %v561 = vpop.f32.mrf.mxu0
        %v562 = vadd.f32 0.0, %v561
        %563 = vmatmul.bf16.gmra.mxu0 %v418
        %v564 = vpop.f32.mrf.mxu0
        %v565 = vadd.f32 0.0, %v564
        %v566 = vpop.f32.mrf.mxu0
        %v567 = vadd.f32 0.0, %v566
        %568 = vdwg.mxu0
        %v569 = vld [vmem:[%s7] sm:$0xff]
        %v570 = vld [vmem:[%s7 + $0x8] sm:$0xff]
        %v571 = vld [vmem:[%s7 + $0x10] sm:$0xff]
        %v572 = vld [vmem:[%s7 + $0x18] sm:$0xff]
        %v573 = vld [vmem:[%s7 + $0x20] sm:$0xff]
        %v574 = vld [vmem:[%s7 + $0x28] sm:$0xff]
        %v575 = vld [vmem:[%s7 + $0x30] sm:$0xff]
        %v576 = vld [vmem:[%s7 + $0x38] sm:$0xff]
        %v577 = vld [vmem:[%s7 + $0x40] sm:$0xff]
        %v578 = vld [vmem:[%s7 + $0x48] sm:$0xff]
        %v579 = vld [vmem:[%s7 + $0x50] sm:$0xff]
        %v580 = vld [vmem:[%s7 + $0x58] sm:$0xff]
        %v581 = vld [vmem:[%s7 + $0x60] sm:$0xff]
        %v582 = vld [vmem:[%s7 + $0x68] sm:$0xff]
        %v583 = vld [vmem:[%s7 + $0x70] sm:$0xff]
        %v584 = vld [vmem:[%s7 + $0x78] sm:$0xff]
        %v585 = vpack.c.bf16 %v570, %v569
        %v586 = vpack.c.bf16 %v572, %v571
        %v587 = vpack.c.bf16 %v574, %v573
        %v588 = vpack.c.bf16 %v576, %v575
        %v589 = vpack.c.bf16 %v578, %v577
        %v590 = vpack.c.bf16 %v580, %v579
        %v591 = vpack.c.bf16 %v582, %v581
        %v592 = vpack.c.bf16 %v584, %v583
        %593 = vmatpush.bf16.msra.mxu0 %v592
        %594 = vmatpush.bf16.msra.mxu0 %v591
        %595 = vmatpush.bf16.msra.mxu0 %v590
        %596 = vmatpush.bf16.msra.mxu0 %v589
        %597 = vmatpush.bf16.msra.mxu0 %v588
        %598 = vmatpush.bf16.msra.mxu0 %v587
        %599 = vmatpush.bf16.msra.mxu0 %v586
        %600 = vmatpush.bf16.msra.mxu0 %v585
        %601 = vmatmul.bf16.gmra.mxu0 %v411
        %v602 = vpop.f32.mrf.mxu0
        %v603 = vadd.f32 0.0, %v602
        %v604 = vpop.f32.mrf.mxu0
        %v605 = vadd.f32 0.0, %v604
        %606 = vmatmul.bf16.gmra.mxu0 %v412
        %v607 = vpop.f32.mrf.mxu0
        %v608 = vadd.f32 0.0, %v607
        %v609 = vpop.f32.mrf.mxu0
        %v610 = vadd.f32 0.0, %v609
        %611 = vmatmul.bf16.gmra.mxu0 %v413
        %v612 = vpop.f32.mrf.mxu0
        %v613 = vadd.f32 0.0, %v612
        %v614 = vpop.f32.mrf.mxu0
        %v615 = vadd.f32 0.0, %v614
        %616 = vmatmul.bf16.gmra.mxu0 %v414
        %v617 = vpop.f32.mrf.mxu0
        %v618 = vadd.f32 0.0, %v617
        %v619 = vpop.f32.mrf.mxu0
        %v620 = vadd.f32 0.0, %v619
        %621 = vmatmul.bf16.gmra.mxu0 %v415
        %v622 = vpop.f32.mrf.mxu0
        %v623 = vadd.f32 0.0, %v622
        %v624 = vpop.f32.mrf.mxu0
        %v625 = vadd.f32 0.0, %v624
        %626 = vmatmul.bf16.gmra.mxu0 %v416
        %v627 = vpop.f32.mrf.mxu0
        %v628 = vadd.f32 0.0, %v627
        %v629 = vpop.f32.mrf.mxu0
        %v630 = vadd.f32 0.0, %v629
        %631 = vmatmul.bf16.gmra.mxu0 %v417
        %v632 = vpop.f32.mrf.mxu0
        %v633 = vadd.f32 0.0, %v632
        %v634 = vpop.f32.mrf.mxu0
        %v635 = vadd.f32 0.0, %v634
        %636 = vmatmul.bf16.gmra.mxu0 %v418
        %v637 = vpop.f32.mrf.mxu0
        %v638 = vadd.f32 0.0, %v637
        %v639 = vpop.f32.mrf.mxu0
        %v640 = vadd.f32 0.0, %v639
        %641 = vdwg.mxu0
        %v642 = vpack.c.bf16 %v457, %v457
        %v643 = vpack.c.bf16 %v459, %v459
        %v644 = vpack.c.bf16 %v462, %v462
        %v645 = vpack.c.bf16 %v464, %v464
        %v646 = vpack.c.bf16 %v467, %v467
        %v647 = vpack.c.bf16 %v469, %v469
        %v648 = vpack.c.bf16 %v472, %v472
        %v649 = vpack.c.bf16 %v474, %v474
        %v650 = vpack.c.bf16 %v477, %v477
        %v651 = vpack.c.bf16 %v479, %v479
        %v652 = vpack.c.bf16 %v482, %v482
        %v653 = vpack.c.bf16 %v484, %v484
        %v654 = vpack.c.bf16 %v487, %v487
        %v655 = vpack.c.bf16 %v489, %v489
        %v656 = vpack.c.bf16 %v492, %v492
        %v657 = vpack.c.bf16 %v494, %v494
        %658 = vst [vmem:[#allocation2] sm:$0xf] %v642
        %659 = vst [vmem:[#allocation2 + $0x4] sm:$0xf] %v643
        %660 = vst [vmem:[#allocation2 + $0x8] sm:$0xf] %v644
        %661 = vst [vmem:[#allocation2 + $0xc] sm:$0xf] %v645
        %662 = vst [vmem:[#allocation2 + $0x10] sm:$0xf] %v646
        %663 = vst [vmem:[#allocation2 + $0x14] sm:$0xf] %v647
        %664 = vst [vmem:[#allocation2 + $0x18] sm:$0xf] %v648
        %665 = vst [vmem:[#allocation2 + $0x1c] sm:$0xf] %v649
        %666 = vst [vmem:[#allocation2 + $0x20] sm:$0xf] %v650
        %667 = vst [vmem:[#allocation2 + $0x24] sm:$0xf] %v651
        %668 = vst [vmem:[#allocation2 + $0x28] sm:$0xf] %v652
        %669 = vst [vmem:[#allocation2 + $0x2c] sm:$0xf] %v653
        %670 = vst [vmem:[#allocation2 + $0x30] sm:$0xf] %v654
        %671 = vst [vmem:[#allocation2 + $0x34] sm:$0xf] %v655
        %672 = vst [vmem:[#allocation2 + $0x38] sm:$0xf] %v656
        %673 = vst [vmem:[#allocation2 + $0x3c] sm:$0xf] %v657
        %v674 = vpack.c.bf16 %v530, %v530
        %v675 = vpack.c.bf16 %v532, %v532
        %v676 = vpack.c.bf16 %v535, %v535
        %v677 = vpack.c.bf16 %v537, %v537
        %v678 = vpack.c.bf16 %v540, %v540
        %v679 = vpack.c.bf16 %v542, %v542
        %v680 = vpack.c.bf16 %v545, %v545
        %v681 = vpack.c.bf16 %v547, %v547
        %v682 = vpack.c.bf16 %v550, %v550
        %v683 = vpack.c.bf16 %v552, %v552
        %v684 = vpack.c.bf16 %v555, %v555
        %v685 = vpack.c.bf16 %v557, %v557
        %v686 = vpack.c.bf16 %v560, %v560
        %v687 = vpack.c.bf16 %v562, %v562
        %v688 = vpack.c.bf16 %v565, %v565
        %v689 = vpack.c.bf16 %v567, %v567
        %690 = vst [vmem:[#allocation3] sm:$0xf] %v674
        %691 = vst [vmem:[#allocation3 + $0x4] sm:$0xf] %v675
        %692 = vst [vmem:[#allocation3 + $0x8] sm:$0xf] %v676
        %693 = vst [vmem:[#allocation3 + $0xc] sm:$0xf] %v677
        %694 = vst [vmem:[#allocation3 + $0x10] sm:$0xf] %v678
        %695 = vst [vmem:[#allocation3 + $0x14] sm:$0xf] %v679
        %696 = vst [vmem:[#allocation3 + $0x18] sm:$0xf] %v680
        %697 = vst [vmem:[#allocation3 + $0x1c] sm:$0xf] %v681
        %698 = vst [vmem:[#allocation3 + $0x20] sm:$0xf] %v682
        %699 = vst [vmem:[#allocation3 + $0x24] sm:$0xf] %v683
        %700 = vst [vmem:[#allocation3 + $0x28] sm:$0xf] %v684
        %701 = vst [vmem:[#allocation3 + $0x2c] sm:$0xf] %v685
        %702 = vst [vmem:[#allocation3 + $0x30] sm:$0xf] %v686
        %703 = vst [vmem:[#allocation3 + $0x34] sm:$0xf] %v687
        %704 = vst [vmem:[#allocation3 + $0x38] sm:$0xf] %v688
        %705 = vst [vmem:[#allocation3 + $0x3c] sm:$0xf] %v689
        %v706 = vpack.c.bf16 %v603, %v603
        %v707 = vpack.c.bf16 %v605, %v605
        %v708 = vpack.c.bf16 %v608, %v608
        %v709 = vpack.c.bf16 %v610, %v610
        %v710 = vpack.c.bf16 %v613, %v613
        %v711 = vpack.c.bf16 %v615, %v615
        %v712 = vpack.c.bf16 %v618, %v618
        %v713 = vpack.c.bf16 %v620, %v620
        %v714 = vpack.c.bf16 %v623, %v623
        %v715 = vpack.c.bf16 %v625, %v625
        %v716 = vpack.c.bf16 %v628, %v628
        %v717 = vpack.c.bf16 %v630, %v630
        %v718 = vpack.c.bf16 %v633, %v633
        %v719 = vpack.c.bf16 %v635, %v635
        %v720 = vpack.c.bf16 %v638, %v638
        %v721 = vpack.c.bf16 %v640, %v640
        %722 = vst [vmem:[#allocation4] sm:$0xf] %v706
        %723 = vst [vmem:[#allocation4 + $0x4] sm:$0xf] %v707
        %724 = vst [vmem:[#allocation4 + $0x8] sm:$0xf] %v708
        %725 = vst [vmem:[#allocation4 + $0xc] sm:$0xf] %v709
        %726 = vst [vmem:[#allocation4 + $0x10] sm:$0xf] %v710
        %727 = vst [vmem:[#allocation4 + $0x14] sm:$0xf] %v711
        %728 = vst [vmem:[#allocation4 + $0x18] sm:$0xf] %v712
        %729 = vst [vmem:[#allocation4 + $0x1c] sm:$0xf] %v713
        %730 = vst [vmem:[#allocation4 + $0x20] sm:$0xf] %v714
        %731 = vst [vmem:[#allocation4 + $0x24] sm:$0xf] %v715
        %732 = vst [vmem:[#allocation4 + $0x28] sm:$0xf] %v716
        %733 = vst [vmem:[#allocation4 + $0x2c] sm:$0xf] %v717
        %734 = vst [vmem:[#allocation4 + $0x30] sm:$0xf] %v718
        %735 = vst [vmem:[#allocation4 + $0x34] sm:$0xf] %v719
        %736 = vst [vmem:[#allocation4 + $0x38] sm:$0xf] %v720
        %737 = vst [vmem:[#allocation4 + $0x3c] sm:$0xf] %v721
        %738 = vst [vmem:[#allocation5] sm:$0xff] 0.0
        %739 = vst [vmem:[#allocation5 + $0x8] sm:$0xff] 0.0
        %740 = vst [vmem:[#allocation5 + $0x10] sm:$0xff] 0.0
        %741 = vst [vmem:[#allocation5 + $0x18] sm:$0xff] 0.0
        %742 = vst [vmem:[#allocation5 + $0x20] sm:$0xff] 0.0
        %743 = vst [vmem:[#allocation5 + $0x28] sm:$0xff] 0.0
        %744 = vst [vmem:[#allocation5 + $0x30] sm:$0xff] 0.0
        %745 = vst [vmem:[#allocation5 + $0x38] sm:$0xff] 0.0
        %746 = vst [vmem:[#allocation5 + $0x40] sm:$0xff] 0.0
        %747 = vst [vmem:[#allocation5 + $0x48] sm:$0xff] 0.0
        %748 = vst [vmem:[#allocation5 + $0x50] sm:$0xff] 0.0
        %749 = vst [vmem:[#allocation5 + $0x58] sm:$0xff] 0.0
        %750 = vst [vmem:[#allocation5 + $0x60] sm:$0xff] 0.0
        %751 = vst [vmem:[#allocation5 + $0x68] sm:$0xff] 0.0
        %752 = vst [vmem:[#allocation5 + $0x70] sm:$0xff] 0.0
        %753 = vst [vmem:[#allocation5 + $0x78] sm:$0xff] 0.0
        %754 = vst [vmem:[#allocation6] sm:$0xff] 0.0
        %755 = vst [vmem:[#allocation6 + $0x8] sm:$0xff] 0.0
        %756 = vst [vmem:[#allocation6 + $0x10] sm:$0xff] 0.0
        %757 = vst [vmem:[#allocation6 + $0x18] sm:$0xff] 0.0
        %758 = vst [vmem:[#allocation6 + $0x20] sm:$0xff] 0.0
        %759 = vst [vmem:[#allocation6 + $0x28] sm:$0xff] 0.0
        %760 = vst [vmem:[#allocation6 + $0x30] sm:$0xff] 0.0
        %761 = vst [vmem:[#allocation6 + $0x38] sm:$0xff] 0.0
        %762 = vst [vmem:[#allocation6 + $0x40] sm:$0xff] 0.0
        %763 = vst [vmem:[#allocation6 + $0x48] sm:$0xff] 0.0
        %764 = vst [vmem:[#allocation6 + $0x50] sm:$0xff] 0.0
        %765 = vst [vmem:[#allocation6 + $0x58] sm:$0xff] 0.0
        %766 = vst [vmem:[#allocation6 + $0x60] sm:$0xff] 0.0
        %767 = vst [vmem:[#allocation6 + $0x68] sm:$0xff] 0.0
        %768 = vst [vmem:[#allocation6 + $0x70] sm:$0xff] 0.0
        %769 = vst [vmem:[#allocation6 + $0x78] sm:$0xff] 0.0
      $region64: #{rgat_layer.2} parent=59 // pred_fallthru
        _
      %v770 = vlaneseq
      %v771 = vand.u32 %v770, 127
      %v772 = vld [vmem:[%s377] sm:$0xff]
      %v773 = vld [vmem:[%s377 + $0x8] sm:$0xff]
      %v774 = vld [vmem:[%s377 + $0x10] sm:$0xff]
      %v775 = vld [vmem:[%s377 + $0x18] sm:$0xff]
      %v776 = vld [vmem:[%s377 + $0x20] sm:$0xff]
      %v777 = vld [vmem:[%s377 + $0x28] sm:$0xff]
      %v778 = vld [vmem:[%s377 + $0x30] sm:$0xff]
      %v779 = vld [vmem:[%s377 + $0x38] sm:$0xff]
      %v780 = vld [vmem:[%s377 + $0x40] sm:$0xff]
      %v781 = vld [vmem:[%s377 + $0x48] sm:$0xff]
      %v782 = vld [vmem:[%s377 + $0x50] sm:$0xff]
      %v783 = vld [vmem:[%s377 + $0x58] sm:$0xff]
      %v784 = vld [vmem:[%s377 + $0x60] sm:$0xff]
      %v785 = vld [vmem:[%s377 + $0x68] sm:$0xff]
      %v786 = vld [vmem:[%s377 + $0x70] sm:$0xff]
      %v787 = vld [vmem:[%s377 + $0x78] sm:$0xff]
      %788 = vset.pattern.permute.xlu0 0
      %789 = vperm.xlu0 %788, %v772
      %v790 = vpop.permute.xlu0 %789
      %791 = vset.pattern.permute.xlu0 0
      %792 = vperm.xlu0 %791, %v773
      %v793 = vpop.permute.xlu0 %792
      %794 = vset.pattern.permute.xlu0 0
      %795 = vperm.xlu0 %794, %v774
      %v796 = vpop.permute.xlu0 %795
      %797 = vset.pattern.permute.xlu0 0
      %798 = vperm.xlu0 %797, %v775
      %v799 = vpop.permute.xlu0 %798
      %800 = vset.pattern.permute.xlu0 0
      %801 = vperm.xlu0 %800, %v776
      %v802 = vpop.permute.xlu0 %801
      %803 = vset.pattern.permute.xlu0 0
      %804 = vperm.xlu0 %803, %v777
      %v805 = vpop.permute.xlu0 %804
      %806 = vset.pattern.permute.xlu0 0
      %807 = vperm.xlu0 %806, %v778
      %v808 = vpop.permute.xlu0 %807
      %809 = vset.pattern.permute.xlu0 0
      %810 = vperm.xlu0 %809, %v779
      %v811 = vpop.permute.xlu0 %810
      %812 = vset.pattern.permute.xlu0 0
      %813 = vperm.xlu0 %812, %v780
      %v814 = vpop.permute.xlu0 %813
      %815 = vset.pattern.permute.xlu0 0
      %816 = vperm.xlu0 %815, %v781
      %v817 = vpop.permute.xlu0 %816
      %818 = vset.pattern.permute.xlu0 0
      %819 = vperm.xlu0 %818, %v782
      %v820 = vpop.permute.xlu0 %819
      %821 = vset.pattern.permute.xlu0 0
      %822 = vperm.xlu0 %821, %v783
      %v823 = vpop.permute.xlu0 %822
      %824 = vset.pattern.permute.xlu0 0
      %825 = vperm.xlu0 %824, %v784
      %v826 = vpop.permute.xlu0 %825
      %827 = vset.pattern.permute.xlu0 0
      %828 = vperm.xlu0 %827, %v785
      %v829 = vpop.permute.xlu0 %828
      %830 = vset.pattern.permute.xlu0 0
      %831 = vperm.xlu0 %830, %v786
      %v832 = vpop.permute.xlu0 %831
      %833 = vset.pattern.permute.xlu0 0
      %834 = vperm.xlu0 %833, %v787
      %v835 = vpop.permute.xlu0 %834
      %vm836 = vcmp.eq.s32.totalorder %v790, %v771
      %vm837 = vcmp.eq.s32.totalorder %v793, %v771
      %vm838 = vcmp.eq.s32.totalorder %v796, %v771
      %vm839 = vcmp.eq.s32.totalorder %v799, %v771
      %vm840 = vcmp.eq.s32.totalorder %v802, %v771
      %vm841 = vcmp.eq.s32.totalorder %v805, %v771
      %vm842 = vcmp.eq.s32.totalorder %v808, %v771
      %vm843 = vcmp.eq.s32.totalorder %v811, %v771
      %vm844 = vcmp.eq.s32.totalorder %v814, %v771
      %vm845 = vcmp.eq.s32.totalorder %v817, %v771
      %vm846 = vcmp.eq.s32.totalorder %v820, %v771
      %vm847 = vcmp.eq.s32.totalorder %v823, %v771
      %vm848 = vcmp.eq.s32.totalorder %v826, %v771
      %vm849 = vcmp.eq.s32.totalorder %v829, %v771
      %vm850 = vcmp.eq.s32.totalorder %v832, %v771
      %vm851 = vcmp.eq.s32.totalorder %v835, %v771
      %v852 = vsel %vm836, 1.0, 0.0
      %v853 = vsel %vm837, 1.0, 0.0
      %v854 = vsel %vm838, 1.0, 0.0
      %v855 = vsel %vm839, 1.0, 0.0
      %v856 = vsel %vm840, 1.0, 0.0
      %v857 = vsel %vm841, 1.0, 0.0
      %v858 = vsel %vm842, 1.0, 0.0
      %v859 = vsel %vm843, 1.0, 0.0
      %v860 = vsel %vm844, 1.0, 0.0
      %v861 = vsel %vm845, 1.0, 0.0
      %v862 = vsel %vm846, 1.0, 0.0
      %v863 = vsel %vm847, 1.0, 0.0
      %v864 = vsel %vm848, 1.0, 0.0
      %v865 = vsel %vm849, 1.0, 0.0
      %v866 = vsel %vm850, 1.0, 0.0
      %v867 = vsel %vm851, 1.0, 0.0
      %v868 = vpack.c.bf16 %v853, %v852
      %v869 = vpack.c.bf16 %v855, %v854
      %v870 = vpack.c.bf16 %v857, %v856
      %v871 = vpack.c.bf16 %v859, %v858
      %v872 = vpack.c.bf16 %v861, %v860
      %v873 = vpack.c.bf16 %v863, %v862
      %v874 = vpack.c.bf16 %v865, %v864
      %v875 = vpack.c.bf16 %v867, %v866
      %v876 = vld [vmem:[%s383] sm:$0xff]
      %v877 = vld [vmem:[%s383 + $0x8] sm:$0xff]
      %v878 = vld [vmem:[%s383 + $0x10] sm:$0xff]
      %v879 = vld [vmem:[%s383 + $0x18] sm:$0xff]
      %v880 = vld [vmem:[%s383 + $0x20] sm:$0xff]
      %v881 = vld [vmem:[%s383 + $0x28] sm:$0xff]
      %v882 = vld [vmem:[%s383 + $0x30] sm:$0xff]
      %v883 = vld [vmem:[%s383 + $0x38] sm:$0xff]
      %v884 = vld [vmem:[%s383 + $0x40] sm:$0xff]
      %v885 = vld [vmem:[%s383 + $0x48] sm:$0xff]
      %v886 = vld [vmem:[%s383 + $0x50] sm:$0xff]
      %v887 = vld [vmem:[%s383 + $0x58] sm:$0xff]
      %v888 = vld [vmem:[%s383 + $0x60] sm:$0xff]
      %v889 = vld [vmem:[%s383 + $0x68] sm:$0xff]
      %v890 = vld [vmem:[%s383 + $0x70] sm:$0xff]
      %v891 = vld [vmem:[%s383 + $0x78] sm:$0xff]
      %892 = vset.pattern.permute.xlu0 0
      %893 = vperm.xlu0 %892, %v876
      %v894 = vpop.permute.xlu0 %893
      %895 = vset.pattern.permute.xlu0 0
      %896 = vperm.xlu0 %895, %v877
      %v897 = vpop.permute.xlu0 %896
      %898 = vset.pattern.permute.xlu0 0
      %899 = vperm.xlu0 %898, %v878
      %v900 = vpop.permute.xlu0 %899
      %901 = vset.pattern.permute.xlu0 0
      %902 = vperm.xlu0 %901, %v879
      %v903 = vpop.permute.xlu0 %902
      %904 = vset.pattern.permute.xlu0 0
      %905 = vperm.xlu0 %904, %v880
      %v906 = vpop.permute.xlu0 %905
      %907 = vset.pattern.permute.xlu0 0
      %908 = vperm.xlu0 %907, %v881
      %v909 = vpop.permute.xlu0 %908
      %910 = vset.pattern.permute.xlu0 0
      %911 = vperm.xlu0 %910, %v882
      %v912 = vpop.permute.xlu0 %911
      %913 = vset.pattern.permute.xlu0 0
      %914 = vperm.xlu0 %913, %v883
      %v915 = vpop.permute.xlu0 %914
      %916 = vset.pattern.permute.xlu0 0
      %917 = vperm.xlu0 %916, %v884
      %v918 = vpop.permute.xlu0 %917
      %919 = vset.pattern.permute.xlu0 0
      %920 = vperm.xlu0 %919, %v885
      %v921 = vpop.permute.xlu0 %920
      %922 = vset.pattern.permute.xlu0 0
      %923 = vperm.xlu0 %922, %v886
      %v924 = vpop.permute.xlu0 %923
      %925 = vset.pattern.permute.xlu0 0
      %926 = vperm.xlu0 %925, %v887
      %v927 = vpop.permute.xlu0 %926
      %928 = vset.pattern.permute.xlu0 0
      %929 = vperm.xlu0 %928, %v888
      %v930 = vpop.permute.xlu0 %929
      %931 = vset.pattern.permute.xlu0 0
      %932 = vperm.xlu0 %931, %v889
      %v933 = vpop.permute.xlu0 %932
      %934 = vset.pattern.permute.xlu0 0
      %935 = vperm.xlu0 %934, %v890
      %v936 = vpop.permute.xlu0 %935
      %937 = vset.pattern.permute.xlu0 0
      %938 = vperm.xlu0 %937, %v891
      %v939 = vpop.permute.xlu0 %938
      %vm940 = vcmp.eq.s32.totalorder %v894, %v771
      %vm941 = vcmp.eq.s32.totalorder %v897, %v771
      %vm942 = vcmp.eq.s32.totalorder %v900, %v771
      %vm943 = vcmp.eq.s32.totalorder %v903, %v771
      %vm944 = vcmp.eq.s32.totalorder %v906, %v771
      %vm945 = vcmp.eq.s32.totalorder %v909, %v771
      %vm946 = vcmp.eq.s32.totalorder %v912, %v771
      %vm947 = vcmp.eq.s32.totalorder %v915, %v771
      %vm948 = vcmp.eq.s32.totalorder %v918, %v771
      %vm949 = vcmp.eq.s32.totalorder %v921, %v771
      %vm950 = vcmp.eq.s32.totalorder %v924, %v771
      %vm951 = vcmp.eq.s32.totalorder %v927, %v771
      %vm952 = vcmp.eq.s32.totalorder %v930, %v771
      %vm953 = vcmp.eq.s32.totalorder %v933, %v771
      %vm954 = vcmp.eq.s32.totalorder %v936, %v771
      %vm955 = vcmp.eq.s32.totalorder %v939, %v771
      %v956 = vsel %vm940, 1.0, 0.0
      %v957 = vsel %vm941, 1.0, 0.0
      %v958 = vsel %vm942, 1.0, 0.0
      %v959 = vsel %vm943, 1.0, 0.0
      %v960 = vsel %vm944, 1.0, 0.0
      %v961 = vsel %vm945, 1.0, 0.0
      %v962 = vsel %vm946, 1.0, 0.0
      %v963 = vsel %vm947, 1.0, 0.0
      %v964 = vsel %vm948, 1.0, 0.0
      %v965 = vsel %vm949, 1.0, 0.0
      %v966 = vsel %vm950, 1.0, 0.0
      %v967 = vsel %vm951, 1.0, 0.0
      %v968 = vsel %vm952, 1.0, 0.0
      %v969 = vsel %vm953, 1.0, 0.0
      %v970 = vsel %vm954, 1.0, 0.0
      %v971 = vsel %vm955, 1.0, 0.0
      %v972 = vpack.c.bf16 %v957, %v956
      %v973 = vpack.c.bf16 %v959, %v958
      %v974 = vpack.c.bf16 %v961, %v960
      %v975 = vpack.c.bf16 %v963, %v962
      %v976 = vpack.c.bf16 %v965, %v964
      %v977 = vpack.c.bf16 %v967, %v966
      %v978 = vpack.c.bf16 %v969, %v968
      %v979 = vpack.c.bf16 %v971, %v970
      %v980 = vld [vmem:[#allocation2] sm:$0xf]
      %v981 = vld [vmem:[#allocation2 + $0x4] sm:$0xf]
      %v982 = vld [vmem:[#allocation2 + $0x8] sm:$0xf]
      %v983 = vld [vmem:[#allocation2 + $0xc] sm:$0xf]
      %v984 = vld [vmem:[#allocation2 + $0x10] sm:$0xf]
      %v985 = vld [vmem:[#allocation2 + $0x14] sm:$0xf]
      %v986 = vld [vmem:[#allocation2 + $0x18] sm:$0xf]
      %v987 = vld [vmem:[#allocation2 + $0x1c] sm:$0xf]
      %v988 = vld [vmem:[#allocation2 + $0x20] sm:$0xf]
      %v989 = vld [vmem:[#allocation2 + $0x24] sm:$0xf]
      %v990 = vld [vmem:[#allocation2 + $0x28] sm:$0xf]
      %v991 = vld [vmem:[#allocation2 + $0x2c] sm:$0xf]
      %v992 = vld [vmem:[#allocation2 + $0x30] sm:$0xf]
      %v993 = vld [vmem:[#allocation2 + $0x34] sm:$0xf]
      %v994 = vld [vmem:[#allocation2 + $0x38] sm:$0xf]
      %v995 = vld [vmem:[#allocation2 + $0x3c] sm:$0xf]
      %v1012 = vunpack.c.l.b16 %v980
      %v1013 = vunpack.c.l.b16 %v981
      %v1014 = vunpack.c.l.b16 %v982
      %v1015 = vunpack.c.l.b16 %v983
      %v1016 = vunpack.c.l.b16 %v984
      %v1017 = vunpack.c.l.b16 %v985
      %v1018 = vunpack.c.l.b16 %v986
      %v1019 = vunpack.c.l.b16 %v987
      %v1020 = vunpack.c.l.b16 %v988
      %v1021 = vunpack.c.l.b16 %v989
      %v1022 = vunpack.c.l.b16 %v990
      %v1023 = vunpack.c.l.b16 %v991
      %v1024 = vunpack.c.l.b16 %v992
      %v1025 = vunpack.c.l.b16 %v993
      %v1026 = vunpack.c.l.b16 %v994
      %v1027 = vunpack.c.l.b16 %v995
      %v1028 = vpack.c.b16 %v1013, %v1012
      %v1029 = vpack.c.b16 %v1015, %v1014
      %v1030 = vpack.c.b16 %v1017, %v1016
      %v1031 = vpack.c.b16 %v1019, %v1018
      %v1032 = vpack.c.b16 %v1021, %v1020
      %v1033 = vpack.c.b16 %v1023, %v1022
      %v1034 = vpack.c.b16 %v1025, %v1024
      %v1035 = vpack.c.b16 %v1027, %v1026
      %1044 = vmatpush.bf16.msra.mxu0 %v1035
      %1045 = vmatpush.bf16.msra.mxu0 %v1034
      %1046 = vmatpush.bf16.msra.mxu0 %v1033
      %1047 = vmatpush.bf16.msra.mxu0 %v1032
      %1048 = vmatpush.bf16.msra.mxu0 %v1031
      %1049 = vmatpush.bf16.msra.mxu0 %v1030
      %1050 = vmatpush.bf16.msra.mxu0 %v1029
      %1051 = vmatpush.bf16.msra.mxu0 %v1028
      %1052 = vmatmul.bf16.gmra.mxu0 %v972
      %v1053 = vpop.f32.mrf.mxu0
      %v1054 = vadd.f32 0.0, %v1053
      %v1055 = vpop.f32.mrf.mxu0
      %v1056 = vadd.f32 0.0, %v1055
      %1057 = vmatmul.bf16.gmra.mxu0 %v973
      %v1058 = vpop.f32.mrf.mxu0
      %v1059 = vadd.f32 0.0, %v1058
      %v1060 = vpop.f32.mrf.mxu0
      %v1061 = vadd.f32 0.0, %v1060
      %1062 = vmatmul.bf16.gmra.mxu0 %v974
      %v1063 = vpop.f32.mrf.mxu0
      %v1064 = vadd.f32 0.0, %v1063
      %v1065 = vpop.f32.mrf.mxu0
      %v1066 = vadd.f32 0.0, %v1065
      %1067 = vmatmul.bf16.gmra.mxu0 %v975
      %v1068 = vpop.f32.mrf.mxu0
      %v1069 = vadd.f32 0.0, %v1068
      %v1070 = vpop.f32.mrf.mxu0
      %v1071 = vadd.f32 0.0, %v1070
      %1072 = vmatmul.bf16.gmra.mxu0 %v976
      %v1073 = vpop.f32.mrf.mxu0
      %v1074 = vadd.f32 0.0, %v1073
      %v1075 = vpop.f32.mrf.mxu0
      %v1076 = vadd.f32 0.0, %v1075
      %1077 = vmatmul.bf16.gmra.mxu0 %v977
      %v1078 = vpop.f32.mrf.mxu0
      %v1079 = vadd.f32 0.0, %v1078
      %v1080 = vpop.f32.mrf.mxu0
      %v1081 = vadd.f32 0.0, %v1080
      %1082 = vmatmul.bf16.gmra.mxu0 %v978
      %v1083 = vpop.f32.mrf.mxu0
      %v1084 = vadd.f32 0.0, %v1083
      %v1085 = vpop.f32.mrf.mxu0
      %v1086 = vadd.f32 0.0, %v1085
      %1087 = vmatmul.bf16.gmra.mxu0 %v979
      %v1088 = vpop.f32.mrf.mxu0
      %v1089 = vadd.f32 0.0, %v1088
      %v1090 = vpop.f32.mrf.mxu0
      %v1091 = vadd.f32 0.0, %v1090
      %1092 = vdwg.mxu0
      %v1093 = vld [vmem:[#allocation3] sm:$0xf]
      %v1094 = vld [vmem:[#allocation3 + $0x4] sm:$0xf]
      %v1095 = vld [vmem:[#allocation3 + $0x8] sm:$0xf]
      %v1096 = vld [vmem:[#allocation3 + $0xc] sm:$0xf]
      %v1097 = vld [vmem:[#allocation3 + $0x10] sm:$0xf]
      %v1098 = vld [vmem:[#allocation3 + $0x14] sm:$0xf]
      %v1099 = vld [vmem:[#allocation3 + $0x18] sm:$0xf]
      %v1100 = vld [vmem:[#allocation3 + $0x1c] sm:$0xf]
      %v1101 = vld [vmem:[#allocation3 + $0x20] sm:$0xf]
      %v1102 = vld [vmem:[#allocation3 + $0x24] sm:$0xf]
      %v1103 = vld [vmem:[#allocation3 + $0x28] sm:$0xf]
      %v1104 = vld [vmem:[#allocation3 + $0x2c] sm:$0xf]
      %v1105 = vld [vmem:[#allocation3 + $0x30] sm:$0xf]
      %v1106 = vld [vmem:[#allocation3 + $0x34] sm:$0xf]
      %v1107 = vld [vmem:[#allocation3 + $0x38] sm:$0xf]
      %v1108 = vld [vmem:[#allocation3 + $0x3c] sm:$0xf]
      %v1109 = vld [vmem:[#allocation4] sm:$0xf]
      %v1110 = vld [vmem:[#allocation4 + $0x4] sm:$0xf]
      %v1111 = vld [vmem:[#allocation4 + $0x8] sm:$0xf]
      %v1112 = vld [vmem:[#allocation4 + $0xc] sm:$0xf]
      %v1113 = vld [vmem:[#allocation4 + $0x10] sm:$0xf]
      %v1114 = vld [vmem:[#allocation4 + $0x14] sm:$0xf]
      %v1115 = vld [vmem:[#allocation4 + $0x18] sm:$0xf]
      %v1116 = vld [vmem:[#allocation4 + $0x1c] sm:$0xf]
      %v1117 = vld [vmem:[#allocation4 + $0x20] sm:$0xf]
      %v1118 = vld [vmem:[#allocation4 + $0x24] sm:$0xf]
      %v1119 = vld [vmem:[#allocation4 + $0x28] sm:$0xf]
      %v1120 = vld [vmem:[#allocation4 + $0x2c] sm:$0xf]
      %v1121 = vld [vmem:[#allocation4 + $0x30] sm:$0xf]
      %v1122 = vld [vmem:[#allocation4 + $0x34] sm:$0xf]
      %v1123 = vld [vmem:[#allocation4 + $0x38] sm:$0xf]
      %v1124 = vld [vmem:[#allocation4 + $0x3c] sm:$0xf]
      %v1125 = vld [vmem:[%s389] sm:$0xff]
      %v1126 = vld [vmem:[%s389 + $0x8] sm:$0xff]
      %v1127 = vld [vmem:[%s389 + $0x10] sm:$0xff]
      %v1128 = vld [vmem:[%s389 + $0x18] sm:$0xff]
      %v1129 = vld [vmem:[%s389 + $0x20] sm:$0xff]
      %v1130 = vld [vmem:[%s389 + $0x28] sm:$0xff]
      %v1131 = vld [vmem:[%s389 + $0x30] sm:$0xff]
      %v1132 = vld [vmem:[%s389 + $0x38] sm:$0xff]
      %v1133 = vld [vmem:[%s389 + $0x40] sm:$0xff]
      %v1134 = vld [vmem:[%s389 + $0x48] sm:$0xff]
      %v1135 = vld [vmem:[%s389 + $0x50] sm:$0xff]
      %v1136 = vld [vmem:[%s389 + $0x58] sm:$0xff]
      %v1137 = vld [vmem:[%s389 + $0x60] sm:$0xff]
      %v1138 = vld [vmem:[%s389 + $0x68] sm:$0xff]
      %v1139 = vld [vmem:[%s389 + $0x70] sm:$0xff]
      %v1140 = vld [vmem:[%s389 + $0x78] sm:$0xff]
      %v1157 = vunpack.c.l.b16 %v1093
      %v1158 = vunpack.c.l.b16 %v1094
      %v1159 = vunpack.c.l.b16 %v1095
      %v1160 = vunpack.c.l.b16 %v1096
      %v1161 = vunpack.c.l.b16 %v1097
      %v1162 = vunpack.c.l.b16 %v1098
      %v1163 = vunpack.c.l.b16 %v1099
      %v1164 = vunpack.c.l.b16 %v1100
      %v1165 = vunpack.c.l.b16 %v1101
      %v1166 = vunpack.c.l.b16 %v1102
      %v1167 = vunpack.c.l.b16 %v1103
      %v1168 = vunpack.c.l.b16 %v1104
      %v1169 = vunpack.c.l.b16 %v1105
      %v1170 = vunpack.c.l.b16 %v1106
      %v1171 = vunpack.c.l.b16 %v1107
      %v1172 = vunpack.c.l.b16 %v1108
      %v1173 = vpack.c.b16 %v1158, %v1157
      %v1174 = vpack.c.b16 %v1160, %v1159
      %v1175 = vpack.c.b16 %v1162, %v1161
      %v1176 = vpack.c.b16 %v1164, %v1163
      %v1177 = vpack.c.b16 %v1166, %v1165
      %v1178 = vpack.c.b16 %v1168, %v1167
      %v1179 = vpack.c.b16 %v1170, %v1169
      %v1180 = vpack.c.b16 %v1172, %v1171
      %1189 = vmatpush.bf16.msra.mxu0 %v1180
      %1190 = vmatpush.bf16.msra.mxu0 %v1179
      %1191 = vmatpush.bf16.msra.mxu0 %v1178
      %1192 = vmatpush.bf16.msra.mxu0 %v1177
      %1193 = vmatpush.bf16.msra.mxu0 %v1176
      %1194 = vmatpush.bf16.msra.mxu0 %v1175
      %1195 = vmatpush.bf16.msra.mxu0 %v1174
      %1196 = vmatpush.bf16.msra.mxu0 %v1173
      %1197 = vmatmul.bf16.gmra.mxu0 %v868
      %v1198 = vpop.f32.mrf.mxu0
      %v1199 = vadd.f32 %v1125, %v1198
      %v1200 = vpop.f32.mrf.mxu0
      %v1201 = vadd.f32 %v1126, %v1200
      %1202 = vmatmul.bf16.gmra.mxu0 %v869
      %v1203 = vpop.f32.mrf.mxu0
      %v1204 = vadd.f32 %v1127, %v1203
      %v1205 = vpop.f32.mrf.mxu0
      %v1206 = vadd.f32 %v1128, %v1205
      %1207 = vmatmul.bf16.gmra.mxu0 %v870
      %v1208 = vpop.f32.mrf.mxu0
      %v1209 = vadd.f32 %v1129, %v1208
      %v1210 = vpop.f32.mrf.mxu0
      %v1211 = vadd.f32 %v1130, %v1210
      %1212 = vmatmul.bf16.gmra.mxu0 %v871
      %v1213 = vpop.f32.mrf.mxu0
      %v1214 = vadd.f32 %v1131, %v1213
      %v1215 = vpop.f32.mrf.mxu0
      %v1216 = vadd.f32 %v1132, %v1215
      %1217 = vmatmul.bf16.gmra.mxu0 %v872
      %v1218 = vpop.f32.mrf.mxu0
      %v1219 = vadd.f32 %v1133, %v1218
      %v1220 = vpop.f32.mrf.mxu0
      %v1221 = vadd.f32 %v1134, %v1220
      %1222 = vmatmul.bf16.gmra.mxu0 %v873
      %v1223 = vpop.f32.mrf.mxu0
      %v1224 = vadd.f32 %v1135, %v1223
      %v1225 = vpop.f32.mrf.mxu0
      %v1226 = vadd.f32 %v1136, %v1225
      %1227 = vmatmul.bf16.gmra.mxu0 %v874
      %v1228 = vpop.f32.mrf.mxu0
      %v1229 = vadd.f32 %v1137, %v1228
      %v1230 = vpop.f32.mrf.mxu0
      %v1231 = vadd.f32 %v1138, %v1230
      %1232 = vmatmul.bf16.gmra.mxu0 %v875
      %v1233 = vpop.f32.mrf.mxu0
      %v1234 = vadd.f32 %v1139, %v1233
      %v1235 = vpop.f32.mrf.mxu0
      %v1236 = vadd.f32 %v1140, %v1235
      %1237 = vdwg.mxu0
      %v1238 = vmul.f32 %v1199, %v1054
      %v1239 = vmul.f32 %v1201, %v1056
      %v1240 = vmul.f32 %v1204, %v1059
      %v1241 = vmul.f32 %v1206, %v1061
      %v1242 = vmul.f32 %v1209, %v1064
      %v1243 = vmul.f32 %v1211, %v1066
      %v1244 = vmul.f32 %v1214, %v1069
      %v1245 = vmul.f32 %v1216, %v1071
      %v1246 = vmul.f32 %v1219, %v1074
      %v1247 = vmul.f32 %v1221, %v1076
      %v1248 = vmul.f32 %v1224, %v1079
      %v1249 = vmul.f32 %v1226, %v1081
      %v1250 = vmul.f32 %v1229, %v1084
      %v1251 = vmul.f32 %v1231, %v1086
      %v1252 = vmul.f32 %v1234, %v1089
      %v1253 = vmul.f32 %v1236, %v1091
      %v1254 = vmul.f32 %v1238, 0.25
      %v1255 = vmul.f32 %v1239, 0.25
      %v1256 = vmul.f32 %v1240, 0.25
      %v1257 = vmul.f32 %v1241, 0.25
      %v1258 = vmul.f32 %v1242, 0.25
      %v1259 = vmul.f32 %v1243, 0.25
      %v1260 = vmul.f32 %v1244, 0.25
      %v1261 = vmul.f32 %v1245, 0.25
      %v1262 = vmul.f32 %v1246, 0.25
      %v1263 = vmul.f32 %v1247, 0.25
      %v1264 = vmul.f32 %v1248, 0.25
      %v1265 = vmul.f32 %v1249, 0.25
      %v1266 = vmul.f32 %v1250, 0.25
      %v1267 = vmul.f32 %v1251, 0.25
      %v1268 = vmul.f32 %v1252, 0.25
      %v1269 = vmul.f32 %v1253, 0.25
      %v1270 = vld [vmem:[%s8] sm:$0xff]
      %v1271 = vld [vmem:[%s8 + $0x8] sm:$0xff]
      %v1272 = vld [vmem:[%s8 + $0x10] sm:$0xff]
      %v1273 = vld [vmem:[%s8 + $0x18] sm:$0xff]
      %v1274 = vld [vmem:[%s8 + $0x20] sm:$0xff]
      %v1275 = vld [vmem:[%s8 + $0x28] sm:$0xff]
      %v1276 = vld [vmem:[%s8 + $0x30] sm:$0xff]
      %v1277 = vld [vmem:[%s8 + $0x38] sm:$0xff]
      %v1278 = vld [vmem:[%s8 + $0x40] sm:$0xff]
      %v1279 = vld [vmem:[%s8 + $0x48] sm:$0xff]
      %v1280 = vld [vmem:[%s8 + $0x50] sm:$0xff]
      %v1281 = vld [vmem:[%s8 + $0x58] sm:$0xff]
      %v1282 = vld [vmem:[%s8 + $0x60] sm:$0xff]
      %v1283 = vld [vmem:[%s8 + $0x68] sm:$0xff]
      %v1284 = vld [vmem:[%s8 + $0x70] sm:$0xff]
      %v1285 = vld [vmem:[%s8 + $0x78] sm:$0xff]
      %1286 = vmatpush.msra.mxu0 %v1285
      %1287 = vmatpush.msra.mxu0 %v1284
      %1288 = vmatpush.msra.mxu0 %v1283
      %1289 = vmatpush.msra.mxu0 %v1282
      %1290 = vmatpush.msra.mxu0 %v1281
      %1291 = vmatpush.msra.mxu0 %v1280
      %1292 = vmatpush.msra.mxu0 %v1279
      %1293 = vmatpush.msra.mxu0 %v1278
      %1294 = vmatpush.msra.mxu0 %v1277
      %1295 = vmatpush.msra.mxu0 %v1276
      %1296 = vmatpush.msra.mxu0 %v1275
      %1297 = vmatpush.msra.mxu0 %v1274
      %1298 = vmatpush.msra.mxu0 %v1273
      %1299 = vmatpush.msra.mxu0 %v1272
      %1300 = vmatpush.msra.mxu0 %v1271
      %1301 = vmatpush.msra.mxu0 %v1270
      %1302 = vmatmul.f32.gmra.mxu0 %v1254
      %v1303 = vpop.f32.mrf.mxu0
      %v1304 = vadd.f32 0.0, %v1303
      %1305 = vmatmul.f32.gmra.mxu0 %v1255
      %v1306 = vpop.f32.mrf.mxu0
      %v1307 = vadd.f32 0.0, %v1306
      %1308 = vmatmul.f32.gmra.mxu0 %v1256
      %v1309 = vpop.f32.mrf.mxu0
      %v1310 = vadd.f32 0.0, %v1309
      %1311 = vmatmul.f32.gmra.mxu0 %v1257
      %v1312 = vpop.f32.mrf.mxu0
      %v1313 = vadd.f32 0.0, %v1312
      %1314 = vmatmul.f32.gmra.mxu0 %v1258
      %v1315 = vpop.f32.mrf.mxu0
      %v1316 = vadd.f32 0.0, %v1315
      %1317 = vmatmul.f32.gmra.mxu0 %v1259
      %v1318 = vpop.f32.mrf.mxu0
      %v1319 = vadd.f32 0.0, %v1318
      %1320 = vmatmul.f32.gmra.mxu0 %v1260
      %v1321 = vpop.f32.mrf.mxu0
      %v1322 = vadd.f32 0.0, %v1321
      %1323 = vmatmul.f32.gmra.mxu0 %v1261
      %v1324 = vpop.f32.mrf.mxu0
      %v1325 = vadd.f32 0.0, %v1324
      %1326 = vmatmul.f32.gmra.mxu0 %v1262
      %v1327 = vpop.f32.mrf.mxu0
      %v1328 = vadd.f32 0.0, %v1327
      %1329 = vmatmul.f32.gmra.mxu0 %v1263
      %v1330 = vpop.f32.mrf.mxu0
      %v1331 = vadd.f32 0.0, %v1330
      %1332 = vmatmul.f32.gmra.mxu0 %v1264
      %v1333 = vpop.f32.mrf.mxu0
      %v1334 = vadd.f32 0.0, %v1333
      %1335 = vmatmul.f32.gmra.mxu0 %v1265
      %v1336 = vpop.f32.mrf.mxu0
      %v1337 = vadd.f32 0.0, %v1336
      %1338 = vmatmul.f32.gmra.mxu0 %v1266
      %v1339 = vpop.f32.mrf.mxu0
      %v1340 = vadd.f32 0.0, %v1339
      %1341 = vmatmul.f32.gmra.mxu0 %v1267
      %v1342 = vpop.f32.mrf.mxu0
      %v1343 = vadd.f32 0.0, %v1342
      %1344 = vmatmul.f32.gmra.mxu0 %v1268
      %v1345 = vpop.f32.mrf.mxu0
      %v1346 = vadd.f32 0.0, %v1345
      %1347 = vmatmul.f32.gmra.mxu0 %v1269
      %v1348 = vpop.f32.mrf.mxu0
      %v1349 = vadd.f32 0.0, %v1348
      %1350 = vdwg.mxu0
      %v1351 = vmax.f32 %v1304, -10.0
      %v1352 = vmax.f32 %v1307, -10.0
      %v1353 = vmax.f32 %v1310, -10.0
      %v1354 = vmax.f32 %v1313, -10.0
      %v1355 = vmax.f32 %v1316, -10.0
      %v1356 = vmax.f32 %v1319, -10.0
      %v1357 = vmax.f32 %v1322, -10.0
      %v1358 = vmax.f32 %v1325, -10.0
      %v1359 = vmax.f32 %v1328, -10.0
      %v1360 = vmax.f32 %v1331, -10.0
      %v1361 = vmax.f32 %v1334, -10.0
      %v1362 = vmax.f32 %v1337, -10.0
      %v1363 = vmax.f32 %v1340, -10.0
      %v1364 = vmax.f32 %v1343, -10.0
      %v1365 = vmax.f32 %v1346, -10.0
      %v1366 = vmax.f32 %v1349, -10.0
      %v1367 = vmin.f32 %v1351, 10.0
      %v1368 = vmin.f32 %v1352, 10.0
      %v1369 = vmin.f32 %v1353, 10.0
      %v1370 = vmin.f32 %v1354, 10.0
      %v1371 = vmin.f32 %v1355, 10.0
      %v1372 = vmin.f32 %v1356, 10.0
      %v1373 = vmin.f32 %v1357, 10.0
      %v1374 = vmin.f32 %v1358, 10.0
      %v1375 = vmin.f32 %v1359, 10.0
      %v1376 = vmin.f32 %v1360, 10.0
      %v1377 = vmin.f32 %v1361, 10.0
      %v1378 = vmin.f32 %v1362, 10.0
      %v1379 = vmin.f32 %v1363, 10.0
      %v1380 = vmin.f32 %v1364, 10.0
      %v1381 = vmin.f32 %v1365, 10.0
      %v1382 = vmin.f32 %v1366, 10.0
      %v1383 = vmul.f32 %v1367, 1.442695
      %v1384 = vpow.pop %v1383
      %v1385 = vmul.f32 %v1368, 1.442695
      %v1386 = vpow.pop %v1385
      %v1387 = vmul.f32 %v1369, 1.442695
      %v1388 = vpow.pop %v1387
      %v1389 = vmul.f32 %v1370, 1.442695
      %v1390 = vpow.pop %v1389
      %v1391 = vmul.f32 %v1371, 1.442695
      %v1392 = vpow.pop %v1391
      %v1393 = vmul.f32 %v1372, 1.442695
      %v1394 = vpow.pop %v1393
      %v1395 = vmul.f32 %v1373, 1.442695
      %v1396 = vpow.pop %v1395
      %v1397 = vmul.f32 %v1374, 1.442695
      %v1398 = vpow.pop %v1397
      %v1399 = vmul.f32 %v1375, 1.442695
      %v1400 = vpow.pop %v1399
      %v1401 = vmul.f32 %v1376, 1.442695
      %v1402 = vpow.pop %v1401
      %v1403 = vmul.f32 %v1377, 1.442695
      %v1404 = vpow.pop %v1403
      %v1405 = vmul.f32 %v1378, 1.442695
      %v1406 = vpow.pop %v1405
      %v1407 = vmul.f32 %v1379, 1.442695
      %v1408 = vpow.pop %v1407
      %v1409 = vmul.f32 %v1380, 1.442695
      %v1410 = vpow.pop %v1409
      %v1411 = vmul.f32 %v1381, 1.442695
      %v1412 = vpow.pop %v1411
      %v1413 = vmul.f32 %v1382, 1.442695
      %v1414 = vpow.pop %v1413
      %v1415 = vld [vmem:[%s9] sm:$0xff]
      %v1416 = vld [vmem:[%s9 + $0x8] sm:$0xff]
      %v1417 = vld [vmem:[%s9 + $0x10] sm:$0xff]
      %v1418 = vld [vmem:[%s9 + $0x18] sm:$0xff]
      %v1419 = vld [vmem:[%s9 + $0x20] sm:$0xff]
      %v1420 = vld [vmem:[%s9 + $0x28] sm:$0xff]
      %v1421 = vld [vmem:[%s9 + $0x30] sm:$0xff]
      %v1422 = vld [vmem:[%s9 + $0x38] sm:$0xff]
      %v1423 = vld [vmem:[%s9 + $0x40] sm:$0xff]
      %v1424 = vld [vmem:[%s9 + $0x48] sm:$0xff]
      %v1425 = vld [vmem:[%s9 + $0x50] sm:$0xff]
      %v1426 = vld [vmem:[%s9 + $0x58] sm:$0xff]
      %v1427 = vld [vmem:[%s9 + $0x60] sm:$0xff]
      %v1428 = vld [vmem:[%s9 + $0x68] sm:$0xff]
      %v1429 = vld [vmem:[%s9 + $0x70] sm:$0xff]
      %v1430 = vld [vmem:[%s9 + $0x78] sm:$0xff]
      %1431 = vmatpush.msra.mxu0 %v1430
      %1432 = vmatpush.msra.mxu0 %v1429
      %1433 = vmatpush.msra.mxu0 %v1428
      %1434 = vmatpush.msra.mxu0 %v1427
      %1435 = vmatpush.msra.mxu0 %v1426
      %1436 = vmatpush.msra.mxu0 %v1425
      %1437 = vmatpush.msra.mxu0 %v1424
      %1438 = vmatpush.msra.mxu0 %v1423
      %1439 = vmatpush.msra.mxu0 %v1422
      %1440 = vmatpush.msra.mxu0 %v1421
      %1441 = vmatpush.msra.mxu0 %v1420
      %1442 = vmatpush.msra.mxu0 %v1419
      %1443 = vmatpush.msra.mxu0 %v1418
      %1444 = vmatpush.msra.mxu0 %v1417
      %1445 = vmatpush.msra.mxu0 %v1416
      %1446 = vmatpush.msra.mxu0 %v1415
      %1447 = vmatmul.f32.gmra.mxu0 %v1384
      %v1448 = vpop.f32.mrf.mxu0
      %v1449 = vadd.f32 0.0, %v1448
      %1450 = vmatmul.f32.gmra.mxu0 %v1386
      %v1451 = vpop.f32.mrf.mxu0
      %v1452 = vadd.f32 0.0, %v1451
      %1453 = vmatmul.f32.gmra.mxu0 %v1388
      %v1454 = vpop.f32.mrf.mxu0
      %v1455 = vadd.f32 0.0, %v1454
      %1456 = vmatmul.f32.gmra.mxu0 %v1390
      %v1457 = vpop.f32.mrf.mxu0
      %v1458 = vadd.f32 0.0, %v1457
      %1459 = vmatmul.f32.gmra.mxu0 %v1392
      %v1460 = vpop.f32.mrf.mxu0
      %v1461 = vadd.f32 0.0, %v1460
      %1462 = vmatmul.f32.gmra.mxu0 %v1394
      %v1463 = vpop.f32.mrf.mxu0
      %v1464 = vadd.f32 0.0, %v1463
      %1465 = vmatmul.f32.gmra.mxu0 %v1396
      %v1466 = vpop.f32.mrf.mxu0
      %v1467 = vadd.f32 0.0, %v1466
      %1468 = vmatmul.f32.gmra.mxu0 %v1398
      %v1469 = vpop.f32.mrf.mxu0
      %v1470 = vadd.f32 0.0, %v1469
      %1471 = vmatmul.f32.gmra.mxu0 %v1400
      %v1472 = vpop.f32.mrf.mxu0
      %v1473 = vadd.f32 0.0, %v1472
      %1474 = vmatmul.f32.gmra.mxu0 %v1402
      %v1475 = vpop.f32.mrf.mxu0
      %v1476 = vadd.f32 0.0, %v1475
      %1477 = vmatmul.f32.gmra.mxu0 %v1404
      %v1478 = vpop.f32.mrf.mxu0
      %v1479 = vadd.f32 0.0, %v1478
      %1480 = vmatmul.f32.gmra.mxu0 %v1406
      %v1481 = vpop.f32.mrf.mxu0
      %v1482 = vadd.f32 0.0, %v1481
      %1483 = vmatmul.f32.gmra.mxu0 %v1408
      %v1484 = vpop.f32.mrf.mxu0
      %v1485 = vadd.f32 0.0, %v1484
      %1486 = vmatmul.f32.gmra.mxu0 %v1410
      %v1487 = vpop.f32.mrf.mxu0
      %v1488 = vadd.f32 0.0, %v1487
      %1489 = vmatmul.f32.gmra.mxu0 %v1412
      %v1490 = vpop.f32.mrf.mxu0
      %v1491 = vadd.f32 0.0, %v1490
      %1492 = vmatmul.f32.gmra.mxu0 %v1414
      %v1493 = vpop.f32.mrf.mxu0
      %v1494 = vadd.f32 0.0, %v1493
      %1495 = vdwg.mxu0
      %v1512 = vunpack.c.l.b16 %v1109
      %v1513 = vunpack.c.l.b16 %v1110
      %v1514 = vunpack.c.l.b16 %v1111
      %v1515 = vunpack.c.l.b16 %v1112
      %v1516 = vunpack.c.l.b16 %v1113
      %v1517 = vunpack.c.l.b16 %v1114
      %v1518 = vunpack.c.l.b16 %v1115
      %v1519 = vunpack.c.l.b16 %v1116
      %v1520 = vunpack.c.l.b16 %v1117
      %v1521 = vunpack.c.l.b16 %v1118
      %v1522 = vunpack.c.l.b16 %v1119
      %v1523 = vunpack.c.l.b16 %v1120
      %v1524 = vunpack.c.l.b16 %v1121
      %v1525 = vunpack.c.l.b16 %v1122
      %v1526 = vunpack.c.l.b16 %v1123
      %v1527 = vunpack.c.l.b16 %v1124
      %v1528 = vpack.c.b16 %v1513, %v1512
      %v1529 = vpack.c.b16 %v1515, %v1514
      %v1530 = vpack.c.b16 %v1517, %v1516
      %v1531 = vpack.c.b16 %v1519, %v1518
      %v1532 = vpack.c.b16 %v1521, %v1520
      %v1533 = vpack.c.b16 %v1523, %v1522
      %v1534 = vpack.c.b16 %v1525, %v1524
      %v1535 = vpack.c.b16 %v1527, %v1526
      %1544 = vmatpush.bf16.msra.mxu0 %v1535
      %1545 = vmatpush.bf16.msra.mxu0 %v1534
      %1546 = vmatpush.bf16.msra.mxu0 %v1533
      %1547 = vmatpush.bf16.msra.mxu0 %v1532
      %1548 = vmatpush.bf16.msra.mxu0 %v1531
      %1549 = vmatpush.bf16.msra.mxu0 %v1530
      %1550 = vmatpush.bf16.msra.mxu0 %v1529
      %1551 = vmatpush.bf16.msra.mxu0 %v1528
      %1552 = vmatmul.bf16.gmra.mxu0 %v868
      %v1553 = vpop.f32.mrf.mxu0
      %v1554 = vadd.f32 %v1125, %v1553
      %v1555 = vpop.f32.mrf.mxu0
      %v1556 = vadd.f32 %v1126, %v1555
      %1557 = vmatmul.bf16.gmra.mxu0 %v869
      %v1558 = vpop.f32.mrf.mxu0
      %v1559 = vadd.f32 %v1127, %v1558
      %v1560 = vpop.f32.mrf.mxu0
      %v1561 = vadd.f32 %v1128, %v1560
      %1562 = vmatmul.bf16.gmra.mxu0 %v870
      %v1563 = vpop.f32.mrf.mxu0
      %v1564 = vadd.f32 %v1129, %v1563
      %v1565 = vpop.f32.mrf.mxu0
      %v1566 = vadd.f32 %v1130, %v1565
      %1567 = vmatmul.bf16.gmra.mxu0 %v871
      %v1568 = vpop.f32.mrf.mxu0
      %v1569 = vadd.f32 %v1131, %v1568
      %v1570 = vpop.f32.mrf.mxu0
      %v1571 = vadd.f32 %v1132, %v1570
      %1572 = vmatmul.bf16.gmra.mxu0 %v872
      %v1573 = vpop.f32.mrf.mxu0
      %v1574 = vadd.f32 %v1133, %v1573
      %v1575 = vpop.f32.mrf.mxu0
      %v1576 = vadd.f32 %v1134, %v1575
      %1577 = vmatmul.bf16.gmra.mxu0 %v873
      %v1578 = vpop.f32.mrf.mxu0
      %v1579 = vadd.f32 %v1135, %v1578
      %v1580 = vpop.f32.mrf.mxu0
      %v1581 = vadd.f32 %v1136, %v1580
      %1582 = vmatmul.bf16.gmra.mxu0 %v874
      %v1583 = vpop.f32.mrf.mxu0
      %v1584 = vadd.f32 %v1137, %v1583
      %v1585 = vpop.f32.mrf.mxu0
      %v1586 = vadd.f32 %v1138, %v1585
      %1587 = vmatmul.bf16.gmra.mxu0 %v875
      %v1588 = vpop.f32.mrf.mxu0
      %v1589 = vadd.f32 %v1139, %v1588
      %v1590 = vpop.f32.mrf.mxu0
      %v1591 = vadd.f32 %v1140, %v1590
      %1592 = vdwg.mxu0
      %v1593 = vmul.f32 %v1554, %v1449
      %v1594 = vmul.f32 %v1556, %v1452
      %v1595 = vmul.f32 %v1559, %v1455
      %v1596 = vmul.f32 %v1561, %v1458
      %v1597 = vmul.f32 %v1564, %v1461
      %v1598 = vmul.f32 %v1566, %v1464
      %v1599 = vmul.f32 %v1569, %v1467
      %v1600 = vmul.f32 %v1571, %v1470
      %v1601 = vmul.f32 %v1574, %v1473
      %v1602 = vmul.f32 %v1576, %v1476
      %v1603 = vmul.f32 %v1579, %v1479
      %v1604 = vmul.f32 %v1581, %v1482
      %v1605 = vmul.f32 %v1584, %v1485
      %v1606 = vmul.f32 %v1586, %v1488
      %v1607 = vmul.f32 %v1589, %v1491
      %v1608 = vmul.f32 %v1591, %v1494
      %v1609 = vld [vmem:[#allocation5] sm:$0xff]
      %v1610 = vld [vmem:[#allocation5 + $0x8] sm:$0xff]
      %v1611 = vld [vmem:[#allocation5 + $0x10] sm:$0xff]
      %v1612 = vld [vmem:[#allocation5 + $0x18] sm:$0xff]
      %v1613 = vld [vmem:[#allocation5 + $0x20] sm:$0xff]
      %v1614 = vld [vmem:[#allocation5 + $0x28] sm:$0xff]
      %v1615 = vld [vmem:[#allocation5 + $0x30] sm:$0xff]
      %v1616 = vld [vmem:[#allocation5 + $0x38] sm:$0xff]
      %v1617 = vld [vmem:[#allocation5 + $0x40] sm:$0xff]
      %v1618 = vld [vmem:[#allocation5 + $0x48] sm:$0xff]
      %v1619 = vld [vmem:[#allocation5 + $0x50] sm:$0xff]
      %v1620 = vld [vmem:[#allocation5 + $0x58] sm:$0xff]
      %v1621 = vld [vmem:[#allocation5 + $0x60] sm:$0xff]
      %v1622 = vld [vmem:[#allocation5 + $0x68] sm:$0xff]
      %v1623 = vld [vmem:[#allocation5 + $0x70] sm:$0xff]
      %v1624 = vld [vmem:[#allocation5 + $0x78] sm:$0xff]
      %v1625 = vpack.c.bf16 %v1594, %v1593
      %v1626 = vpack.c.bf16 %v1596, %v1595
      %v1627 = vpack.c.bf16 %v1598, %v1597
      %v1628 = vpack.c.bf16 %v1600, %v1599
      %v1629 = vpack.c.bf16 %v1602, %v1601
      %v1630 = vpack.c.bf16 %v1604, %v1603
      %v1631 = vpack.c.bf16 %v1606, %v1605
      %v1632 = vpack.c.bf16 %v1608, %v1607
      %1633 = vxpose.xlu0.c.b16.start [1/8] %v972, 128
      %1634 = vxpose.xlu0.c.b16.cont [2/8] %v973, 128
      %1635 = vxpose.xlu0.c.b16.cont [3/8] %v974, 128
      %1636 = vxpose.xlu0.c.b16.cont [4/8] %v975, 128
      %1637 = vxpose.xlu0.c.b16.cont [5/8] %v976, 128
      %1638 = vxpose.xlu0.c.b16.cont [6/8] %v977, 128
      %1639 = vxpose.xlu0.c.b16.cont [7/8] %v978, 128
      %1640 = vxpose.xlu0.c.b16.end [8/8] %v979, 128
      %v1641 = vpop.trf.xlu0
      %v1642 = vpop.trf.xlu0
      %v1643 = vpop.trf.xlu0
      %v1644 = vpop.trf.xlu0
      %v1645 = vpop.trf.xlu0
      %v1646 = vpop.trf.xlu0
      %v1647 = vpop.trf.xlu0
      %v1648 = vpop.trf.xlu0
      %1649 = vmatpush.bf16.msra.mxu0 %v1632
      %1650 = vmatpush.bf16.msra.mxu0 %v1631
      %1651 = vmatpush.bf16.msra.mxu0 %v1630
      %1652 = vmatpush.bf16.msra.mxu0 %v1629
      %1653 = vmatpush.bf16.msra.mxu0 %v1628
      %1654 = vmatpush.bf16.msra.mxu0 %v1627
      %1655 = vmatpush.bf16.msra.mxu0 %v1626
      %1656 = vmatpush.bf16.msra.mxu0 %v1625
      %1657 = vmatmul.bf16.gmra.mxu0 %v1641
      %v1658 = vpop.f32.mrf.mxu0
      %v1659 = vadd.f32 0.0, %v1658
      %v1660 = vpop.f32.mrf.mxu0
      %v1661 = vadd.f32 0.0, %v1660
      %1662 = vmatmul.bf16.gmra.mxu0 %v1642
      %v1663 = vpop.f32.mrf.mxu0
      %v1664 = vadd.f32 0.0, %v1663
      %v1665 = vpop.f32.mrf.mxu0
      %v1666 = vadd.f32 0.0, %v1665
      %1667 = vmatmul.bf16.gmra.mxu0 %v1643
      %v1668 = vpop.f32.mrf.mxu0
      %v1669 = vadd.f32 0.0, %v1668
      %v1670 = vpop.f32.mrf.mxu0
      %v1671 = vadd.f32 0.0, %v1670
      %1672 = vmatmul.bf16.gmra.mxu0 %v1644
      %v1673 = vpop.f32.mrf.mxu0
      %v1674 = vadd.f32 0.0, %v1673
      %v1675 = vpop.f32.mrf.mxu0
      %v1676 = vadd.f32 0.0, %v1675
      %1677 = vmatmul.bf16.gmra.mxu0 %v1645
      %v1678 = vpop.f32.mrf.mxu0
      %v1679 = vadd.f32 0.0, %v1678
      %v1680 = vpop.f32.mrf.mxu0
      %v1681 = vadd.f32 0.0, %v1680
      %1682 = vmatmul.bf16.gmra.mxu0 %v1646
      %v1683 = vpop.f32.mrf.mxu0
      %v1684 = vadd.f32 0.0, %v1683
      %v1685 = vpop.f32.mrf.mxu0
      %v1686 = vadd.f32 0.0, %v1685
      %1687 = vmatmul.bf16.gmra.mxu0 %v1647
      %v1688 = vpop.f32.mrf.mxu0
      %v1689 = vadd.f32 0.0, %v1688
      %v1690 = vpop.f32.mrf.mxu0
      %v1691 = vadd.f32 0.0, %v1690
      %1692 = vmatmul.bf16.gmra.mxu0 %v1648
      %v1693 = vpop.f32.mrf.mxu0
      %v1694 = vadd.f32 0.0, %v1693
      %v1695 = vpop.f32.mrf.mxu0
      %v1696 = vadd.f32 0.0, %v1695
      %1697 = vdwg.mxu0
      %v1698 = vadd.f32 %v1609, %v1659
      %v1699 = vadd.f32 %v1610, %v1661
      %v1700 = vadd.f32 %v1611, %v1664
      %v1701 = vadd.f32 %v1612, %v1666
      %v1702 = vadd.f32 %v1613, %v1669
      %v1703 = vadd.f32 %v1614, %v1671
      %v1704 = vadd.f32 %v1615, %v1674
      %v1705 = vadd.f32 %v1616, %v1676
      %v1706 = vadd.f32 %v1617, %v1679
      %v1707 = vadd.f32 %v1618, %v1681
      %v1708 = vadd.f32 %v1619, %v1684
      %v1709 = vadd.f32 %v1620, %v1686
      %v1710 = vadd.f32 %v1621, %v1689
      %v1711 = vadd.f32 %v1622, %v1691
      %v1712 = vadd.f32 %v1623, %v1694
      %v1713 = vadd.f32 %v1624, %v1696
      %1714 = vst [vmem:[#allocation5] sm:$0xff] %v1698
      %1715 = vst [vmem:[#allocation5 + $0x8] sm:$0xff] %v1699
      %1716 = vst [vmem:[#allocation5 + $0x10] sm:$0xff] %v1700
      %1717 = vst [vmem:[#allocation5 + $0x18] sm:$0xff] %v1701
      %1718 = vst [vmem:[#allocation5 + $0x20] sm:$0xff] %v1702
      %1719 = vst [vmem:[#allocation5 + $0x28] sm:$0xff] %v1703
      %1720 = vst [vmem:[#allocation5 + $0x30] sm:$0xff] %v1704
      %1721 = vst [vmem:[#allocation5 + $0x38] sm:$0xff] %v1705
      %1722 = vst [vmem:[#allocation5 + $0x40] sm:$0xff] %v1706
      %1723 = vst [vmem:[#allocation5 + $0x48] sm:$0xff] %v1707
      %1724 = vst [vmem:[#allocation5 + $0x50] sm:$0xff] %v1708
      %1725 = vst [vmem:[#allocation5 + $0x58] sm:$0xff] %v1709
      %1726 = vst [vmem:[#allocation5 + $0x60] sm:$0xff] %v1710
      %1727 = vst [vmem:[#allocation5 + $0x68] sm:$0xff] %v1711
      %1728 = vst [vmem:[#allocation5 + $0x70] sm:$0xff] %v1712
      %1729 = vst [vmem:[#allocation5 + $0x78] sm:$0xff] %v1713
      %v1730 = vld [vmem:[#allocation6] sm:$0xff]
      %v1731 = vld [vmem:[#allocation6 + $0x8] sm:$0xff]
      %v1732 = vld [vmem:[#allocation6 + $0x10] sm:$0xff]
      %v1733 = vld [vmem:[#allocation6 + $0x18] sm:$0xff]
      %v1734 = vld [vmem:[#allocation6 + $0x20] sm:$0xff]
      %v1735 = vld [vmem:[#allocation6 + $0x28] sm:$0xff]
      %v1736 = vld [vmem:[#allocation6 + $0x30] sm:$0xff]
      %v1737 = vld [vmem:[#allocation6 + $0x38] sm:$0xff]
      %v1738 = vld [vmem:[#allocation6 + $0x40] sm:$0xff]
      %v1739 = vld [vmem:[#allocation6 + $0x48] sm:$0xff]
      %v1740 = vld [vmem:[#allocation6 + $0x50] sm:$0xff]
      %v1741 = vld [vmem:[#allocation6 + $0x58] sm:$0xff]
      %v1742 = vld [vmem:[#allocation6 + $0x60] sm:$0xff]
      %v1743 = vld [vmem:[#allocation6 + $0x68] sm:$0xff]
      %v1744 = vld [vmem:[#allocation6 + $0x70] sm:$0xff]
      %v1745 = vld [vmem:[#allocation6 + $0x78] sm:$0xff]
      %v1746 = vpack.c.bf16 %v1452, %v1449
      %v1747 = vpack.c.bf16 %v1458, %v1455
      %v1748 = vpack.c.bf16 %v1464, %v1461
      %v1749 = vpack.c.bf16 %v1470, %v1467
      %v1750 = vpack.c.bf16 %v1476, %v1473
      %v1751 = vpack.c.bf16 %v1482, %v1479
      %v1752 = vpack.c.bf16 %v1488, %v1485
      %v1753 = vpack.c.bf16 %v1494, %v1491
      %1754 = vmatpush.bf16.msra.mxu0 %v1753
      %1755 = vmatpush.bf16.msra.mxu0 %v1752
      %1756 = vmatpush.bf16.msra.mxu0 %v1751
      %1757 = vmatpush.bf16.msra.mxu0 %v1750
      %1758 = vmatpush.bf16.msra.mxu0 %v1749
      %1759 = vmatpush.bf16.msra.mxu0 %v1748
      %1760 = vmatpush.bf16.msra.mxu0 %v1747
      %1761 = vmatpush.bf16.msra.mxu0 %v1746
      %1762 = vmatmul.bf16.gmra.mxu0 %v1641
      %v1763 = vpop.f32.mrf.mxu0
      %v1764 = vadd.f32 0.0, %v1763
      %v1765 = vpop.f32.mrf.mxu0
      %v1766 = vadd.f32 0.0, %v1765
      %1767 = vmatmul.bf16.gmra.mxu0 %v1642
      %v1768 = vpop.f32.mrf.mxu0
      %v1769 = vadd.f32 0.0, %v1768
      %v1770 = vpop.f32.mrf.mxu0
      %v1771 = vadd.f32 0.0, %v1770
      %1772 = vmatmul.bf16.gmra.mxu0 %v1643
      %v1773 = vpop.f32.mrf.mxu0
      %v1774 = vadd.f32 0.0, %v1773
      %v1775 = vpop.f32.mrf.mxu0
      %v1776 = vadd.f32 0.0, %v1775
      %1777 = vmatmul.bf16.gmra.mxu0 %v1644
      %v1778 = vpop.f32.mrf.mxu0
      %v1779 = vadd.f32 0.0, %v1778
      %v1780 = vpop.f32.mrf.mxu0
      %v1781 = vadd.f32 0.0, %v1780
      %1782 = vmatmul.bf16.gmra.mxu0 %v1645
      %v1783 = vpop.f32.mrf.mxu0
      %v1784 = vadd.f32 0.0, %v1783
      %v1785 = vpop.f32.mrf.mxu0
      %v1786 = vadd.f32 0.0, %v1785
      %1787 = vmatmul.bf16.gmra.mxu0 %v1646
      %v1788 = vpop.f32.mrf.mxu0
      %v1789 = vadd.f32 0.0, %v1788
      %v1790 = vpop.f32.mrf.mxu0
      %v1791 = vadd.f32 0.0, %v1790
      %1792 = vmatmul.bf16.gmra.mxu0 %v1647
      %v1793 = vpop.f32.mrf.mxu0
      %v1794 = vadd.f32 0.0, %v1793
      %v1795 = vpop.f32.mrf.mxu0
      %v1796 = vadd.f32 0.0, %v1795
      %1797 = vmatmul.bf16.gmra.mxu0 %v1648
      %v1798 = vpop.f32.mrf.mxu0
      %v1799 = vadd.f32 0.0, %v1798
      %v1800 = vpop.f32.mrf.mxu0
      %v1801 = vadd.f32 0.0, %v1800
      %1802 = vdwg.mxu0
      %v1803 = vadd.f32 %v1730, %v1764
      %v1804 = vadd.f32 %v1731, %v1766
      %v1805 = vadd.f32 %v1732, %v1769
      %v1806 = vadd.f32 %v1733, %v1771
      %v1807 = vadd.f32 %v1734, %v1774
      %v1808 = vadd.f32 %v1735, %v1776
      %v1809 = vadd.f32 %v1736, %v1779
      %v1810 = vadd.f32 %v1737, %v1781
      %v1811 = vadd.f32 %v1738, %v1784
      %v1812 = vadd.f32 %v1739, %v1786
      %v1813 = vadd.f32 %v1740, %v1789
      %v1814 = vadd.f32 %v1741, %v1791
      %v1815 = vadd.f32 %v1742, %v1794
      %v1816 = vadd.f32 %v1743, %v1796
      %v1817 = vadd.f32 %v1744, %v1799
      %v1818 = vadd.f32 %v1745, %v1801
      %1819 = vst [vmem:[#allocation6] sm:$0xff] %v1803
      %1820 = vst [vmem:[#allocation6 + $0x8] sm:$0xff] %v1804
      %1821 = vst [vmem:[#allocation6 + $0x10] sm:$0xff] %v1805
      %1822 = vst [vmem:[#allocation6 + $0x18] sm:$0xff] %v1806
      %1823 = vst [vmem:[#allocation6 + $0x20] sm:$0xff] %v1807
      %1824 = vst [vmem:[#allocation6 + $0x28] sm:$0xff] %v1808
      %1825 = vst [vmem:[#allocation6 + $0x30] sm:$0xff] %v1809
      %1826 = vst [vmem:[#allocation6 + $0x38] sm:$0xff] %v1810
      %1827 = vst [vmem:[#allocation6 + $0x40] sm:$0xff] %v1811
      %1828 = vst [vmem:[#allocation6 + $0x48] sm:$0xff] %v1812
      %1829 = vst [vmem:[#allocation6 + $0x50] sm:$0xff] %v1813
      %1830 = vst [vmem:[#allocation6 + $0x58] sm:$0xff] %v1814
      %1831 = vst [vmem:[#allocation6 + $0x60] sm:$0xff] %v1815
      %1832 = vst [vmem:[#allocation6 + $0x68] sm:$0xff] %v1816
      %1833 = vst [vmem:[#allocation6 + $0x70] sm:$0xff] %v1817
      %1834 = vst [vmem:[#allocation6 + $0x78] sm:$0xff] %v1818
      %p1835 = scmp.eq.s32.totalorder %s21, 1
      // Predicated region
      $region65: #{rgat_layer.2} parent=59 // pred_check
        %p1836 = pneg %p1835
      $region66: #{rgat_layer.2} parent=59 // pred_check_branch
        %1838 = sbr.rel (%p1836) target = $region68
      $region67: #{rgat_layer.2} parent=59 // pred_region
        %v1839 = vld [vmem:[#allocation6] sm:$0xff]
        %v1840 = vld [vmem:[#allocation6 + $0x8] sm:$0xff]
        %v1841 = vld [vmem:[#allocation6 + $0x10] sm:$0xff]
        %v1842 = vld [vmem:[#allocation6 + $0x18] sm:$0xff]
        %v1843 = vld [vmem:[#allocation6 + $0x20] sm:$0xff]
        %v1844 = vld [vmem:[#allocation6 + $0x28] sm:$0xff]
        %v1845 = vld [vmem:[#allocation6 + $0x30] sm:$0xff]
        %v1846 = vld [vmem:[#allocation6 + $0x38] sm:$0xff]
        %v1847 = vld [vmem:[#allocation6 + $0x40] sm:$0xff]
        %v1848 = vld [vmem:[#allocation6 + $0x48] sm:$0xff]
        %v1849 = vld [vmem:[#allocation6 + $0x50] sm:$0xff]
        %v1850 = vld [vmem:[#allocation6 + $0x58] sm:$0xff]
        %v1851 = vld [vmem:[#allocation6 + $0x60] sm:$0xff]
        %v1852 = vld [vmem:[#allocation6 + $0x68] sm:$0xff]
        %v1853 = vld [vmem:[#allocation6 + $0x70] sm:$0xff]
        %v1854 = vld [vmem:[#allocation6 + $0x78] sm:$0xff]
        %v1855 = vmax.f32 %v1839, 1e-20
        %v1856 = vmax.f32 %v1840, 1e-20
        %v1857 = vmax.f32 %v1841, 1e-20
        %v1858 = vmax.f32 %v1842, 1e-20
        %v1859 = vmax.f32 %v1843, 1e-20
        %v1860 = vmax.f32 %v1844, 1e-20
        %v1861 = vmax.f32 %v1845, 1e-20
        %v1862 = vmax.f32 %v1846, 1e-20
        %v1863 = vmax.f32 %v1847, 1e-20
        %v1864 = vmax.f32 %v1848, 1e-20
        %v1865 = vmax.f32 %v1849, 1e-20
        %v1866 = vmax.f32 %v1850, 1e-20
        %v1867 = vmax.f32 %v1851, 1e-20
        %v1868 = vmax.f32 %v1852, 1e-20
        %v1869 = vmax.f32 %v1853, 1e-20
        %v1870 = vmax.f32 %v1854, 1e-20
        %v1871 = vrcp.pop %v1855
        %v1872 = vrcp.pop %v1856
        %v1873 = vrcp.pop %v1857
        %v1874 = vrcp.pop %v1858
        %v1875 = vrcp.pop %v1859
        %v1876 = vrcp.pop %v1860
        %v1877 = vrcp.pop %v1861
        %v1878 = vrcp.pop %v1862
        %v1879 = vrcp.pop %v1863
        %v1880 = vrcp.pop %v1864
        %v1881 = vrcp.pop %v1865
        %v1882 = vrcp.pop %v1866
        %v1883 = vrcp.pop %v1867
        %v1884 = vrcp.pop %v1868
        %v1885 = vrcp.pop %v1869
        %v1886 = vrcp.pop %v1870
        %v1887 = vld [vmem:[#allocation5] sm:$0xff]
        %v1888 = vld [vmem:[#allocation5 + $0x8] sm:$0xff]
        %v1889 = vld [vmem:[#allocation5 + $0x10] sm:$0xff]
        %v1890 = vld [vmem:[#allocation5 + $0x18] sm:$0xff]
        %v1891 = vld [vmem:[#allocation5 + $0x20] sm:$0xff]
        %v1892 = vld [vmem:[#allocation5 + $0x28] sm:$0xff]
        %v1893 = vld [vmem:[#allocation5 + $0x30] sm:$0xff]
        %v1894 = vld [vmem:[#allocation5 + $0x38] sm:$0xff]
        %v1895 = vld [vmem:[#allocation5 + $0x40] sm:$0xff]
        %v1896 = vld [vmem:[#allocation5 + $0x48] sm:$0xff]
        %v1897 = vld [vmem:[#allocation5 + $0x50] sm:$0xff]
        %v1898 = vld [vmem:[#allocation5 + $0x58] sm:$0xff]
        %v1899 = vld [vmem:[#allocation5 + $0x60] sm:$0xff]
        %v1900 = vld [vmem:[#allocation5 + $0x68] sm:$0xff]
        %v1901 = vld [vmem:[#allocation5 + $0x70] sm:$0xff]
        %v1902 = vld [vmem:[#allocation5 + $0x78] sm:$0xff]
        %v1903 = vmul.f32 %v1887, %v1871
        %v1904 = vmul.f32 %v1888, %v1872
        %v1905 = vmul.f32 %v1889, %v1873
        %v1906 = vmul.f32 %v1890, %v1874
        %v1907 = vmul.f32 %v1891, %v1875
        %v1908 = vmul.f32 %v1892, %v1876
        %v1909 = vmul.f32 %v1893, %v1877
        %v1910 = vmul.f32 %v1894, %v1878
        %v1911 = vmul.f32 %v1895, %v1879
        %v1912 = vmul.f32 %v1896, %v1880
        %v1913 = vmul.f32 %v1897, %v1881
        %v1914 = vmul.f32 %v1898, %v1882
        %v1915 = vmul.f32 %v1899, %v1883
        %v1916 = vmul.f32 %v1900, %v1884
        %v1917 = vmul.f32 %v1901, %v1885
        %v1918 = vmul.f32 %v1902, %v1886
        %1919 = vst [vmem:[%s10] sm:$0xff] %v1903
        %1920 = vst [vmem:[%s10 + $0x8] sm:$0xff] %v1904
        %1921 = vst [vmem:[%s10 + $0x10] sm:$0xff] %v1905
        %1922 = vst [vmem:[%s10 + $0x18] sm:$0xff] %v1906
        %1923 = vst [vmem:[%s10 + $0x20] sm:$0xff] %v1907
        %1924 = vst [vmem:[%s10 + $0x28] sm:$0xff] %v1908
        %1925 = vst [vmem:[%s10 + $0x30] sm:$0xff] %v1909
        %1926 = vst [vmem:[%s10 + $0x38] sm:$0xff] %v1910
        %1927 = vst [vmem:[%s10 + $0x40] sm:$0xff] %v1911
        %1928 = vst [vmem:[%s10 + $0x48] sm:$0xff] %v1912
        %1929 = vst [vmem:[%s10 + $0x50] sm:$0xff] %v1913
        %1930 = vst [vmem:[%s10 + $0x58] sm:$0xff] %v1914
        %1931 = vst [vmem:[%s10 + $0x60] sm:$0xff] %v1915
        %1932 = vst [vmem:[%s10 + $0x68] sm:$0xff] %v1916
        %1933 = vst [vmem:[%s10 + $0x70] sm:$0xff] %v1917
        %1934 = vst [vmem:[%s10 + $0x78] sm:$0xff] %v1918
      $region68: #{rgat_layer.2} parent=59 // pred_fallthru
        _
      // Predicated region
      $region69: #{rgat_layer.2} parent=59 // pred_check
        %p1935 = pneg %p259
      $region70: #{rgat_layer.2} parent=59 // pred_check_branch
        %1937 = sbr.rel (%p1935) target = $region72
      $region71: #{rgat_layer.2} parent=59 // pred_region
        _
      $region72: #{rgat_layer.2} parent=59 // pred_fallthru
        _
      // Predicated region
      $region73: #{rgat_layer.2} parent=59 // pred_check
        %p1938 = pneg %p259
      $region74: #{rgat_layer.2} parent=59 // pred_check_branch
        %1940 = sbr.rel (%p1938) target = $region76
      $region75: #{rgat_layer.2} parent=59 // pred_region
        _
      $region76: #{rgat_layer.2} parent=59 // pred_fallthru
        _
    $region60: #{rgat_layer.2} parent=5 // pred_fallthru
      _
    %p1941 = scmp.le.s32.totalorder 2, %s16
    // Predicated region
    $region77: #{rgat_layer.2} parent=5 // pred_check
      %p1942 = pneg %p1941
    $region78: #{rgat_layer.2} parent=5 // pred_check_branch
      %1944 = sbr.rel (%p1942) target = $region80
    $region79: #{rgat_layer.2} parent=5 // pred_region
      %s1945 = ssub.s32 %s16, 2
    $region80: #{rgat_layer.2} parent=5 // pred_fallthru
      _
  $region6: #{rgat_layer.2} parent=0 // loop_footer
    %s20 = sadd.s32 1, %s16
  $region7: #{rgat_layer.2} parent=0 // loop_footer_branch
    %15 = sbr.rel target = $region3
  $region8: #{rgat_layer.2} parent=0 // loop_exit
    _

</llo_original>
